<compile_context>
chip_gen: v5e
topology: v5e:2x2
jax: 0.10.0
libtpu: 0.0.40
codegen_flags: <defaults>
</compile_context>

<pallas_src>
import functools
import math

import jax
import jax.numpy as jnp
from jax.experimental import pallas as pl
from jax.experimental.pallas import tpu as pltpu


def _round_up(x, m):
    return ((x + m - 1) // m) * m


def _bottleneck_kernel(TH, W, C, Cp,
                       xp_ref, wdw_ref, gamma_ref, beta_ref,
                       w2_ref, b2_ref, w3_ref, b3_ref, out_ref):
    # xp_ref   : (1, H+6, W+6, Cp)  full padded image (resident per sample n)
    # wdw_ref  : (7, 7, Cp)         depthwise filter, wdw[kh,kw,c] == torch_w[c,0,kh,kw]
    # gamma/beta : (1, Cp)          channels_first LayerNorm affine (0 on padded lanes)
    # w2 (Cp,Ep) bf16, b2 (1,Ep) f32 ; w3 (Ep,Cp) bf16, b3 (1,Cp) f32
    # out_ref  : (1, TH, W, Cp)
    t = pl.program_id(1)
    row0 = t * TH

    # Row-slab with the 6-row conv halo, sliced from the resident padded image.
    xp = xp_ref.at[0]                                   # (H+6, W+6, Cp) ref view
    xslab = xp[pl.ds(row0, TH + 6), :, :]               # (TH+6, W+6, Cp) f32

    wdw = wdw_ref[...]                                  # (7, 7, Cp)
    x_center = xslab[:, 3:3 + W, :]                     # (TH+6, W, Cp) (kw=3 + residual)

    # Depthwise 7x7 conv (cross-correlation, stride 1): 7 width (sublane) shifts,
    # each consumed by 7 cheap leading-axis row slices; f32 accumulation in
    # registers (no scratch read-modify-write traffic).
    acc = None
    for kw in range(7):
        xw = x_center if kw == 3 else xslab[:, kw:kw + W, :]     # (TH+6, W, Cp)
        part = xw[0:TH] * wdw[0, kw]
        for kh in range(1, 7):
            part = part + xw[kh:kh + TH] * wdw[kh, kw]
        acc = part if acc is None else acc + part                # (TH, W, Cp)

    # LayerNorm over the REAL C channels (channels_first, biased var, eps=1e-6).
    # Padded lanes of acc are exactly zero (padded input/filter lanes are zero),
    # so sums over Cp equal sums over C; the centered square is masked so the
    # padded lanes do not pollute the variance.
    lane = jax.lax.broadcasted_iota(jnp.int32, (1, 1, Cp), 2)
    mask = lane < C
    inv_c = jnp.float32(1.0 / C)
    mean = jnp.sum(acc, axis=-1, keepdims=True) * inv_c
    xc = acc - mean
    var = jnp.sum(jnp.where(mask, xc * xc, 0.0), axis=-1, keepdims=True) * inv_c
    xn = xc * jax.lax.rsqrt(var + jnp.float32(1e-6))
    xn = xn * gamma_ref[...] + beta_ref[...]            # padded lanes -> 0 (gamma/beta = 0)

    # MLP: Linear(C->4C) -> GELU(exact erf) -> Linear(4C->C).
    # bf16 MXU inputs, f32 accumulation; lane-dense K/N (Cp, Ep multiples of 128).
    M = TH * W
    a = xn.reshape(M, Cp).astype(jnp.bfloat16)
    h = jnp.dot(a, w2_ref[...], preferred_element_type=jnp.float32) + b2_ref[...]
    h = 0.5 * h * (1.0 + jax.lax.erf(h * jnp.float32(1.0 / math.sqrt(2.0))))
    o = jnp.dot(h.astype(jnp.bfloat16), w3_ref[...],
                preferred_element_type=jnp.float32) + b3_ref[...]

    # Residual (drop_path == Identity) from the resident padded slab interior;
    # single lane-dense full-tile store.
    out_ref[0, :, :, :] = o.reshape(TH, W, Cp) + x_center[3:3 + TH]


def _vmem_budget():
    """Generation-aware VMEM planning (64 MiB/TC on v7x, 128 MiB on v5e/v6e)."""
    try:
        cap = getattr(pltpu.get_tpu_info(), "vmem_capacity_bytes", None)
    except Exception:
        cap = None
    if not cap:
        cap = 64 << 20                       # conservative fallback (fits all gens)
    budget = int(cap * 0.60)                 # estimator target (headroom for temps)
    vmem_limit = int(cap * 0.75)             # scoped-VMEM limit handed to Mosaic
    return budget, vmem_limit


def _estimate_vmem(TH, H, W, Cp, Ep):
    """Per-grid-step VMEM estimate, including compiler-materialized temporaries."""
    f32 = 4
    Wp = W + 6
    inp = (H + 6) * Wp * Cp * f32 * 2                   # resident padded image (2 bufs)
    out = TH * W * Cp * f32 * 2                         # output tile (2 bufs)
    wts = (2 * Cp * Ep * 2 + (49 * Cp + 4 * Cp + Ep) * f32) * 2
    M = TH * W
    temps = ((TH + 6) * Wp * Cp * f32                   # loaded row slab
             + 7 * (TH + 6) * W * Cp * f32              # width-shifted slabs (worst case)
             + 3 * M * Cp * f32                         # acc / xn / o
             + M * Cp * 2 + M * Ep * 2                  # bf16 matmul inputs
             + M * Ep * f32)                            # f32 GELU intermediate
    return int((inp + out + wts + temps) * 1.25)        # 25% slack


def _pick_tile_h(N, H, W, Cp, Ep, budget, max_tile_h=None):
    """Largest divisor of H that fits the budget and keeps >=2 grid steps
    (so the two TensorCores on v7x both get work)."""
    best = 1
    for th in range(1, H + 1):
        if H % th:
            continue
        if max_tile_h is not None and th > max_tile_h:
            continue
        if N * (H // th) < 2 and N * H > 1:
            continue
        if _estimate_vmem(th, H, W, Cp, Ep) > budget:
            continue
        best = th
    return best


@functools.partial(jax.jit, static_argnames=("max_tile_h",))
def bottleneck_forward(x_nchw, params, *, max_tile_h=None):
    N, C, H, W = x_nchw.shape
    E = 4 * C
    Cp = _round_up(C, 128)                              # lane-dense channels
    Ep = _round_up(E, 128)                              # lane-dense hidden dim

    budget, vmem_limit = _vmem_budget()
    TH = _pick_tile_h(N, H, W, Cp, Ep, budget, max_tile_h=max_tile_h)
    nT = H // TH

    # Single fused layout pass: NCHW -> NHWC, pad H/W by 3 (conv halo) and C -> Cp.
    x_nhwc = jnp.transpose(x_nchw, (0, 2, 3, 1)).astype(jnp.float32)
    x_pad = jnp.pad(x_nhwc, ((0, 0), (3, 3), (3, 3), (0, Cp - C)))

    # Channel-pad the parameters; zeros in the padded lanes keep LN / matmul /
    # residual exact (padded output lanes stay 0 and are sliced off below).
    wdw = jnp.pad(params["wdw"], ((0, 0), (0, 0), (0, Cp - C)))
    gamma = jnp.pad(params["gamma"], ((0, 0), (0, Cp - C)))
    beta = jnp.pad(params["beta"], ((0, 0), (0, Cp - C)))
    w2 = jnp.pad(params["w2"], ((0, Cp - C), (0, Ep - E))).astype(jnp.bfloat16)
    b2 = jnp.pad(params["b2"], ((0, 0), (0, Ep - E)))
    w3 = jnp.pad(params["w3"], ((0, Ep - E), (0, Cp - C))).astype(jnp.bfloat16)
    b3 = jnp.pad(params["b3"], ((0, 0), (0, Cp - C)))

    kernel = functools.partial(_bottleneck_kernel, TH, W, C, Cp)

    out_nhwc = pl.pallas_call(
        kernel,
        out_shape=jax.ShapeDtypeStruct((N, H, W, Cp), jnp.float32),
        grid=(N, nT),
        in_specs=[
            # Full padded image per sample: block index constant over t, so it is
            # DMA'd from HBM once per n and stays resident; the kernel row-slices
            # it (no halo duplication, no x_tiles copy in HBM).
            pl.BlockSpec((1, H + 6, W + 6, Cp), lambda n, t: (n, 0, 0, 0)),
            # Constant-index parameter blocks (fetched once, revisited each step).
            pl.BlockSpec((7, 7, Cp), lambda n, t: (0, 0, 0)),   # dw filter
            pl.BlockSpec((1, Cp), lambda n, t: (0, 0)),         # ln gamma
            pl.BlockSpec((1, Cp), lambda n, t: (0, 0)),         # ln beta
            pl.BlockSpec((Cp, Ep), lambda n, t: (0, 0)),        # w2 (bf16)
            pl.BlockSpec((1, Ep), lambda n, t: (0, 0)),         # b2
            pl.BlockSpec((Ep, Cp), lambda n, t: (0, 0)),        # w3 (bf16)
            pl.BlockSpec((1, Cp), lambda n, t: (0, 0)),         # b3
        ],
        out_specs=pl.BlockSpec((1, TH, W, Cp), lambda n, t: (n, t, 0, 0)),
        compiler_params=pltpu.CompilerParams(
            dimension_semantics=("parallel", "parallel"),
            vmem_limit_bytes=vmem_limit),
    )(x_pad, wdw, gamma, beta, w2, b2, w3, b3)

    # Drop padded lanes, back to the module's NCHW interface.
    return jnp.transpose(out_nhwc[..., :C], (0, 3, 1, 2))


def init_params(key, dim):
    # Deterministic synthetic parameter init (shapes match the nn.Module).
    E = 4 * dim
    k0, k1, k2, k3, k4 = jax.random.split(key, 5)
    return {
        # conv1: nn.Conv2d(dim, dim, 7, groups=dim) -> weight (dim,1,7,7);
        # stored as (7,7,dim): wdw[kh,kw,c] == torch_weight[c,0,kh,kw].
        "wdw": jax.random.normal(k0, (7, 7, dim), jnp.float32) * 0.1,
        "gamma": jnp.ones((1, dim), jnp.float32),
        "beta": jnp.zeros((1, dim), jnp.float32),
        # conv2: nn.Linear(dim, 4*dim); w2 == weight.T
        "w2": jax.random.normal(k1, (dim, E), jnp.float32) / math.sqrt(dim),
        "b2": jax.random.normal(k2, (1, E), jnp.float32) * 0.01,
        # conv3: nn.Linear(4*dim, dim); w3 == weight.T
        "w3": jax.random.normal(k3, (E, dim), jnp.float32) / math.sqrt(E),
        "b3": jax.random.normal(k4, (1, dim), jnp.float32) * 0.01,
    }


def _reference(x_nchw, params):
    # Pure-JAX f32 reference matching the PyTorch module.
    N, C, H, W = x_nchw.shape
    w = jnp.transpose(params["wdw"], (2, 0, 1))[:, None]     # (C, 1, 7, 7)
    y = jax.lax.conv_general_dilated(
        x_nchw, w, window_strides=(1, 1), padding=((3, 3), (3, 3)),
        dimension_numbers=("NCHW", "OIHW", "NCHW"), feature_group_count=C)
    mean = y.mean(axis=1, keepdims=True)
    var = ((y - mean) ** 2).mean(axis=1, keepdims=True)
    yn = (y - mean) * jax.lax.rsqrt(var + 1e-6)
    yn = yn * params["gamma"].reshape(1, C, 1, 1) + params["beta"].reshape(1, C, 1, 1)
    z = jnp.transpose(yn, (0, 2, 3, 1))
    h = z @ params["w2"] + params["b2"]
    h = 0.5 * h * (1.0 + jax.lax.erf(h * jnp.float32(1.0 / math.sqrt(2.0))))
    z = h @ params["w3"] + params["b3"]
    return jnp.transpose(z, (0, 3, 1, 2)) + x_nchw


if __name__ == "__main__":
    N, dim, H, W = 2, 4, 16, 16
    key = jax.random.PRNGKey(0)
    kx, kp = jax.random.split(key)
    x = jax.random.normal(kx, (N, dim, H, W), jnp.float32)   # NCHW, like PyTorch
    params = init_params(kp, dim)

    # max_tile_h=8 -> grid (2, 2): exercises the in-kernel dynamic row offsets.
    out = bottleneck_forward(x, params, max_tile_h=8)
    jax.block_until_ready(out)
    assert out.shape == (N, dim, H, W)

    # Loose tolerance: the kernel intentionally runs the two Linear layers with
    # bf16 MXU inputs (f32 accumulation); everything else is f32.
    ref = _reference(x, params)
    err = jnp.abs(out - ref)
    assert float(err.mean()) < 5e-2 and float(err.max()) < 3e-1, (
        float(err.mean()), float(err.max()))
    print("KERNEL_OK")
</pallas_src>

<mosaic_0001>
module attributes {stable_mosaic.version = 11 : i64} {
  func.func @_bottleneck_kernel(%arg0: i32, %arg1: i32, %arg2: memref<1x22x22x128xf32, #tpu.memory_space<vmem>>, %arg3: memref<7x7x128xf32, #tpu.memory_space<vmem>>, %arg4: memref<1x128xf32, #tpu.memory_space<vmem>>, %arg5: memref<1x128xf32, #tpu.memory_space<vmem>>, %arg6: memref<128x128xbf16, #tpu.memory_space<vmem>>, %arg7: memref<1x128xf32, #tpu.memory_space<vmem>>, %arg8: memref<128x128xbf16, #tpu.memory_space<vmem>>, %arg9: memref<1x128xf32, #tpu.memory_space<vmem>>, %arg10: memref<1x8x16x128xf32, #tpu.memory_space<vmem>>) attributes {dimension_semantics = [#tpu.dimension_semantics<parallel>, #tpu.dimension_semantics<parallel>], iteration_bounds = array<i64: 2, 2>, scalar_prefetch = 0 : i64, scratch_operands = 0 : i64, tpu.core_type = #tpu.core_type<tc>, window_params = [{transform_indices = @transform_0, window_bounds = array<i64: 1, 22, 22, 128>}, {pipeline_mode = #tpu.pipeline_mode<synchronous>, transform_indices = @transform_1, window_bounds = array<i64: 7, 7, 128>}, {pipeline_mode = #tpu.pipeline_mode<synchronous>, transform_indices = @transform_2, window_bounds = array<i64: 1, 128>}, {pipeline_mode = #tpu.pipeline_mode<synchronous>, transform_indices = @transform_3, window_bounds = array<i64: 1, 128>}, {pipeline_mode = #tpu.pipeline_mode<synchronous>, transform_indices = @transform_4, window_bounds = array<i64: 128, 128>}, {pipeline_mode = #tpu.pipeline_mode<synchronous>, transform_indices = @transform_5, window_bounds = array<i64: 1, 128>}, {pipeline_mode = #tpu.pipeline_mode<synchronous>, transform_indices = @transform_6, window_bounds = array<i64: 128, 128>}, {pipeline_mode = #tpu.pipeline_mode<synchronous>, transform_indices = @transform_7, window_bounds = array<i64: 1, 128>}, {transform_indices = @transform_8, window_bounds = array<i64: 1, 8, 16, 128>}]} {
    %c8_i32 = arith.constant 8 : i32
    %0 = arith.muli %arg1, %c8_i32 : i32
    %c0_i32 = arith.constant 0 : i32
    %c0_i32_0 = arith.constant 0 : i32
    %c0_i32_1 = arith.constant 0 : i32
    %c0_i32_2 = arith.constant 0 : i32
    %1 = tpu.memref_slice %arg2[%c0_i32, %c0_i32_0, %c0_i32_1, %c0_i32_2] : memref<1x22x22x128xf32, #tpu.memory_space<vmem>> -> memref<1x22x22x128xf32, #tpu.memory_space<vmem>>
    %2 = tpu.memref_squeeze %1 : memref<1x22x22x128xf32, #tpu.memory_space<vmem>> -> memref<22x22x128xf32, #tpu.memory_space<vmem>>
    %3 = arith.index_cast %0 : i32 to index
    %c0 = arith.constant 0 : index
    %c0_3 = arith.constant 0 : index
    %4 = vector.load %2[%3, %c0, %c0_3] : memref<22x22x128xf32, #tpu.memory_space<vmem>>, vector<14x22x128xf32>
    %c0_4 = arith.constant 0 : index
    %c0_5 = arith.constant 0 : index
    %c0_6 = arith.constant 0 : index
    %5 = vector.load %arg3[%c0_4, %c0_5, %c0_6] : memref<7x7x128xf32, #tpu.memory_space<vmem>>, vector<7x7x128xf32>
    %6 = vector.extract_strided_slice %4 {offsets = [0, 3, 0], sizes = [14, 16, 128], strides = [1, 1, 1]} : vector<14x22x128xf32> to vector<14x16x128xf32>
    %7 = vector.extract_strided_slice %4 {offsets = [0, 0, 0], sizes = [14, 16, 128], strides = [1, 1, 1]} : vector<14x22x128xf32> to vector<14x16x128xf32>
    %8 = vector.extract_strided_slice %7 {offsets = [0, 0, 0], sizes = [8, 16, 128], strides = [1, 1, 1]} : vector<14x16x128xf32> to vector<8x16x128xf32>
    %9 = vector.extract_strided_slice %5 {offsets = [0, 0, 0], sizes = [1, 1, 128], strides = [1, 1, 1]} : vector<7x7x128xf32> to vector<1x1x128xf32>
    %10 = vector.shape_cast %9 : vector<1x1x128xf32> to vector<128xf32>
    %11 = vector.shape_cast %10 : vector<128xf32> to vector<1x1x128xf32>
    %12 = vector.broadcast %11 : vector<1x1x128xf32> to vector<8x16x128xf32>
    %13 = arith.mulf %8, %12 : vector<8x16x128xf32>
    %14 = vector.extract_strided_slice %7 {offsets = [1, 0, 0], sizes = [8, 16, 128], strides = [1, 1, 1]} : vector<14x16x128xf32> to vector<8x16x128xf32>
    %15 = vector.extract_strided_slice %5 {offsets = [1, 0, 0], sizes = [1, 1, 128], strides = [1, 1, 1]} : vector<7x7x128xf32> to vector<1x1x128xf32>
    %16 = vector.shape_cast %15 : vector<1x1x128xf32> to vector<128xf32>
    %17 = vector.shape_cast %16 : vector<128xf32> to vector<1x1x128xf32>
    %18 = vector.broadcast %17 : vector<1x1x128xf32> to vector<8x16x128xf32>
    %19 = arith.mulf %14, %18 : vector<8x16x128xf32>
    %20 = arith.addf %13, %19 : vector<8x16x128xf32>
    %21 = vector.extract_strided_slice %7 {offsets = [2, 0, 0], sizes = [8, 16, 128], strides = [1, 1, 1]} : vector<14x16x128xf32> to vector<8x16x128xf32>
    %22 = vector.extract_strided_slice %5 {offsets = [2, 0, 0], sizes = [1, 1, 128], strides = [1, 1, 1]} : vector<7x7x128xf32> to vector<1x1x128xf32>
    %23 = vector.shape_cast %22 : vector<1x1x128xf32> to vector<128xf32>
    %24 = vector.shape_cast %23 : vector<128xf32> to vector<1x1x128xf32>
    %25 = vector.broadcast %24 : vector<1x1x128xf32> to vector<8x16x128xf32>
    %26 = arith.mulf %21, %25 : vector<8x16x128xf32>
    %27 = arith.addf %20, %26 : vector<8x16x128xf32>
    %28 = vector.extract_strided_slice %7 {offsets = [3, 0, 0], sizes = [8, 16, 128], strides = [1, 1, 1]} : vector<14x16x128xf32> to vector<8x16x128xf32>
    %29 = vector.extract_strided_slice %5 {offsets = [3, 0, 0], sizes = [1, 1, 128], strides = [1, 1, 1]} : vector<7x7x128xf32> to vector<1x1x128xf32>
    %30 = vector.shape_cast %29 : vector<1x1x128xf32> to vector<128xf32>
    %31 = vector.shape_cast %30 : vector<128xf32> to vector<1x1x128xf32>
    %32 = vector.broadcast %31 : vector<1x1x128xf32> to vector<8x16x128xf32>
    %33 = arith.mulf %28, %32 : vector<8x16x128xf32>
    %34 = arith.addf %27, %33 : vector<8x16x128xf32>
    %35 = vector.extract_strided_slice %7 {offsets = [4, 0, 0], sizes = [8, 16, 128], strides = [1, 1, 1]} : vector<14x16x128xf32> to vector<8x16x128xf32>
    %36 = vector.extract_strided_slice %5 {offsets = [4, 0, 0], sizes = [1, 1, 128], strides = [1, 1, 1]} : vector<7x7x128xf32> to vector<1x1x128xf32>
    %37 = vector.shape_cast %36 : vector<1x1x128xf32> to vector<128xf32>
    %38 = vector.shape_cast %37 : vector<128xf32> to vector<1x1x128xf32>
    %39 = vector.broadcast %38 : vector<1x1x128xf32> to vector<8x16x128xf32>
    %40 = arith.mulf %35, %39 : vector<8x16x128xf32>
    %41 = arith.addf %34, %40 : vector<8x16x128xf32>
    %42 = vector.extract_strided_slice %7 {offsets = [5, 0, 0], sizes = [8, 16, 128], strides = [1, 1, 1]} : vector<14x16x128xf32> to vector<8x16x128xf32>
    %43 = vector.extract_strided_slice %5 {offsets = [5, 0, 0], sizes = [1, 1, 128], strides = [1, 1, 1]} : vector<7x7x128xf32> to vector<1x1x128xf32>
    %44 = vector.shape_cast %43 : vector<1x1x128xf32> to vector<128xf32>
    %45 = vector.shape_cast %44 : vector<128xf32> to vector<1x1x128xf32>
    %46 = vector.broadcast %45 : vector<1x1x128xf32> to vector<8x16x128xf32>
    %47 = arith.mulf %42, %46 : vector<8x16x128xf32>
    %48 = arith.addf %41, %47 : vector<8x16x128xf32>
    %49 = vector.extract_strided_slice %7 {offsets = [6, 0, 0], sizes = [8, 16, 128], strides = [1, 1, 1]} : vector<14x16x128xf32> to vector<8x16x128xf32>
    %50 = vector.extract_strided_slice %5 {offsets = [6, 0, 0], sizes = [1, 1, 128], strides = [1, 1, 1]} : vector<7x7x128xf32> to vector<1x1x128xf32>
    %51 = vector.shape_cast %50 : vector<1x1x128xf32> to vector<128xf32>
    %52 = vector.shape_cast %51 : vector<128xf32> to vector<1x1x128xf32>
    %53 = vector.broadcast %52 : vector<1x1x128xf32> to vector<8x16x128xf32>
    %54 = arith.mulf %49, %53 : vector<8x16x128xf32>
    %55 = arith.addf %48, %54 : vector<8x16x128xf32>
    %56 = vector.extract_strided_slice %4 {offsets = [0, 1, 0], sizes = [14, 16, 128], strides = [1, 1, 1]} : vector<14x22x128xf32> to vector<14x16x128xf32>
    %57 = vector.extract_strided_slice %56 {offsets = [0, 0, 0], sizes = [8, 16, 128], strides = [1, 1, 1]} : vector<14x16x128xf32> to vector<8x16x128xf32>
    %58 = vector.extract_strided_slice %5 {offsets = [0, 1, 0], sizes = [1, 1, 128], strides = [1, 1, 1]} : vector<7x7x128xf32> to vector<1x1x128xf32>
    %59 = vector.shape_cast %58 : vector<1x1x128xf32> to vector<128xf32>
    %60 = vector.shape_cast %59 : vector<128xf32> to vector<1x1x128xf32>
    %61 = vector.broadcast %60 : vector<1x1x128xf32> to vector<8x16x128xf32>
    %62 = arith.mulf %57, %61 : vector<8x16x128xf32>
    %63 = vector.extract_strided_slice %56 {offsets = [1, 0, 0], sizes = [8, 16, 128], strides = [1, 1, 1]} : vector<14x16x128xf32> to vector<8x16x128xf32>
    %64 = vector.extract_strided_slice %5 {offsets = [1, 1, 0], sizes = [1, 1, 128], strides = [1, 1, 1]} : vector<7x7x128xf32> to vector<1x1x128xf32>
    %65 = vector.shape_cast %64 : vector<1x1x128xf32> to vector<128xf32>
    %66 = vector.shape_cast %65 : vector<128xf32> to vector<1x1x128xf32>
    %67 = vector.broadcast %66 : vector<1x1x128xf32> to vector<8x16x128xf32>
    %68 = arith.mulf %63, %67 : vector<8x16x128xf32>
    %69 = arith.addf %62, %68 : vector<8x16x128xf32>
    %70 = vector.extract_strided_slice %56 {offsets = [2, 0, 0], sizes = [8, 16, 128], strides = [1, 1, 1]} : vector<14x16x128xf32> to vector<8x16x128xf32>
    %71 = vector.extract_strided_slice %5 {offsets = [2, 1, 0], sizes = [1, 1, 128], strides = [1, 1, 1]} : vector<7x7x128xf32> to vector<1x1x128xf32>
    %72 = vector.shape_cast %71 : vector<1x1x128xf32> to vector<128xf32>
    %73 = vector.shape_cast %72 : vector<128xf32> to vector<1x1x128xf32>
    %74 = vector.broadcast %73 : vector<1x1x128xf32> to vector<8x16x128xf32>
    %75 = arith.mulf %70, %74 : vector<8x16x128xf32>
    %76 = arith.addf %69, %75 : vector<8x16x128xf32>
    %77 = vector.extract_strided_slice %56 {offsets = [3, 0, 0], sizes = [8, 16, 128], strides = [1, 1, 1]} : vector<14x16x128xf32> to vector<8x16x128xf32>
    %78 = vector.extract_strided_slice %5 {offsets = [3, 1, 0], sizes = [1, 1, 128], strides = [1, 1, 1]} : vector<7x7x128xf32> to vector<1x1x128xf32>
    %79 = vector.shape_cast %78 : vector<1x1x128xf32> to vector<128xf32>
    %80 = vector.shape_cast %79 : vector<128xf32> to vector<1x1x128xf32>
    %81 = vector.broadcast %80 : vector<1x1x128xf32> to vector<8x16x128xf32>
    %82 = arith.mulf %77, %81 : vector<8x16x128xf32>
    %83 = arith.addf %76, %82 : vector<8x16x128xf32>
    %84 = vector.extract_strided_slice %56 {offsets = [4, 0, 0], sizes = [8, 16, 128], strides = [1, 1, 1]} : vector<14x16x128xf32> to vector<8x16x128xf32>
    %85 = vector.extract_strided_slice %5 {offsets = [4, 1, 0], sizes = [1, 1, 128], strides = [1, 1, 1]} : vector<7x7x128xf32> to vector<1x1x128xf32>
    %86 = vector.shape_cast %85 : vector<1x1x128xf32> to vector<128xf32>
    %87 = vector.shape_cast %86 : vector<128xf32> to vector<1x1x128xf32>
    %88 = vector.broadcast %87 : vector<1x1x128xf32> to vector<8x16x128xf32>
    %89 = arith.mulf %84, %88 : vector<8x16x128xf32>
    %90 = arith.addf %83, %89 : vector<8x16x128xf32>
    %91 = vector.extract_strided_slice %56 {offsets = [5, 0, 0], sizes = [8, 16, 128], strides = [1, 1, 1]} : vector<14x16x128xf32> to vector<8x16x128xf32>
    %92 = vector.extract_strided_slice %5 {offsets = [5, 1, 0], sizes = [1, 1, 128], strides = [1, 1, 1]} : vector<7x7x128xf32> to vector<1x1x128xf32>
    %93 = vector.shape_cast %92 : vector<1x1x128xf32> to vector<128xf32>
    %94 = vector.shape_cast %93 : vector<128xf32> to vector<1x1x128xf32>
    %95 = vector.broadcast %94 : vector<1x1x128xf32> to vector<8x16x128xf32>
    %96 = arith.mulf %91, %95 : vector<8x16x128xf32>
    %97 = arith.addf %90, %96 : vector<8x16x128xf32>
    %98 = vector.extract_strided_slice %56 {offsets = [6, 0, 0], sizes = [8, 16, 128], strides = [1, 1, 1]} : vector<14x16x128xf32> to vector<8x16x128xf32>
    %99 = vector.extract_strided_slice %5 {offsets = [6, 1, 0], sizes = [1, 1, 128], strides = [1, 1, 1]} : vector<7x7x128xf32> to vector<1x1x128xf32>
    %100 = vector.shape_cast %99 : vector<1x1x128xf32> to vector<128xf32>
    %101 = vector.shape_cast %100 : vector<128xf32> to vector<1x1x128xf32>
    %102 = vector.broadcast %101 : vector<1x1x128xf32> to vector<8x16x128xf32>
    %103 = arith.mulf %98, %102 : vector<8x16x128xf32>
    %104 = arith.addf %97, %103 : vector<8x16x128xf32>
    %105 = arith.addf %55, %104 : vector<8x16x128xf32>
    %106 = vector.extract_strided_slice %4 {offsets = [0, 2, 0], sizes = [14, 16, 128], strides = [1, 1, 1]} : vector<14x22x128xf32> to vector<14x16x128xf32>
    %107 = vector.extract_strided_slice %106 {offsets = [0, 0, 0], sizes = [8, 16, 128], strides = [1, 1, 1]} : vector<14x16x128xf32> to vector<8x16x128xf32>
    %108 = vector.extract_strided_slice %5 {offsets = [0, 2, 0], sizes = [1, 1, 128], strides = [1, 1, 1]} : vector<7x7x128xf32> to vector<1x1x128xf32>
    %109 = vector.shape_cast %108 : vector<1x1x128xf32> to vector<128xf32>
    %110 = vector.shape_cast %109 : vector<128xf32> to vector<1x1x128xf32>
    %111 = vector.broadcast %110 : vector<1x1x128xf32> to vector<8x16x128xf32>
    %112 = arith.mulf %107, %111 : vector<8x16x128xf32>
    %113 = vector.extract_strided_slice %106 {offsets = [1, 0, 0], sizes = [8, 16, 128], strides = [1, 1, 1]} : vector<14x16x128xf32> to vector<8x16x128xf32>
    %114 = vector.extract_strided_slice %5 {offsets = [1, 2, 0], sizes = [1, 1, 128], strides = [1, 1, 1]} : vector<7x7x128xf32> to vector<1x1x128xf32>
    %115 = vector.shape_cast %114 : vector<1x1x128xf32> to vector<128xf32>
    %116 = vector.shape_cast %115 : vector<128xf32> to vector<1x1x128xf32>
    %117 = vector.broadcast %116 : vector<1x1x128xf32> to vector<8x16x128xf32>
    %118 = arith.mulf %113, %117 : vector<8x16x128xf32>
    %119 = arith.addf %112, %118 : vector<8x16x128xf32>
    %120 = vector.extract_strided_slice %106 {offsets = [2, 0, 0], sizes = [8, 16, 128], strides = [1, 1, 1]} : vector<14x16x128xf32> to vector<8x16x128xf32>
    %121 = vector.extract_strided_slice %5 {offsets = [2, 2, 0], sizes = [1, 1, 128], strides = [1, 1, 1]} : vector<7x7x128xf32> to vector<1x1x128xf32>
    %122 = vector.shape_cast %121 : vector<1x1x128xf32> to vector<128xf32>
    %123 = vector.shape_cast %122 : vector<128xf32> to vector<1x1x128xf32>
    %124 = vector.broadcast %123 : vector<1x1x128xf32> to vector<8x16x128xf32>
    %125 = arith.mulf %120, %124 : vector<8x16x128xf32>
    %126 = arith.addf %119, %125 : vector<8x16x128xf32>
    %127 = vector.extract_strided_slice %106 {offsets = [3, 0, 0], sizes = [8, 16, 128], strides = [1, 1, 1]} : vector<14x16x128xf32> to vector<8x16x128xf32>
    %128 = vector.extract_strided_slice %5 {offsets = [3, 2, 0], sizes = [1, 1, 128], strides = [1, 1, 1]} : vector<7x7x128xf32> to vector<1x1x128xf32>
    %129 = vector.shape_cast %128 : vector<1x1x128xf32> to vector<128xf32>
    %130 = vector.shape_cast %129 : vector<128xf32> to vector<1x1x128xf32>
    %131 = vector.broadcast %130 : vector<1x1x128xf32> to vector<8x16x128xf32>
    %132 = arith.mulf %127, %131 : vector<8x16x128xf32>
    %133 = arith.addf %126, %132 : vector<8x16x128xf32>
    %134 = vector.extract_strided_slice %106 {offsets = [4, 0, 0], sizes = [8, 16, 128], strides = [1, 1, 1]} : vector<14x16x128xf32> to vector<8x16x128xf32>
    %135 = vector.extract_strided_slice %5 {offsets = [4, 2, 0], sizes = [1, 1, 128], strides = [1, 1, 1]} : vector<7x7x128xf32> to vector<1x1x128xf32>
    %136 = vector.shape_cast %135 : vector<1x1x128xf32> to vector<128xf32>
    %137 = vector.shape_cast %136 : vector<128xf32> to vector<1x1x128xf32>
    %138 = vector.broadcast %137 : vector<1x1x128xf32> to vector<8x16x128xf32>
    %139 = arith.mulf %134, %138 : vector<8x16x128xf32>
    %140 = arith.addf %133, %139 : vector<8x16x128xf32>
    %141 = vector.extract_strided_slice %106 {offsets = [5, 0, 0], sizes = [8, 16, 128], strides = [1, 1, 1]} : vector<14x16x128xf32> to vector<8x16x128xf32>
    %142 = vector.extract_strided_slice %5 {offsets = [5, 2, 0], sizes = [1, 1, 128], strides = [1, 1, 1]} : vector<7x7x128xf32> to vector<1x1x128xf32>
    %143 = vector.shape_cast %142 : vector<1x1x128xf32> to vector<128xf32>
    %144 = vector.shape_cast %143 : vector<128xf32> to vector<1x1x128xf32>
    %145 = vector.broadcast %144 : vector<1x1x128xf32> to vector<8x16x128xf32>
    %146 = arith.mulf %141, %145 : vector<8x16x128xf32>
    %147 = arith.addf %140, %146 : vector<8x16x128xf32>
    %148 = vector.extract_strided_slice %106 {offsets = [6, 0, 0], sizes = [8, 16, 128], strides = [1, 1, 1]} : vector<14x16x128xf32> to vector<8x16x128xf32>
    %149 = vector.extract_strided_slice %5 {offsets = [6, 2, 0], sizes = [1, 1, 128], strides = [1, 1, 1]} : vector<7x7x128xf32> to vector<1x1x128xf32>
    %150 = vector.shape_cast %149 : vector<1x1x128xf32> to vector<128xf32>
    %151 = vector.shape_cast %150 : vector<128xf32> to vector<1x1x128xf32>
    %152 = vector.broadcast %151 : vector<1x1x128xf32> to vector<8x16x128xf32>
    %153 = arith.mulf %148, %152 : vector<8x16x128xf32>
    %154 = arith.addf %147, %153 : vector<8x16x128xf32>
    %155 = arith.addf %105, %154 : vector<8x16x128xf32>
    %156 = vector.extract_strided_slice %6 {offsets = [0, 0, 0], sizes = [8, 16, 128], strides = [1, 1, 1]} : vector<14x16x128xf32> to vector<8x16x128xf32>
    %157 = vector.extract_strided_slice %5 {offsets = [0, 3, 0], sizes = [1, 1, 128], strides = [1, 1, 1]} : vector<7x7x128xf32> to vector<1x1x128xf32>
    %158 = vector.shape_cast %157 : vector<1x1x128xf32> to vector<128xf32>
    %159 = vector.shape_cast %158 : vector<128xf32> to vector<1x1x128xf32>
    %160 = vector.broadcast %159 : vector<1x1x128xf32> to vector<8x16x128xf32>
    %161 = arith.mulf %156, %160 : vector<8x16x128xf32>
    %162 = vector.extract_strided_slice %6 {offsets = [1, 0, 0], sizes = [8, 16, 128], strides = [1, 1, 1]} : vector<14x16x128xf32> to vector<8x16x128xf32>
    %163 = vector.extract_strided_slice %5 {offsets = [1, 3, 0], sizes = [1, 1, 128], strides = [1, 1, 1]} : vector<7x7x128xf32> to vector<1x1x128xf32>
    %164 = vector.shape_cast %163 : vector<1x1x128xf32> to vector<128xf32>
    %165 = vector.shape_cast %164 : vector<128xf32> to vector<1x1x128xf32>
    %166 = vector.broadcast %165 : vector<1x1x128xf32> to vector<8x16x128xf32>
    %167 = arith.mulf %162, %166 : vector<8x16x128xf32>
    %168 = arith.addf %161, %167 : vector<8x16x128xf32>
    %169 = vector.extract_strided_slice %6 {offsets = [2, 0, 0], sizes = [8, 16, 128], strides = [1, 1, 1]} : vector<14x16x128xf32> to vector<8x16x128xf32>
    %170 = vector.extract_strided_slice %5 {offsets = [2, 3, 0], sizes = [1, 1, 128], strides = [1, 1, 1]} : vector<7x7x128xf32> to vector<1x1x128xf32>
    %171 = vector.shape_cast %170 : vector<1x1x128xf32> to vector<128xf32>
    %172 = vector.shape_cast %171 : vector<128xf32> to vector<1x1x128xf32>
    %173 = vector.broadcast %172 : vector<1x1x128xf32> to vector<8x16x128xf32>
    %174 = arith.mulf %169, %173 : vector<8x16x128xf32>
    %175 = arith.addf %168, %174 : vector<8x16x128xf32>
    %176 = vector.extract_strided_slice %6 {offsets = [3, 0, 0], sizes = [8, 16, 128], strides = [1, 1, 1]} : vector<14x16x128xf32> to vector<8x16x128xf32>
    %177 = vector.extract_strided_slice %5 {offsets = [3, 3, 0], sizes = [1, 1, 128], strides = [1, 1, 1]} : vector<7x7x128xf32> to vector<1x1x128xf32>
    %178 = vector.shape_cast %177 : vector<1x1x128xf32> to vector<128xf32>
    %179 = vector.shape_cast %178 : vector<128xf32> to vector<1x1x128xf32>
    %180 = vector.broadcast %179 : vector<1x1x128xf32> to vector<8x16x128xf32>
    %181 = arith.mulf %176, %180 : vector<8x16x128xf32>
    %182 = arith.addf %175, %181 : vector<8x16x128xf32>
    %183 = vector.extract_strided_slice %6 {offsets = [4, 0, 0], sizes = [8, 16, 128], strides = [1, 1, 1]} : vector<14x16x128xf32> to vector<8x16x128xf32>
    %184 = vector.extract_strided_slice %5 {offsets = [4, 3, 0], sizes = [1, 1, 128], strides = [1, 1, 1]} : vector<7x7x128xf32> to vector<1x1x128xf32>
    %185 = vector.shape_cast %184 : vector<1x1x128xf32> to vector<128xf32>
    %186 = vector.shape_cast %185 : vector<128xf32> to vector<1x1x128xf32>
    %187 = vector.broadcast %186 : vector<1x1x128xf32> to vector<8x16x128xf32>
    %188 = arith.mulf %183, %187 : vector<8x16x128xf32>
    %189 = arith.addf %182, %188 : vector<8x16x128xf32>
    %190 = vector.extract_strided_slice %6 {offsets = [5, 0, 0], sizes = [8, 16, 128], strides = [1, 1, 1]} : vector<14x16x128xf32> to vector<8x16x128xf32>
    %191 = vector.extract_strided_slice %5 {offsets = [5, 3, 0], sizes = [1, 1, 128], strides = [1, 1, 1]} : vector<7x7x128xf32> to vector<1x1x128xf32>
    %192 = vector.shape_cast %191 : vector<1x1x128xf32> to vector<128xf32>
    %193 = vector.shape_cast %192 : vector<128xf32> to vector<1x1x128xf32>
    %194 = vector.broadcast %193 : vector<1x1x128xf32> to vector<8x16x128xf32>
    %195 = arith.mulf %190, %194 : vector<8x16x128xf32>
    %196 = arith.addf %189, %195 : vector<8x16x128xf32>
    %197 = vector.extract_strided_slice %6 {offsets = [6, 0, 0], sizes = [8, 16, 128], strides = [1, 1, 1]} : vector<14x16x128xf32> to vector<8x16x128xf32>
    %198 = vector.extract_strided_slice %5 {offsets = [6, 3, 0], sizes = [1, 1, 128], strides = [1, 1, 1]} : vector<7x7x128xf32> to vector<1x1x128xf32>
    %199 = vector.shape_cast %198 : vector<1x1x128xf32> to vector<128xf32>
    %200 = vector.shape_cast %199 : vector<128xf32> to vector<1x1x128xf32>
    %201 = vector.broadcast %200 : vector<1x1x128xf32> to vector<8x16x128xf32>
    %202 = arith.mulf %197, %201 : vector<8x16x128xf32>
    %203 = arith.addf %196, %202 : vector<8x16x128xf32>
    %204 = arith.addf %155, %203 : vector<8x16x128xf32>
    %205 = vector.extract_strided_slice %4 {offsets = [0, 4, 0], sizes = [14, 16, 128], strides = [1, 1, 1]} : vector<14x22x128xf32> to vector<14x16x128xf32>
    %206 = vector.extract_strided_slice %205 {offsets = [0, 0, 0], sizes = [8, 16, 128], strides = [1, 1, 1]} : vector<14x16x128xf32> to vector<8x16x128xf32>
    %207 = vector.extract_strided_slice %5 {offsets = [0, 4, 0], sizes = [1, 1, 128], strides = [1, 1, 1]} : vector<7x7x128xf32> to vector<1x1x128xf32>
    %208 = vector.shape_cast %207 : vector<1x1x128xf32> to vector<128xf32>
    %209 = vector.shape_cast %208 : vector<128xf32> to vector<1x1x128xf32>
    %210 = vector.broadcast %209 : vector<1x1x128xf32> to vector<8x16x128xf32>
    %211 = arith.mulf %206, %210 : vector<8x16x128xf32>
    %212 = vector.extract_strided_slice %205 {offsets = [1, 0, 0], sizes = [8, 16, 128], strides = [1, 1, 1]} : vector<14x16x128xf32> to vector<8x16x128xf32>
    %213 = vector.extract_strided_slice %5 {offsets = [1, 4, 0], sizes = [1, 1, 128], strides = [1, 1, 1]} : vector<7x7x128xf32> to vector<1x1x128xf32>
    %214 = vector.shape_cast %213 : vector<1x1x128xf32> to vector<128xf32>
    %215 = vector.shape_cast %214 : vector<128xf32> to vector<1x1x128xf32>
    %216 = vector.broadcast %215 : vector<1x1x128xf32> to vector<8x16x128xf32>
    %217 = arith.mulf %212, %216 : vector<8x16x128xf32>
    %218 = arith.addf %211, %217 : vector<8x16x128xf32>
    %219 = vector.extract_strided_slice %205 {offsets = [2, 0, 0], sizes = [8, 16, 128], strides = [1, 1, 1]} : vector<14x16x128xf32> to vector<8x16x128xf32>
    %220 = vector.extract_strided_slice %5 {offsets = [2, 4, 0], sizes = [1, 1, 128], strides = [1, 1, 1]} : vector<7x7x128xf32> to vector<1x1x128xf32>
    %221 = vector.shape_cast %220 : vector<1x1x128xf32> to vector<128xf32>
    %222 = vector.shape_cast %221 : vector<128xf32> to vector<1x1x128xf32>
    %223 = vector.broadcast %222 : vector<1x1x128xf32> to vector<8x16x128xf32>
    %224 = arith.mulf %219, %223 : vector<8x16x128xf32>
    %225 = arith.addf %218, %224 : vector<8x16x128xf32>
    %226 = vector.extract_strided_slice %205 {offsets = [3, 0, 0], sizes = [8, 16, 128], strides = [1, 1, 1]} : vector<14x16x128xf32> to vector<8x16x128xf32>
    %227 = vector.extract_strided_slice %5 {offsets = [3, 4, 0], sizes = [1, 1, 128], strides = [1, 1, 1]} : vector<7x7x128xf32> to vector<1x1x128xf32>
    %228 = vector.shape_cast %227 : vector<1x1x128xf32> to vector<128xf32>
    %229 = vector.shape_cast %228 : vector<128xf32> to vector<1x1x128xf32>
    %230 = vector.broadcast %229 : vector<1x1x128xf32> to vector<8x16x128xf32>
    %231 = arith.mulf %226, %230 : vector<8x16x128xf32>
    %232 = arith.addf %225, %231 : vector<8x16x128xf32>
    %233 = vector.extract_strided_slice %205 {offsets = [4, 0, 0], sizes = [8, 16, 128], strides = [1, 1, 1]} : vector<14x16x128xf32> to vector<8x16x128xf32>
    %234 = vector.extract_strided_slice %5 {offsets = [4, 4, 0], sizes = [1, 1, 128], strides = [1, 1, 1]} : vector<7x7x128xf32> to vector<1x1x128xf32>
    %235 = vector.shape_cast %234 : vector<1x1x128xf32> to vector<128xf32>
    %236 = vector.shape_cast %235 : vector<128xf32> to vector<1x1x128xf32>
    %237 = vector.broadcast %236 : vector<1x1x128xf32> to vector<8x16x128xf32>
    %238 = arith.mulf %233, %237 : vector<8x16x128xf32>
    %239 = arith.addf %232, %238 : vector<8x16x128xf32>
    %240 = vector.extract_strided_slice %205 {offsets = [5, 0, 0], sizes = [8, 16, 128], strides = [1, 1, 1]} : vector<14x16x128xf32> to vector<8x16x128xf32>
    %241 = vector.extract_strided_slice %5 {offsets = [5, 4, 0], sizes = [1, 1, 128], strides = [1, 1, 1]} : vector<7x7x128xf32> to vector<1x1x128xf32>
    %242 = vector.shape_cast %241 : vector<1x1x128xf32> to vector<128xf32>
    %243 = vector.shape_cast %242 : vector<128xf32> to vector<1x1x128xf32>
    %244 = vector.broadcast %243 : vector<1x1x128xf32> to vector<8x16x128xf32>
    %245 = arith.mulf %240, %244 : vector<8x16x128xf32>
    %246 = arith.addf %239, %245 : vector<8x16x128xf32>
    %247 = vector.extract_strided_slice %205 {offsets = [6, 0, 0], sizes = [8, 16, 128], strides = [1, 1, 1]} : vector<14x16x128xf32> to vector<8x16x128xf32>
    %248 = vector.extract_strided_slice %5 {offsets = [6, 4, 0], sizes = [1, 1, 128], strides = [1, 1, 1]} : vector<7x7x128xf32> to vector<1x1x128xf32>
    %249 = vector.shape_cast %248 : vector<1x1x128xf32> to vector<128xf32>
    %250 = vector.shape_cast %249 : vector<128xf32> to vector<1x1x128xf32>
    %251 = vector.broadcast %250 : vector<1x1x128xf32> to vector<8x16x128xf32>
    %252 = arith.mulf %247, %251 : vector<8x16x128xf32>
    %253 = arith.addf %246, %252 : vector<8x16x128xf32>
    %254 = arith.addf %204, %253 : vector<8x16x128xf32>
    %255 = vector.extract_strided_slice %4 {offsets = [0, 5, 0], sizes = [14, 16, 128], strides = [1, 1, 1]} : vector<14x22x128xf32> to vector<14x16x128xf32>
    %256 = vector.extract_strided_slice %255 {offsets = [0, 0, 0], sizes = [8, 16, 128], strides = [1, 1, 1]} : vector<14x16x128xf32> to vector<8x16x128xf32>
    %257 = vector.extract_strided_slice %5 {offsets = [0, 5, 0], sizes = [1, 1, 128], strides = [1, 1, 1]} : vector<7x7x128xf32> to vector<1x1x128xf32>
    %258 = vector.shape_cast %257 : vector<1x1x128xf32> to vector<128xf32>
    %259 = vector.shape_cast %258 : vector<128xf32> to vector<1x1x128xf32>
    %260 = vector.broadcast %259 : vector<1x1x128xf32> to vector<8x16x128xf32>
    %261 = arith.mulf %256, %260 : vector<8x16x128xf32>
    %262 = vector.extract_strided_slice %255 {offsets = [1, 0, 0], sizes = [8, 16, 128], strides = [1, 1, 1]} : vector<14x16x128xf32> to vector<8x16x128xf32>
    %263 = vector.extract_strided_slice %5 {offsets = [1, 5, 0], sizes = [1, 1, 128], strides = [1, 1, 1]} : vector<7x7x128xf32> to vector<1x1x128xf32>
    %264 = vector.shape_cast %263 : vector<1x1x128xf32> to vector<128xf32>
    %265 = vector.shape_cast %264 : vector<128xf32> to vector<1x1x128xf32>
    %266 = vector.broadcast %265 : vector<1x1x128xf32> to vector<8x16x128xf32>
    %267 = arith.mulf %262, %266 : vector<8x16x128xf32>
    %268 = arith.addf %261, %267 : vector<8x16x128xf32>
    %269 = vector.extract_strided_slice %255 {offsets = [2, 0, 0], sizes = [8, 16, 128], strides = [1, 1, 1]} : vector<14x16x128xf32> to vector<8x16x128xf32>
    %270 = vector.extract_strided_slice %5 {offsets = [2, 5, 0], sizes = [1, 1, 128], strides = [1, 1, 1]} : vector<7x7x128xf32> to vector<1x1x128xf32>
    %271 = vector.shape_cast %270 : vector<1x1x128xf32> to vector<128xf32>
    %272 = vector.shape_cast %271 : vector<128xf32> to vector<1x1x128xf32>
    %273 = vector.broadcast %272 : vector<1x1x128xf32> to vector<8x16x128xf32>
    %274 = arith.mulf %269, %273 : vector<8x16x128xf32>
    %275 = arith.addf %268, %274 : vector<8x16x128xf32>
    %276 = vector.extract_strided_slice %255 {offsets = [3, 0, 0], sizes = [8, 16, 128], strides = [1, 1, 1]} : vector<14x16x128xf32> to vector<8x16x128xf32>
    %277 = vector.extract_strided_slice %5 {offsets = [3, 5, 0], sizes = [1, 1, 128], strides = [1, 1, 1]} : vector<7x7x128xf32> to vector<1x1x128xf32>
    %278 = vector.shape_cast %277 : vector<1x1x128xf32> to vector<128xf32>
    %279 = vector.shape_cast %278 : vector<128xf32> to vector<1x1x128xf32>
    %280 = vector.broadcast %279 : vector<1x1x128xf32> to vector<8x16x128xf32>
    %281 = arith.mulf %276, %280 : vector<8x16x128xf32>
    %282 = arith.addf %275, %281 : vector<8x16x128xf32>
    %283 = vector.extract_strided_slice %255 {offsets = [4, 0, 0], sizes = [8, 16, 128], strides = [1, 1, 1]} : vector<14x16x128xf32> to vector<8x16x128xf32>
    %284 = vector.extract_strided_slice %5 {offsets = [4, 5, 0], sizes = [1, 1, 128], strides = [1, 1, 1]} : vector<7x7x128xf32> to vector<1x1x128xf32>
    %285 = vector.shape_cast %284 : vector<1x1x128xf32> to vector<128xf32>
    %286 = vector.shape_cast %285 : vector<128xf32> to vector<1x1x128xf32>
    %287 = vector.broadcast %286 : vector<1x1x128xf32> to vector<8x16x128xf32>
    %288 = arith.mulf %283, %287 : vector<8x16x128xf32>
    %289 = arith.addf %282, %288 : vector<8x16x128xf32>
    %290 = vector.extract_strided_slice %255 {offsets = [5, 0, 0], sizes = [8, 16, 128], strides = [1, 1, 1]} : vector<14x16x128xf32> to vector<8x16x128xf32>
    %291 = vector.extract_strided_slice %5 {offsets = [5, 5, 0], sizes = [1, 1, 128], strides = [1, 1, 1]} : vector<7x7x128xf32> to vector<1x1x128xf32>
    %292 = vector.shape_cast %291 : vector<1x1x128xf32> to vector<128xf32>
    %293 = vector.shape_cast %292 : vector<128xf32> to vector<1x1x128xf32>
    %294 = vector.broadcast %293 : vector<1x1x128xf32> to vector<8x16x128xf32>
    %295 = arith.mulf %290, %294 : vector<8x16x128xf32>
    %296 = arith.addf %289, %295 : vector<8x16x128xf32>
    %297 = vector.extract_strided_slice %255 {offsets = [6, 0, 0], sizes = [8, 16, 128], strides = [1, 1, 1]} : vector<14x16x128xf32> to vector<8x16x128xf32>
    %298 = vector.extract_strided_slice %5 {offsets = [6, 5, 0], sizes = [1, 1, 128], strides = [1, 1, 1]} : vector<7x7x128xf32> to vector<1x1x128xf32>
    %299 = vector.shape_cast %298 : vector<1x1x128xf32> to vector<128xf32>
    %300 = vector.shape_cast %299 : vector<128xf32> to vector<1x1x128xf32>
    %301 = vector.broadcast %300 : vector<1x1x128xf32> to vector<8x16x128xf32>
    %302 = arith.mulf %297, %301 : vector<8x16x128xf32>
    %303 = arith.addf %296, %302 : vector<8x16x128xf32>
    %304 = arith.addf %254, %303 : vector<8x16x128xf32>
    %305 = vector.extract_strided_slice %4 {offsets = [0, 6, 0], sizes = [14, 16, 128], strides = [1, 1, 1]} : vector<14x22x128xf32> to vector<14x16x128xf32>
    %306 = vector.extract_strided_slice %305 {offsets = [0, 0, 0], sizes = [8, 16, 128], strides = [1, 1, 1]} : vector<14x16x128xf32> to vector<8x16x128xf32>
    %307 = vector.extract_strided_slice %5 {offsets = [0, 6, 0], sizes = [1, 1, 128], strides = [1, 1, 1]} : vector<7x7x128xf32> to vector<1x1x128xf32>
    %308 = vector.shape_cast %307 : vector<1x1x128xf32> to vector<128xf32>
    %309 = vector.shape_cast %308 : vector<128xf32> to vector<1x1x128xf32>
    %310 = vector.broadcast %309 : vector<1x1x128xf32> to vector<8x16x128xf32>
    %311 = arith.mulf %306, %310 : vector<8x16x128xf32>
    %312 = vector.extract_strided_slice %305 {offsets = [1, 0, 0], sizes = [8, 16, 128], strides = [1, 1, 1]} : vector<14x16x128xf32> to vector<8x16x128xf32>
    %313 = vector.extract_strided_slice %5 {offsets = [1, 6, 0], sizes = [1, 1, 128], strides = [1, 1, 1]} : vector<7x7x128xf32> to vector<1x1x128xf32>
    %314 = vector.shape_cast %313 : vector<1x1x128xf32> to vector<128xf32>
    %315 = vector.shape_cast %314 : vector<128xf32> to vector<1x1x128xf32>
    %316 = vector.broadcast %315 : vector<1x1x128xf32> to vector<8x16x128xf32>
    %317 = arith.mulf %312, %316 : vector<8x16x128xf32>
    %318 = arith.addf %311, %317 : vector<8x16x128xf32>
    %319 = vector.extract_strided_slice %305 {offsets = [2, 0, 0], sizes = [8, 16, 128], strides = [1, 1, 1]} : vector<14x16x128xf32> to vector<8x16x128xf32>
    %320 = vector.extract_strided_slice %5 {offsets = [2, 6, 0], sizes = [1, 1, 128], strides = [1, 1, 1]} : vector<7x7x128xf32> to vector<1x1x128xf32>
    %321 = vector.shape_cast %320 : vector<1x1x128xf32> to vector<128xf32>
    %322 = vector.shape_cast %321 : vector<128xf32> to vector<1x1x128xf32>
    %323 = vector.broadcast %322 : vector<1x1x128xf32> to vector<8x16x128xf32>
    %324 = arith.mulf %319, %323 : vector<8x16x128xf32>
    %325 = arith.addf %318, %324 : vector<8x16x128xf32>
    %326 = vector.extract_strided_slice %305 {offsets = [3, 0, 0], sizes = [8, 16, 128], strides = [1, 1, 1]} : vector<14x16x128xf32> to vector<8x16x128xf32>
    %327 = vector.extract_strided_slice %5 {offsets = [3, 6, 0], sizes = [1, 1, 128], strides = [1, 1, 1]} : vector<7x7x128xf32> to vector<1x1x128xf32>
    %328 = vector.shape_cast %327 : vector<1x1x128xf32> to vector<128xf32>
    %329 = vector.shape_cast %328 : vector<128xf32> to vector<1x1x128xf32>
    %330 = vector.broadcast %329 : vector<1x1x128xf32> to vector<8x16x128xf32>
    %331 = arith.mulf %326, %330 : vector<8x16x128xf32>
    %332 = arith.addf %325, %331 : vector<8x16x128xf32>
    %333 = vector.extract_strided_slice %305 {offsets = [4, 0, 0], sizes = [8, 16, 128], strides = [1, 1, 1]} : vector<14x16x128xf32> to vector<8x16x128xf32>
    %334 = vector.extract_strided_slice %5 {offsets = [4, 6, 0], sizes = [1, 1, 128], strides = [1, 1, 1]} : vector<7x7x128xf32> to vector<1x1x128xf32>
    %335 = vector.shape_cast %334 : vector<1x1x128xf32> to vector<128xf32>
    %336 = vector.shape_cast %335 : vector<128xf32> to vector<1x1x128xf32>
    %337 = vector.broadcast %336 : vector<1x1x128xf32> to vector<8x16x128xf32>
    %338 = arith.mulf %333, %337 : vector<8x16x128xf32>
    %339 = arith.addf %332, %338 : vector<8x16x128xf32>
    %340 = vector.extract_strided_slice %305 {offsets = [5, 0, 0], sizes = [8, 16, 128], strides = [1, 1, 1]} : vector<14x16x128xf32> to vector<8x16x128xf32>
    %341 = vector.extract_strided_slice %5 {offsets = [5, 6, 0], sizes = [1, 1, 128], strides = [1, 1, 1]} : vector<7x7x128xf32> to vector<1x1x128xf32>
    %342 = vector.shape_cast %341 : vector<1x1x128xf32> to vector<128xf32>
    %343 = vector.shape_cast %342 : vector<128xf32> to vector<1x1x128xf32>
    %344 = vector.broadcast %343 : vector<1x1x128xf32> to vector<8x16x128xf32>
    %345 = arith.mulf %340, %344 : vector<8x16x128xf32>
    %346 = arith.addf %339, %345 : vector<8x16x128xf32>
    %347 = vector.extract_strided_slice %305 {offsets = [6, 0, 0], sizes = [8, 16, 128], strides = [1, 1, 1]} : vector<14x16x128xf32> to vector<8x16x128xf32>
    %348 = vector.extract_strided_slice %5 {offsets = [6, 6, 0], sizes = [1, 1, 128], strides = [1, 1, 1]} : vector<7x7x128xf32> to vector<1x1x128xf32>
    %349 = vector.shape_cast %348 : vector<1x1x128xf32> to vector<128xf32>
    %350 = vector.shape_cast %349 : vector<128xf32> to vector<1x1x128xf32>
    %351 = vector.broadcast %350 : vector<1x1x128xf32> to vector<8x16x128xf32>
    %352 = arith.mulf %347, %351 : vector<8x16x128xf32>
    %353 = arith.addf %346, %352 : vector<8x16x128xf32>
    %354 = arith.addf %304, %353 : vector<8x16x128xf32>
    %355 = tpu.iota {dimensions = array<i32: 2>} : vector<1x1x128xi32>
    %c4_i32 = arith.constant 4 : i32
    %356 = vector.broadcast %c4_i32 : i32 to vector<1x1x128xi32>
    %357 = arith.cmpi slt, %355, %356 : vector<1x1x128xi32>
    %cst = arith.constant dense<0.000000e+00> : vector<8x16xf32>
    %358 = vector.multi_reduction <add>, %354, %cst [2] : vector<8x16x128xf32> to vector<8x16xf32>
    %359 = vector.shape_cast %358 : vector<8x16xf32> to vector<8x16x1xf32>
    %cst_7 = arith.constant 2.500000e-01 : f32
    %360 = vector.broadcast %cst_7 : f32 to vector<8x16x1xf32>
    %361 = arith.mulf %359, %360 : vector<8x16x1xf32>
    %362 = vector.broadcast %361 : vector<8x16x1xf32> to vector<8x16x128xf32>
    %363 = arith.subf %354, %362 : vector<8x16x128xf32>
    %364 = arith.mulf %363, %363 : vector<8x16x128xf32>
    %cst_8 = arith.constant 0.000000e+00 : f32
    %365 = vector.shape_cast %357 : vector<1x1x128xi1> to vector<1x1x128xi1>
    %366 = vector.broadcast %365 : vector<1x1x128xi1> to vector<8x16x128xi1>
    %367 = vector.broadcast %cst_8 : f32 to vector<8x16x128xf32>
    %368 = arith.select %366, %364, %367 : vector<8x16x128xi1>, vector<8x16x128xf32>
    %cst_9 = arith.constant dense<0.000000e+00> : vector<8x16xf32>
    %369 = vector.multi_reduction <add>, %368, %cst_9 [2] : vector<8x16x128xf32> to vector<8x16xf32>
    %370 = vector.shape_cast %369 : vector<8x16xf32> to vector<8x16x1xf32>
    %cst_10 = arith.constant 2.500000e-01 : f32
    %371 = vector.broadcast %cst_10 : f32 to vector<8x16x1xf32>
    %372 = arith.mulf %370, %371 : vector<8x16x1xf32>
    %cst_11 = arith.constant 9.99999997E-7 : f32
    %373 = vector.broadcast %cst_11 : f32 to vector<8x16x1xf32>
    %374 = arith.addf %372, %373 : vector<8x16x1xf32>
    %375 = math.rsqrt %374 : vector<8x16x1xf32>
    %376 = vector.broadcast %375 : vector<8x16x1xf32> to vector<8x16x128xf32>
    %377 = arith.mulf %363, %376 : vector<8x16x128xf32>
    %c0_12 = arith.constant 0 : index
    %c0_13 = arith.constant 0 : index
    %378 = vector.load %arg4[%c0_12, %c0_13] : memref<1x128xf32, #tpu.memory_space<vmem>>, vector<1x128xf32>
    %379 = vector.shape_cast %378 : vector<1x128xf32> to vector<1x1x128xf32>
    %380 = vector.broadcast %379 : vector<1x1x128xf32> to vector<8x16x128xf32>
    %381 = arith.mulf %377, %380 : vector<8x16x128xf32>
    %c0_14 = arith.constant 0 : index
    %c0_15 = arith.constant 0 : index
    %382 = vector.load %arg5[%c0_14, %c0_15] : memref<1x128xf32, #tpu.memory_space<vmem>>, vector<1x128xf32>
    %383 = vector.shape_cast %382 : vector<1x128xf32> to vector<1x1x128xf32>
    %384 = vector.broadcast %383 : vector<1x1x128xf32> to vector<8x16x128xf32>
    %385 = arith.addf %381, %384 : vector<8x16x128xf32>
    %386 = vector.shape_cast %385 : vector<8x16x128xf32> to vector<128x128xf32>
    %387 = arith.truncf %386 : vector<128x128xf32> to vector<128x128xbf16>
    %c0_16 = arith.constant 0 : index
    %c0_17 = arith.constant 0 : index
    %388 = vector.load %arg6[%c0_16, %c0_17] : memref<128x128xbf16, #tpu.memory_space<vmem>>, vector<128x128xbf16>
    %cst_18 = arith.constant dense<0.000000e+00> : vector<128x128xf32>
    %389 = tpu.matmul %387, %388, %cst_18 {dimension_numbers = #tpu.dot_dimension_numbers<[1], [0], [0], [1], [0, 0, 1, 1], [], []>} : vector<128x128xbf16>, vector<128x128xbf16>, vector<128x128xf32> -> vector<128x128xf32>
    %c0_19 = arith.constant 0 : index
    %c0_20 = arith.constant 0 : index
    %390 = vector.load %arg7[%c0_19, %c0_20] : memref<1x128xf32, #tpu.memory_space<vmem>>, vector<1x128xf32>
    %391 = vector.broadcast %390 : vector<1x128xf32> to vector<128x128xf32>
    %392 = arith.addf %389, %391 : vector<128x128xf32>
    %cst_21 = arith.constant 5.000000e-01 : f32
    %393 = vector.broadcast %cst_21 : f32 to vector<128x128xf32>
    %394 = arith.mulf %393, %392 : vector<128x128xf32>
    %cst_22 = arith.constant 0.707106769 : f32
    %395 = vector.broadcast %cst_22 : f32 to vector<128x128xf32>
    %396 = arith.mulf %392, %395 : vector<128x128xf32>
    %397 = math.erf %396 : vector<128x128xf32>
    %cst_23 = arith.constant 1.000000e+00 : f32
    %398 = vector.broadcast %cst_23 : f32 to vector<128x128xf32>
    %399 = arith.addf %398, %397 : vector<128x128xf32>
    %400 = arith.mulf %394, %399 : vector<128x128xf32>
    %401 = arith.truncf %400 : vector<128x128xf32> to vector<128x128xbf16>
    %c0_24 = arith.constant 0 : index
    %c0_25 = arith.constant 0 : index
    %402 = vector.load %arg8[%c0_24, %c0_25] : memref<128x128xbf16, #tpu.memory_space<vmem>>, vector<128x128xbf16>
    %cst_26 = arith.constant dense<0.000000e+00> : vector<128x128xf32>
    %403 = tpu.matmul %401, %402, %cst_26 {dimension_numbers = #tpu.dot_dimension_numbers<[1], [0], [0], [1], [0, 0, 1, 1], [], []>} : vector<128x128xbf16>, vector<128x128xbf16>, vector<128x128xf32> -> vector<128x128xf32>
    %c0_27 = arith.constant 0 : index
    %c0_28 = arith.constant 0 : index
    %404 = vector.load %arg9[%c0_27, %c0_28] : memref<1x128xf32, #tpu.memory_space<vmem>>, vector<1x128xf32>
    %405 = vector.broadcast %404 : vector<1x128xf32> to vector<128x128xf32>
    %406 = arith.addf %403, %405 : vector<128x128xf32>
    %407 = vector.shape_cast %406 : vector<128x128xf32> to vector<8x16x128xf32>
    %408 = vector.extract_strided_slice %6 {offsets = [3, 0, 0], sizes = [8, 16, 128], strides = [1, 1, 1]} : vector<14x16x128xf32> to vector<8x16x128xf32>
    %409 = arith.addf %407, %408 : vector<8x16x128xf32>
    %c0_29 = arith.constant 0 : index
    %c0_30 = arith.constant 0 : index
    %c0_31 = arith.constant 0 : index
    %c0_32 = arith.constant 0 : index
    %410 = vector.load %arg10[%c0_29, %c0_30, %c0_31, %c0_32] : memref<1x8x16x128xf32, #tpu.memory_space<vmem>>, vector<1x8x16x128xf32>
    %411 = vector.shape_cast %410 : vector<1x8x16x128xf32> to vector<8x16x128xf32>
    %412 = vector.shape_cast %409 : vector<8x16x128xf32> to vector<1x8x16x128xf32>
    tpu.vector_store %arg10[%c0_29, %c0_30, %c0_31, %c0_32], %412 {strides = array<i32>} : memref<1x8x16x128xf32, #tpu.memory_space<vmem>>, vector<1x8x16x128xf32>,
    return
  }
  func.func @transform_0(%arg0: i32, %arg1: i32) -> (i32, i32, i32, i32) {
    %c0_i32 = arith.constant 0 : i32
    %c0_i32_0 = arith.constant 0 : i32
    %c0_i32_1 = arith.constant 0 : i32
    %c0_i32_2 = arith.constant 0 : i32
    return %arg0, %c0_i32, %c0_i32_0, %c0_i32_1 : i32, i32, i32, i32
  }
  func.func @transform_1(%arg0: i32, %arg1: i32) -> (i32, i32, i32) {
    %c0_i32 = arith.constant 0 : i32
    %c0_i32_0 = arith.constant 0 : i32
    %c0_i32_1 = arith.constant 0 : i32
    %c0_i32_2 = arith.constant 0 : i32
    return %c0_i32, %c0_i32_0, %c0_i32_1 : i32, i32, i32
  }
  func.func @transform_2(%arg0: i32, %arg1: i32) -> (i32, i32) {
    %c0_i32 = arith.constant 0 : i32
    %c0_i32_0 = arith.constant 0 : i32
    %c0_i32_1 = arith.constant 0 : i32
    return %c0_i32, %c0_i32_0 : i32, i32
  }
  func.func @transform_3(%arg0: i32, %arg1: i32) -> (i32, i32) {
    %c0_i32 = arith.constant 0 : i32
    %c0_i32_0 = arith.constant 0 : i32
    %c0_i32_1 = arith.constant 0 : i32
    return %c0_i32, %c0_i32_0 : i32, i32
  }
  func.func @transform_4(%arg0: i32, %arg1: i32) -> (i32, i32) {
    %c0_i32 = arith.constant 0 : i32
    %c0_i32_0 = arith.constant 0 : i32
    %c0_i32_1 = arith.constant 0 : i32
    return %c0_i32, %c0_i32_0 : i32, i32
  }
  func.func @transform_5(%arg0: i32, %arg1: i32) -> (i32, i32) {
    %c0_i32 = arith.constant 0 : i32
    %c0_i32_0 = arith.constant 0 : i32
    %c0_i32_1 = arith.constant 0 : i32
    return %c0_i32, %c0_i32_0 : i32, i32
  }
  func.func @transform_6(%arg0: i32, %arg1: i32) -> (i32, i32) {
    %c0_i32 = arith.constant 0 : i32
    %c0_i32_0 = arith.constant 0 : i32
    %c0_i32_1 = arith.constant 0 : i32
    return %c0_i32, %c0_i32_0 : i32, i32
  }
  func.func @transform_7(%arg0: i32, %arg1: i32) -> (i32, i32) {
    %c0_i32 = arith.constant 0 : i32
    %c0_i32_0 = arith.constant 0 : i32
    %c0_i32_1 = arith.constant 0 : i32
    return %c0_i32, %c0_i32_0 : i32, i32
  }
  func.func @transform_8(%arg0: i32, %arg1: i32) -> (i32, i32, i32, i32) {
    %c0_i32 = arith.constant 0 : i32
    %c0_i32_0 = arith.constant 0 : i32
    %c0_i32_1 = arith.constant 0 : i32
    return %arg0, %arg1, %c0_i32, %c0_i32_0 : i32, i32, i32, i32
  }
}

</mosaic_0001>

<llo_original>
// kernel: bottleneck_forward.1
$region0: #{bottleneck_forward.1}
  #allocation0 [shape = 'u32[]', space=smem, size = 0x4, offset = 0x4, fixed_abs, tag = 'smem constant byte address 0x4 - core index']
  #allocation1 [shape = 'u32[72,128]{1,0:T(1,128)}', space=vmem, size = 0x9000, scoped, tag = 'internal scratch']
  %s0 = inlined_call_operand.vmem [shape: f32[2,22,22,128], index: 0, kind: input, shape index: {}]
  %s1 = inlined_call_operand.vmem [shape: f32[7,7,128], index: 1, kind: input, shape index: {}]
  %s2 = inlined_call_operand.vmem [shape: f32[1,128], index: 2, kind: input, shape index: {}]
  %s3 = inlined_call_operand.vmem [shape: f32[1,128], index: 3, kind: input, shape index: {}]
  %s4 = inlined_call_operand.vmem [shape: bf16[128,128], index: 4, kind: input, shape index: {}]
  %s5 = inlined_call_operand.vmem [shape: f32[1,128], index: 5, kind: input, shape index: {}]
  %s6 = inlined_call_operand.vmem [shape: bf16[128,128], index: 6, kind: input, shape index: {}]
  %s7 = inlined_call_operand.vmem [shape: f32[1,128], index: 7, kind: input, shape index: {}]
  %s8 = inlined_call_operand.vmem [shape: f32[2,16,16,128], index: 8, kind: output, shape index: {}]
  %s9 = sld [smem:[#allocation0]]
  $region65: #{bottleneck_forward.1} parent=0
    _
  %s11 = ssub.s32 1, %s9
  %s12 = scalar_select 0, %s11, %s9
  loop: start=0, step=1, limit=6
  $region2: #{bottleneck_forward.1} parent=0 // loop_pre_header
    _
  $region3: #{bottleneck_forward.1} parent=0 // loop_header
    %s14 = sphi 0, %s18
    %p15 = scmp.ge.s32.totalorder %s14, 6
    %s21 = sphi 0, %s33
    %s22 = sphi 0, %s29
    %s23 = sphi 0, %s21
    %s24 = sphi 0, %s22
    %s25 = sphi 0, %s23
    %s26 = sphi 0, %s24
    %s36 = sphi 0, %s38
    %s39 = sphi 0, %s36
    %s40 = sphi 0, %s39
    %s56 = sphi 0, %s40
    %s60 = sphi 0, %s60
    %s62 = sphi 0, %s60
    %s63 = sphi 0, %s62
    %s77 = sphi 0, %s63
    %s81 = sphi 0, %s81
    %s83 = sphi 0, %s81
    %s84 = sphi 0, %s83
    %s98 = sphi 0, %s84
    %s102 = sphi 0, %s102
    %s104 = sphi 0, %s102
    %s105 = sphi 0, %s104
    %s119 = sphi 0, %s105
    %s123 = sphi 0, %s123
    %s125 = sphi 0, %s123
    %s126 = sphi 0, %s125
    %s140 = sphi 0, %s126
    %s144 = sphi 0, %s144
    %s146 = sphi 0, %s144
    %s147 = sphi 0, %s146
    %s161 = sphi 0, %s147
    %s165 = sphi 0, %s165
    %s167 = sphi 0, %s165
    %s168 = sphi 0, %s167
    %s182 = sphi 0, %s168
    %s186 = sphi 0, %s186
    %s188 = sphi 0, %s186
    %s189 = sphi 0, %s188
    %s203 = sphi 0, %s189
    %s211 = sphi 0, %s213
    %s214 = sphi 0, %s211
    %s215 = sphi 0, %s214
    %s231 = sphi 0, %s215
  $region4: #{bottleneck_forward.1} parent=0 // loop_header_branch
    %17 = sbr.rel (%p15) target = $region8
  $region5: #{bottleneck_forward.1} parent=0 // loop_body
    %s19 = ssub.s32 %s14, 1
    %s20 = ssub.s32 %s14, 2
    %s27 = sadd.s32 1, %s22
    %p28 = scmp.ge.s32.totalorder %s27, 2
    %s29 = scalar_select %p28, 0, %s27
    %s30 = sadd.s32 1, %s21
    %s31 = scalar_select %p28, %s30, %s21
    %p32 = scmp.ge.s32.totalorder %s31, 2
    %s33 = scalar_select %p32, 0, %s31
    %s34 = ssub.s32 %s21, %s33
    %p35 = scmp.eq.s32.totalorder %s34, 0
    %s37 = sadd.s32 %s36, 1
    %s38 = scalar_select %p35, %s36, %s37
    %p41 = pneg %p35
    %p42 = scmp.eq.s32.totalorder %s14, 3
    %p43 = por %p41, %p42
    %p44 = scmp.ne.s32.totalorder %s36, %s39
    %p45 = scmp.eq.s32.totalorder %s14, 0
    %p46 = por %p44, %p45
    %p47 = scmp.ne.s32.totalorder %s36, %s39
    %p48 = scmp.eq.s32.totalorder %s19, 3
    %p49 = por %p47, %p48
    %p50 = scmp.ne.s32.totalorder %s39, %s40
    %p51 = scmp.eq.s32.totalorder %s19, 0
    %p52 = por %p50, %p51
    %p53 = scmp.ne.s32.totalorder %s39, %s40
    %p54 = scmp.eq.s32.totalorder %s20, 3
    %p55 = por %p53, %p54
    %p57 = scmp.ne.s32.totalorder %s40, %s56
    %p58 = scmp.eq.s32.totalorder %s20, 0
    %p59 = por %p57, %p58
    %s61 = sadd.s32 %s60, 1
    %p64 = scmp.eq.s32.totalorder %s14, 3
    %p65 = scmp.ne.s32.totalorder %s60, %s62
    %p66 = scmp.eq.s32.totalorder %s14, 0
    %p67 = por %p65, %p66
    %p68 = scmp.ne.s32.totalorder %s60, %s62
    %p69 = scmp.eq.s32.totalorder %s19, 3
    %p70 = por %p68, %p69
    %p71 = scmp.ne.s32.totalorder %s62, %s63
    %p72 = scmp.eq.s32.totalorder %s19, 0
    %p73 = por %p71, %p72
    %p74 = scmp.ne.s32.totalorder %s62, %s63
    %p75 = scmp.eq.s32.totalorder %s20, 3
    %p76 = por %p74, %p75
    %p78 = scmp.ne.s32.totalorder %s63, %s77
    %p79 = scmp.eq.s32.totalorder %s20, 0
    %p80 = por %p78, %p79
    %s82 = sadd.s32 %s81, 1
    %p85 = scmp.eq.s32.totalorder %s14, 3
    %p86 = scmp.ne.s32.totalorder %s81, %s83
    %p87 = scmp.eq.s32.totalorder %s14, 0
    %p88 = por %p86, %p87
    %p89 = scmp.ne.s32.totalorder %s81, %s83
    %p90 = scmp.eq.s32.totalorder %s19, 3
    %p91 = por %p89, %p90
    %p92 = scmp.ne.s32.totalorder %s83, %s84
    %p93 = scmp.eq.s32.totalorder %s19, 0
    %p94 = por %p92, %p93
    %p95 = scmp.ne.s32.totalorder %s83, %s84
    %p96 = scmp.eq.s32.totalorder %s20, 3
    %p97 = por %p95, %p96
    %p99 = scmp.ne.s32.totalorder %s84, %s98
    %p100 = scmp.eq.s32.totalorder %s20, 0
    %p101 = por %p99, %p100
    %s103 = sadd.s32 %s102, 1
    %p106 = scmp.eq.s32.totalorder %s14, 3
    %p107 = scmp.ne.s32.totalorder %s102, %s104
    %p108 = scmp.eq.s32.totalorder %s14, 0
    %p109 = por %p107, %p108
    %p110 = scmp.ne.s32.totalorder %s102, %s104
    %p111 = scmp.eq.s32.totalorder %s19, 3
    %p112 = por %p110, %p111
    %p113 = scmp.ne.s32.totalorder %s104, %s105
    %p114 = scmp.eq.s32.totalorder %s19, 0
    %p115 = por %p113, %p114
    %p116 = scmp.ne.s32.totalorder %s104, %s105
    %p117 = scmp.eq.s32.totalorder %s20, 3
    %p118 = por %p116, %p117
    %p120 = scmp.ne.s32.totalorder %s105, %s119
    %p121 = scmp.eq.s32.totalorder %s20, 0
    %p122 = por %p120, %p121
    %s124 = sadd.s32 %s123, 1
    %p127 = scmp.eq.s32.totalorder %s14, 3
    %p128 = scmp.ne.s32.totalorder %s123, %s125
    %p129 = scmp.eq.s32.totalorder %s14, 0
    %p130 = por %p128, %p129
    %p131 = scmp.ne.s32.totalorder %s123, %s125
    %p132 = scmp.eq.s32.totalorder %s19, 3
    %p133 = por %p131, %p132
    %p134 = scmp.ne.s32.totalorder %s125, %s126
    %p135 = scmp.eq.s32.totalorder %s19, 0
    %p136 = por %p134, %p135
    %p137 = scmp.ne.s32.totalorder %s125, %s126
    %p138 = scmp.eq.s32.totalorder %s20, 3
    %p139 = por %p137, %p138
    %p141 = scmp.ne.s32.totalorder %s126, %s140
    %p142 = scmp.eq.s32.totalorder %s20, 0
    %p143 = por %p141, %p142
    %s145 = sadd.s32 %s144, 1
    %p148 = scmp.eq.s32.totalorder %s14, 3
    %p149 = scmp.ne.s32.totalorder %s144, %s146
    %p150 = scmp.eq.s32.totalorder %s14, 0
    %p151 = por %p149, %p150
    %p152 = scmp.ne.s32.totalorder %s144, %s146
    %p153 = scmp.eq.s32.totalorder %s19, 3
    %p154 = por %p152, %p153
    %p155 = scmp.ne.s32.totalorder %s146, %s147
    %p156 = scmp.eq.s32.totalorder %s19, 0
    %p157 = por %p155, %p156
    %p158 = scmp.ne.s32.totalorder %s146, %s147
    %p159 = scmp.eq.s32.totalorder %s20, 3
    %p160 = por %p158, %p159
    %p162 = scmp.ne.s32.totalorder %s147, %s161
    %p163 = scmp.eq.s32.totalorder %s20, 0
    %p164 = por %p162, %p163
    %s166 = sadd.s32 %s165, 1
    %p169 = scmp.eq.s32.totalorder %s14, 3
    %p170 = scmp.ne.s32.totalorder %s165, %s167
    %p171 = scmp.eq.s32.totalorder %s14, 0
    %p172 = por %p170, %p171
    %p173 = scmp.ne.s32.totalorder %s165, %s167
    %p174 = scmp.eq.s32.totalorder %s19, 3
    %p175 = por %p173, %p174
    %p176 = scmp.ne.s32.totalorder %s167, %s168
    %p177 = scmp.eq.s32.totalorder %s19, 0
    %p178 = por %p176, %p177
    %p179 = scmp.ne.s32.totalorder %s167, %s168
    %p180 = scmp.eq.s32.totalorder %s20, 3
    %p181 = por %p179, %p180
    %p183 = scmp.ne.s32.totalorder %s168, %s182
    %p184 = scmp.eq.s32.totalorder %s20, 0
    %p185 = por %p183, %p184
    %s187 = sadd.s32 %s186, 1
    %p190 = scmp.eq.s32.totalorder %s14, 3
    %p191 = scmp.ne.s32.totalorder %s186, %s188
    %p192 = scmp.eq.s32.totalorder %s14, 0
    %p193 = por %p191, %p192
    %p194 = scmp.ne.s32.totalorder %s186, %s188
    %p195 = scmp.eq.s32.totalorder %s19, 3
    %p196 = por %p194, %p195
    %p197 = scmp.ne.s32.totalorder %s188, %s189
    %p198 = scmp.eq.s32.totalorder %s19, 0
    %p199 = por %p197, %p198
    %p200 = scmp.ne.s32.totalorder %s188, %s189
    %p201 = scmp.eq.s32.totalorder %s20, 3
    %p202 = por %p200, %p201
    %p204 = scmp.ne.s32.totalorder %s189, %s203
    %p205 = scmp.eq.s32.totalorder %s20, 0
    %p206 = por %p204, %p205
    %s207 = ssub.s32 %s21, %s33
    %s208 = ssub.s32 %s22, %s29
    %s209 = sor.u32 %s207, %s208
    %p210 = scmp.eq.s32.totalorder %s209, 0
    %s212 = sadd.s32 %s211, 1
    %s213 = scalar_select %p210, %s211, %s212
    %p216 = pneg %p210
    %p217 = scmp.eq.s32.totalorder %s14, 3
    %p218 = por %p216, %p217
    %p219 = scmp.ne.s32.totalorder %s211, %s214
    %p220 = scmp.eq.s32.totalorder %s14, 0
    %p221 = por %p219, %p220
    %p222 = scmp.ne.s32.totalorder %s211, %s214
    %p223 = scmp.eq.s32.totalorder %s19, 3
    %p224 = por %p222, %p223
    %p225 = scmp.ne.s32.totalorder %s214, %s215
    %p226 = scmp.eq.s32.totalorder %s19, 0
    %p227 = por %p225, %p226
    %p228 = scmp.ne.s32.totalorder %s214, %s215
    %p229 = scmp.eq.s32.totalorder %s20, 3
    %p230 = por %p228, %p229
    %p232 = scmp.ne.s32.totalorder %s215, %s231
    %p233 = scmp.eq.s32.totalorder %s20, 0
    %p234 = por %p232, %p233
    %p235 = scmp.le.s32.totalorder 1, %s14
    %p236 = scmp.lt.s32.totalorder %s14, 5
    %p237 = pnand %p235, %p236
    %p238 = pneg %p237
    // Predicated region
    $region9: #{bottleneck_forward.1} parent=5 // pred_check
      _
    $region10: #{bottleneck_forward.1} parent=5 // pred_check_branch
      %240 = sbr.rel (%p237) target = $region12
    $region11: #{bottleneck_forward.1} parent=5 // pred_region
      %s241 = ssub.s32 %s14, 1
      // Predicated region
      $region13: #{bottleneck_forward.1} parent=11 // pred_check
        %p242 = pneg %p73
      $region14: #{bottleneck_forward.1} parent=11 // pred_check_branch
        %244 = sbr.rel (%p242) target = $region16
      $region15: #{bottleneck_forward.1} parent=11 // pred_region
        _
      $region16: #{bottleneck_forward.1} parent=11 // pred_fallthru
        _
      // Predicated region
      $region17: #{bottleneck_forward.1} parent=11 // pred_check
        %p245 = pneg %p94
      $region18: #{bottleneck_forward.1} parent=11 // pred_check_branch
        %247 = sbr.rel (%p245) target = $region20
      $region19: #{bottleneck_forward.1} parent=11 // pred_region
        _
      $region20: #{bottleneck_forward.1} parent=11 // pred_fallthru
        _
      // Predicated region
      $region21: #{bottleneck_forward.1} parent=11 // pred_check
        %p248 = pneg %p115
      $region22: #{bottleneck_forward.1} parent=11 // pred_check_branch
        %250 = sbr.rel (%p248) target = $region24
      $region23: #{bottleneck_forward.1} parent=11 // pred_region
        _
      $region24: #{bottleneck_forward.1} parent=11 // pred_fallthru
        _
      // Predicated region
      $region25: #{bottleneck_forward.1} parent=11 // pred_check
        %p251 = pneg %p136
      $region26: #{bottleneck_forward.1} parent=11 // pred_check_branch
        %253 = sbr.rel (%p251) target = $region28
      $region27: #{bottleneck_forward.1} parent=11 // pred_region
        _
      $region28: #{bottleneck_forward.1} parent=11 // pred_fallthru
        _
      // Predicated region
      $region29: #{bottleneck_forward.1} parent=11 // pred_check
        %p254 = pneg %p157
      $region30: #{bottleneck_forward.1} parent=11 // pred_check_branch
        %256 = sbr.rel (%p254) target = $region32
      $region31: #{bottleneck_forward.1} parent=11 // pred_region
        _
      $region32: #{bottleneck_forward.1} parent=11 // pred_fallthru
        _
      // Predicated region
      $region33: #{bottleneck_forward.1} parent=11 // pred_check
        %p257 = pneg %p178
      $region34: #{bottleneck_forward.1} parent=11 // pred_check_branch
        %259 = sbr.rel (%p257) target = $region36
      $region35: #{bottleneck_forward.1} parent=11 // pred_region
        _
      $region36: #{bottleneck_forward.1} parent=11 // pred_fallthru
        _
      // Predicated region
      $region37: #{bottleneck_forward.1} parent=11 // pred_check
        %p260 = pneg %p199
      $region38: #{bottleneck_forward.1} parent=11 // pred_check_branch
        %262 = sbr.rel (%p260) target = $region40
      $region39: #{bottleneck_forward.1} parent=11 // pred_region
        _
      $region40: #{bottleneck_forward.1} parent=11 // pred_fallthru
        _
    $region12: #{bottleneck_forward.1} parent=5 // pred_fallthru
      _
    %p263 = scmp.lt.s32.totalorder %s14, 4
    // Predicated region
    $region41: #{bottleneck_forward.1} parent=5 // pred_check
      %p264 = pneg %p263
    $region42: #{bottleneck_forward.1} parent=5 // pred_check_branch
      %266 = sbr.rel (%p264) target = $region44
    $region43: #{bottleneck_forward.1} parent=5 // pred_region
      // Predicated region
      $region45: #{bottleneck_forward.1} parent=43 // pred_check
        %p267 = pneg %p46
      $region46: #{bottleneck_forward.1} parent=43 // pred_check_branch
        %269 = sbr.rel (%p267) target = $region48
      $region47: #{bottleneck_forward.1} parent=43 // pred_region
        %p270 = scmp.lt.s32.totalorder %s21, 1
        %s271 = scalar_select %p270, %s21, 1
        %s272 = smul.addr %s271, 66
        %s273 = smul.addr %s272, 8
        %s274 = scalar_lea.vmem %s0, %s273
      $region48: #{bottleneck_forward.1} parent=43 // pred_fallthru
        _
    $region44: #{bottleneck_forward.1} parent=5 // pred_fallthru
      _
    %p275 = scmp.le.s32.totalorder 1, %s14
    %p276 = scmp.lt.s32.totalorder %s14, 5
    %p277 = pnand %p275, %p276
    %p278 = pneg %p277
    // Predicated region
    $region49: #{bottleneck_forward.1} parent=5 // pred_check
      _
    $region50: #{bottleneck_forward.1} parent=5 // pred_check_branch
      %280 = sbr.rel (%p277) target = $region52
    $region51: #{bottleneck_forward.1} parent=5 // pred_region
      %s281 = ssub.s32 %s14, 1
      %p282 = scmp.lt.s32.totalorder %s23, 1
      %s283 = scalar_select %p282, %s23, 1
      %s284 = smul.addr %s283, 66
      %s285 = smul.addr %s284, 8
      %s286 = scalar_lea.vmem %s0, %s285
      %p287 = pneg %p52
      %p288 = pneg %p49
      %p289 = pneg %p73
      %p290 = pneg %p70
      %p291 = pneg %p94
      %p292 = pneg %p91
      %p293 = pneg %p115
      %p294 = pneg %p112
      %p295 = pneg %p136
      %p296 = pneg %p133
      %p297 = pneg %p157
      %p298 = pneg %p154
      %p299 = pneg %p178
      %p300 = pneg %p175
      %p301 = pneg %p199
      %p302 = pneg %p196
      %p303 = pneg %p227
      %p304 = pneg %p224
      %s305 = smul.u32 8, %s24
      %p306 = scmp.lt.s32.totalorder %s23, 1
      %s307 = scalar_select %p306, %s23, 1
      %p308 = scmp.lt.s32.totalorder %s305, 15
      %s309 = scalar_select %p308, %s305, 15
      %s310 = smul.addr %s309, 2
      %s311 = smul.addr %s307, 32
      %s312 = sadd.s32 %s310, %s311
      %s313 = smul.addr %s312, 8
      %s314 = scalar_lea.vmem %s8, %s313
      %p315 = scmp.lt.s32.totalorder %s23, 1
      %s316 = scalar_select %p315, %s23, 1
      %s317 = smul.addr %s316, 66
      %s318 = smul.addr %s317, 8
      %s319 = scalar_lea.vmem %s0, %s318
      %s320 = smul.u32 8, %s24
      %p321 = scmp.lt.s32.totalorder %s23, 1
      %s322 = scalar_select %p321, %s23, 1
      %p323 = scmp.lt.s32.totalorder %s320, 15
      %s324 = scalar_select %p323, %s320, 15
      %s325 = smul.addr %s324, 2
      %s326 = smul.addr %s322, 32
      %s327 = sadd.s32 %s325, %s326
      %s328 = smul.addr %s327, 8
      %s329 = scalar_lea.vmem %s8, %s328
      %s330 = smul.u32 8, %s24
      %s331 = smul.u32 %s24, 8
      %s332 = smul.u32 %s331, 24
      %s333 = scalar_lea.vmem %s319, %s332
      %v334 = vld [vmem:[%s333] sm:$0xff]
      %v335 = vld [vmem:[%s333 + $0x8] sm:$0xff]
      %v336 = vld [vmem:[%s333 + $0x10] sm:$0x3f]
      %v337 = vld [vmem:[%s333 + $0x18] sm:$0xff]
      %v338 = vld [vmem:[%s333 + $0x20] sm:$0xff]
      %v339 = vld [vmem:[%s333 + $0x28] sm:$0x3f]
      %v340 = vld [vmem:[%s333 + $0x30] sm:$0xff]
      %v341 = vld [vmem:[%s333 + $0x38] sm:$0xff]
      %v342 = vld [vmem:[%s333 + $0x40] sm:$0x3f]
      %v343 = vld [vmem:[%s333 + $0x48] sm:$0xff]
      %v344 = vld [vmem:[%s333 + $0x50] sm:$0xff]
      %v345 = vld [vmem:[%s333 + $0x58] sm:$0x3f]
      %v346 = vld [vmem:[%s333 + $0x60] sm:$0xff]
      %v347 = vld [vmem:[%s333 + $0x68] sm:$0xff]
      %v348 = vld [vmem:[%s333 + $0x70] sm:$0x3f]
      %v349 = vld [vmem:[%s333 + $0x78] sm:$0xff]
      %v350 = vld [vmem:[%s333 + $0x80] sm:$0xff]
      %v351 = vld [vmem:[%s333 + $0x88] sm:$0x3f]
      %v352 = vld [vmem:[%s333 + $0x90] sm:$0xff]
      %v353 = vld [vmem:[%s333 + $0x98] sm:$0xff]
      %v354 = vld [vmem:[%s333 + $0xa0] sm:$0x3f]
      %v355 = vld [vmem:[%s333 + $0xa8] sm:$0xff]
      %v356 = vld [vmem:[%s333 + $0xb0] sm:$0xff]
      %v357 = vld [vmem:[%s333 + $0xb8] sm:$0x3f]
      %v358 = vld [vmem:[%s333 + $0xc0] sm:$0xff]
      %v359 = vld [vmem:[%s333 + $0xc8] sm:$0xff]
      %v360 = vld [vmem:[%s333 + $0xd0] sm:$0x3f]
      %v361 = vld [vmem:[%s333 + $0xd8] sm:$0xff]
      %v362 = vld [vmem:[%s333 + $0xe0] sm:$0xff]
      %v363 = vld [vmem:[%s333 + $0xe8] sm:$0x3f]
      %v364 = vld [vmem:[%s333 + $0xf0] sm:$0xff]
      %v365 = vld [vmem:[%s333 + $0xf8] sm:$0xff]
      %v366 = vld [vmem:[%s333 + $0x100] sm:$0x3f]
      %v367 = vld [vmem:[%s333 + $0x108] sm:$0xff]
      %v368 = vld [vmem:[%s333 + $0x110] sm:$0xff]
      %v369 = vld [vmem:[%s333 + $0x118] sm:$0x3f]
      %v370 = vld [vmem:[%s333 + $0x120] sm:$0xff]
      %v371 = vld [vmem:[%s333 + $0x128] sm:$0xff]
      %v372 = vld [vmem:[%s333 + $0x130] sm:$0x3f]
      %v373 = vld [vmem:[%s333 + $0x138] sm:$0xff]
      %v374 = vld [vmem:[%s333 + $0x140] sm:$0xff]
      %v375 = vld [vmem:[%s333 + $0x148] sm:$0x3f]
      %v376 = vld [vmem:[%s1] sm:$0x7f]
      %v377 = vld [vmem:[%s1 + $0x8] sm:$0x7f]
      %v378 = vld [vmem:[%s1 + $0x10] sm:$0x7f]
      %v379 = vld [vmem:[%s1 + $0x18] sm:$0x7f]
      %v380 = vld [vmem:[%s1 + $0x20] sm:$0x7f]
      %v381 = vld [vmem:[%s1 + $0x28] sm:$0x7f]
      %v382 = vld [vmem:[%s1 + $0x30] sm:$0x7f]
      %v383 = vperm.slane %v376, 0
      %v384 = vmul.f32 %v334, %v383
      %v385 = vmul.f32 %v335, %v383
      %v386 = vmul.f32 %v337, %v383
      %v387 = vmul.f32 %v338, %v383
      %v388 = vmul.f32 %v340, %v383
      %v389 = vmul.f32 %v341, %v383
      %v390 = vmul.f32 %v343, %v383
      %v391 = vmul.f32 %v344, %v383
      %v392 = vmul.f32 %v346, %v383
      %v393 = vmul.f32 %v347, %v383
      %v394 = vmul.f32 %v349, %v383
      %v395 = vmul.f32 %v350, %v383
      %v396 = vmul.f32 %v352, %v383
      %v397 = vmul.f32 %v353, %v383
      %v398 = vmul.f32 %v355, %v383
      %v399 = vmul.f32 %v356, %v383
      %v400 = vperm.slane %v377, 0
      %v401 = vmul.f32 %v337, %v400
      %v402 = vmul.f32 %v338, %v400
      %v403 = vmul.f32 %v340, %v400
      %v404 = vmul.f32 %v341, %v400
      %v405 = vmul.f32 %v343, %v400
      %v406 = vmul.f32 %v344, %v400
      %v407 = vmul.f32 %v346, %v400
      %v408 = vmul.f32 %v347, %v400
      %v409 = vmul.f32 %v349, %v400
      %v410 = vmul.f32 %v350, %v400
      %v411 = vmul.f32 %v352, %v400
      %v412 = vmul.f32 %v353, %v400
      %v413 = vmul.f32 %v355, %v400
      %v414 = vmul.f32 %v356, %v400
      %v415 = vmul.f32 %v358, %v400
      %v416 = vmul.f32 %v359, %v400
      %v417 = vadd.f32 %v384, %v401
      %v418 = vadd.f32 %v385, %v402
      %v419 = vadd.f32 %v386, %v403
      %v420 = vadd.f32 %v387, %v404
      %v421 = vadd.f32 %v388, %v405
      %v422 = vadd.f32 %v389, %v406
      %v423 = vadd.f32 %v390, %v407
      %v424 = vadd.f32 %v391, %v408
      %v425 = vadd.f32 %v392, %v409
      %v426 = vadd.f32 %v393, %v410
      %v427 = vadd.f32 %v394, %v411
      %v428 = vadd.f32 %v395, %v412
      %v429 = vadd.f32 %v396, %v413
      %v430 = vadd.f32 %v397, %v414
      %v431 = vadd.f32 %v398, %v415
      %v432 = vadd.f32 %v399, %v416
      %v433 = vperm.slane %v378, 0
      %v434 = vmul.f32 %v340, %v433
      %v435 = vmul.f32 %v341, %v433
      %v436 = vmul.f32 %v343, %v433
      %v437 = vmul.f32 %v344, %v433
      %v438 = vmul.f32 %v346, %v433
      %v439 = vmul.f32 %v347, %v433
      %v440 = vmul.f32 %v349, %v433
      %v441 = vmul.f32 %v350, %v433
      %v442 = vmul.f32 %v352, %v433
      %v443 = vmul.f32 %v353, %v433
      %v444 = vmul.f32 %v355, %v433
      %v445 = vmul.f32 %v356, %v433
      %v446 = vmul.f32 %v358, %v433
      %v447 = vmul.f32 %v359, %v433
      %v448 = vmul.f32 %v361, %v433
      %v449 = vmul.f32 %v362, %v433
      %v450 = vadd.f32 %v417, %v434
      %v451 = vadd.f32 %v418, %v435
      %v452 = vadd.f32 %v419, %v436
      %v453 = vadd.f32 %v420, %v437
      %v454 = vadd.f32 %v421, %v438
      %v455 = vadd.f32 %v422, %v439
      %v456 = vadd.f32 %v423, %v440
      %v457 = vadd.f32 %v424, %v441
      %v458 = vadd.f32 %v425, %v442
      %v459 = vadd.f32 %v426, %v443
      %v460 = vadd.f32 %v427, %v444
      %v461 = vadd.f32 %v428, %v445
      %v462 = vadd.f32 %v429, %v446
      %v463 = vadd.f32 %v430, %v447
      %v464 = vadd.f32 %v431, %v448
      %v465 = vadd.f32 %v432, %v449
      %v466 = vperm.slane %v379, 0
      %v467 = vmul.f32 %v343, %v466
      %v468 = vmul.f32 %v344, %v466
      %v469 = vmul.f32 %v346, %v466
      %v470 = vmul.f32 %v347, %v466
      %v471 = vmul.f32 %v349, %v466
      %v472 = vmul.f32 %v350, %v466
      %v473 = vmul.f32 %v352, %v466
      %v474 = vmul.f32 %v353, %v466
      %v475 = vmul.f32 %v355, %v466
      %v476 = vmul.f32 %v356, %v466
      %v477 = vmul.f32 %v358, %v466
      %v478 = vmul.f32 %v359, %v466
      %v479 = vmul.f32 %v361, %v466
      %v480 = vmul.f32 %v362, %v466
      %v481 = vmul.f32 %v364, %v466
      %v482 = vmul.f32 %v365, %v466
      %v483 = vadd.f32 %v450, %v467
      %v484 = vadd.f32 %v451, %v468
      %v485 = vadd.f32 %v452, %v469
      %v486 = vadd.f32 %v453, %v470
      %v487 = vadd.f32 %v454, %v471
      %v488 = vadd.f32 %v455, %v472
      %v489 = vadd.f32 %v456, %v473
      %v490 = vadd.f32 %v457, %v474
      %v491 = vadd.f32 %v458, %v475
      %v492 = vadd.f32 %v459, %v476
      %v493 = vadd.f32 %v460, %v477
      %v494 = vadd.f32 %v461, %v478
      %v495 = vadd.f32 %v462, %v479
      %v496 = vadd.f32 %v463, %v480
      %v497 = vadd.f32 %v464, %v481
      %v498 = vadd.f32 %v465, %v482
      %v499 = vperm.slane %v380, 0
      %v500 = vmul.f32 %v346, %v499
      %v501 = vmul.f32 %v347, %v499
      %v502 = vmul.f32 %v349, %v499
      %v503 = vmul.f32 %v350, %v499
      %v504 = vmul.f32 %v352, %v499
      %v505 = vmul.f32 %v353, %v499
      %v506 = vmul.f32 %v355, %v499
      %v507 = vmul.f32 %v356, %v499
      %v508 = vmul.f32 %v358, %v499
      %v509 = vmul.f32 %v359, %v499
      %v510 = vmul.f32 %v361, %v499
      %v511 = vmul.f32 %v362, %v499
      %v512 = vmul.f32 %v364, %v499
      %v513 = vmul.f32 %v365, %v499
      %v514 = vmul.f32 %v367, %v499
      %v515 = vmul.f32 %v368, %v499
      %v516 = vadd.f32 %v483, %v500
      %v517 = vadd.f32 %v484, %v501
      %v518 = vadd.f32 %v485, %v502
      %v519 = vadd.f32 %v486, %v503
      %v520 = vadd.f32 %v487, %v504
      %v521 = vadd.f32 %v488, %v505
      %v522 = vadd.f32 %v489, %v506
      %v523 = vadd.f32 %v490, %v507
      %v524 = vadd.f32 %v491, %v508
      %v525 = vadd.f32 %v492, %v509
      %v526 = vadd.f32 %v493, %v510
      %v527 = vadd.f32 %v494, %v511
      %v528 = vadd.f32 %v495, %v512
      %v529 = vadd.f32 %v496, %v513
      %v530 = vadd.f32 %v497, %v514
      %v531 = vadd.f32 %v498, %v515
      %v532 = vperm.slane %v381, 0
      %v533 = vmul.f32 %v349, %v532
      %v534 = vmul.f32 %v350, %v532
      %v535 = vmul.f32 %v352, %v532
      %v536 = vmul.f32 %v353, %v532
      %v537 = vmul.f32 %v355, %v532
      %v538 = vmul.f32 %v356, %v532
      %v539 = vmul.f32 %v358, %v532
      %v540 = vmul.f32 %v359, %v532
      %v541 = vmul.f32 %v361, %v532
      %v542 = vmul.f32 %v362, %v532
      %v543 = vmul.f32 %v364, %v532
      %v544 = vmul.f32 %v365, %v532
      %v545 = vmul.f32 %v367, %v532
      %v546 = vmul.f32 %v368, %v532
      %v547 = vmul.f32 %v370, %v532
      %v548 = vmul.f32 %v371, %v532
      %v549 = vadd.f32 %v516, %v533
      %v550 = vadd.f32 %v517, %v534
      %v551 = vadd.f32 %v518, %v535
      %v552 = vadd.f32 %v519, %v536
      %v553 = vadd.f32 %v520, %v537
      %v554 = vadd.f32 %v521, %v538
      %v555 = vadd.f32 %v522, %v539
      %v556 = vadd.f32 %v523, %v540
      %v557 = vadd.f32 %v524, %v541
      %v558 = vadd.f32 %v525, %v542
      %v559 = vadd.f32 %v526, %v543
      %v560 = vadd.f32 %v527, %v544
      %v561 = vadd.f32 %v528, %v545
      %v562 = vadd.f32 %v529, %v546
      %v563 = vadd.f32 %v530, %v547
      %v564 = vadd.f32 %v531, %v548
      %v565 = vperm.slane %v382, 0
      %v566 = vmul.f32 %v352, %v565
      %v567 = vmul.f32 %v353, %v565
      %v568 = vmul.f32 %v355, %v565
      %v569 = vmul.f32 %v356, %v565
      %v570 = vmul.f32 %v358, %v565
      %v571 = vmul.f32 %v359, %v565
      %v572 = vmul.f32 %v361, %v565
      %v573 = vmul.f32 %v362, %v565
      %v574 = vmul.f32 %v364, %v565
      %v575 = vmul.f32 %v365, %v565
      %v576 = vmul.f32 %v367, %v565
      %v577 = vmul.f32 %v368, %v565
      %v578 = vmul.f32 %v370, %v565
      %v579 = vmul.f32 %v371, %v565
      %v580 = vmul.f32 %v373, %v565
      %v581 = vmul.f32 %v374, %v565
      %v582 = vadd.f32 %v549, %v566
      %v583 = vadd.f32 %v550, %v567
      %v584 = vadd.f32 %v551, %v568
      %v585 = vadd.f32 %v552, %v569
      %v586 = vadd.f32 %v553, %v570
      %v587 = vadd.f32 %v554, %v571
      %v588 = vadd.f32 %v555, %v572
      %v589 = vadd.f32 %v556, %v573
      %v590 = vadd.f32 %v557, %v574
      %v591 = vadd.f32 %v558, %v575
      %v592 = vadd.f32 %v559, %v576
      %v593 = vadd.f32 %v560, %v577
      %v594 = vadd.f32 %v561, %v578
      %v595 = vadd.f32 %v562, %v579
      %v596 = vadd.f32 %v563, %v580
      %v597 = vadd.f32 %v564, %v581
      %v598 = vperm.slane %v376, 1
      %v599 = vmul.f32 %v334, %v598
      %v600 = vmul.f32 %v335, %v598
      %v601 = vmul.f32 %v336, %v598
      %v602 = vmul.f32 %v337, %v598
      %v603 = vmul.f32 %v338, %v598
      %v604 = vmul.f32 %v339, %v598
      %v605 = vmul.f32 %v340, %v598
      %v606 = vmul.f32 %v341, %v598
      %v607 = vmul.f32 %v342, %v598
      %v608 = vmul.f32 %v343, %v598
      %v609 = vmul.f32 %v344, %v598
      %v610 = vmul.f32 %v345, %v598
      %v611 = vmul.f32 %v346, %v598
      %v612 = vmul.f32 %v347, %v598
      %v613 = vmul.f32 %v348, %v598
      %v614 = vmul.f32 %v349, %v598
      %v615 = vmul.f32 %v350, %v598
      %v616 = vmul.f32 %v351, %v598
      %v617 = vmul.f32 %v352, %v598
      %v618 = vmul.f32 %v353, %v598
      %v619 = vmul.f32 %v354, %v598
      %v620 = vmul.f32 %v355, %v598
      %v621 = vmul.f32 %v356, %v598
      %v622 = vmul.f32 %v357, %v598
      %v623 = vperm.slane %v377, 1
      %v624 = vmul.f32 %v337, %v623
      %v625 = vmul.f32 %v338, %v623
      %v626 = vmul.f32 %v339, %v623
      %v627 = vmul.f32 %v340, %v623
      %v628 = vmul.f32 %v341, %v623
      %v629 = vmul.f32 %v342, %v623
      %v630 = vmul.f32 %v343, %v623
      %v631 = vmul.f32 %v344, %v623
      %v632 = vmul.f32 %v345, %v623
      %v633 = vmul.f32 %v346, %v623
      %v634 = vmul.f32 %v347, %v623
      %v635 = vmul.f32 %v348, %v623
      %v636 = vmul.f32 %v349, %v623
      %v637 = vmul.f32 %v350, %v623
      %v638 = vmul.f32 %v351, %v623
      %v639 = vmul.f32 %v352, %v623
      %v640 = vmul.f32 %v353, %v623
      %v641 = vmul.f32 %v354, %v623
      %v642 = vmul.f32 %v355, %v623
      %v643 = vmul.f32 %v356, %v623
      %v644 = vmul.f32 %v357, %v623
      %v645 = vmul.f32 %v358, %v623
      %v646 = vmul.f32 %v359, %v623
      %v647 = vmul.f32 %v360, %v623
      %v648 = vadd.f32 %v599, %v624
      %v649 = vadd.f32 %v600, %v625
      %v650 = vadd.f32 %v601, %v626
      %v651 = vadd.f32 %v602, %v627
      %v652 = vadd.f32 %v603, %v628
      %v653 = vadd.f32 %v604, %v629
      %v654 = vadd.f32 %v605, %v630
      %v655 = vadd.f32 %v606, %v631
      %v656 = vadd.f32 %v607, %v632
      %v657 = vadd.f32 %v608, %v633
      %v658 = vadd.f32 %v609, %v634
      %v659 = vadd.f32 %v610, %v635
      %v660 = vadd.f32 %v611, %v636
      %v661 = vadd.f32 %v612, %v637
      %v662 = vadd.f32 %v613, %v638
      %v663 = vadd.f32 %v614, %v639
      %v664 = vadd.f32 %v615, %v640
      %v665 = vadd.f32 %v616, %v641
      %v666 = vadd.f32 %v617, %v642
      %v667 = vadd.f32 %v618, %v643
      %v668 = vadd.f32 %v619, %v644
      %v669 = vadd.f32 %v620, %v645
      %v670 = vadd.f32 %v621, %v646
      %v671 = vadd.f32 %v622, %v647
      %v672 = vperm.slane %v378, 1
      %v673 = vmul.f32 %v340, %v672
      %v674 = vmul.f32 %v341, %v672
      %v675 = vmul.f32 %v342, %v672
      %v676 = vmul.f32 %v343, %v672
      %v677 = vmul.f32 %v344, %v672
      %v678 = vmul.f32 %v345, %v672
      %v679 = vmul.f32 %v346, %v672
      %v680 = vmul.f32 %v347, %v672
      %v681 = vmul.f32 %v348, %v672
      %v682 = vmul.f32 %v349, %v672
      %v683 = vmul.f32 %v350, %v672
      %v684 = vmul.f32 %v351, %v672
      %v685 = vmul.f32 %v352, %v672
      %v686 = vmul.f32 %v353, %v672
      %v687 = vmul.f32 %v354, %v672
      %v688 = vmul.f32 %v355, %v672
      %v689 = vmul.f32 %v356, %v672
      %v690 = vmul.f32 %v357, %v672
      %v691 = vmul.f32 %v358, %v672
      %v692 = vmul.f32 %v359, %v672
      %v693 = vmul.f32 %v360, %v672
      %v694 = vmul.f32 %v361, %v672
      %v695 = vmul.f32 %v362, %v672
      %v696 = vmul.f32 %v363, %v672
      %v697 = vadd.f32 %v648, %v673
      %v698 = vadd.f32 %v649, %v674
      %v699 = vadd.f32 %v650, %v675
      %v700 = vadd.f32 %v651, %v676
      %v701 = vadd.f32 %v652, %v677
      %v702 = vadd.f32 %v653, %v678
      %v703 = vadd.f32 %v654, %v679
      %v704 = vadd.f32 %v655, %v680
      %v705 = vadd.f32 %v656, %v681
      %v706 = vadd.f32 %v657, %v682
      %v707 = vadd.f32 %v658, %v683
      %v708 = vadd.f32 %v659, %v684
      %v709 = vadd.f32 %v660, %v685
      %v710 = vadd.f32 %v661, %v686
      %v711 = vadd.f32 %v662, %v687
      %v712 = vadd.f32 %v663, %v688
      %v713 = vadd.f32 %v664, %v689
      %v714 = vadd.f32 %v665, %v690
      %v715 = vadd.f32 %v666, %v691
      %v716 = vadd.f32 %v667, %v692
      %v717 = vadd.f32 %v668, %v693
      %v718 = vadd.f32 %v669, %v694
      %v719 = vadd.f32 %v670, %v695
      %v720 = vadd.f32 %v671, %v696
      %v721 = vperm.slane %v379, 1
      %v722 = vmul.f32 %v343, %v721
      %v723 = vmul.f32 %v344, %v721
      %v724 = vmul.f32 %v345, %v721
      %v725 = vmul.f32 %v346, %v721
      %v726 = vmul.f32 %v347, %v721
      %v727 = vmul.f32 %v348, %v721
      %v728 = vmul.f32 %v349, %v721
      %v729 = vmul.f32 %v350, %v721
      %v730 = vmul.f32 %v351, %v721
      %v731 = vmul.f32 %v352, %v721
      %v732 = vmul.f32 %v353, %v721
      %v733 = vmul.f32 %v354, %v721
      %v734 = vmul.f32 %v355, %v721
      %v735 = vmul.f32 %v356, %v721
      %v736 = vmul.f32 %v357, %v721
      %v737 = vmul.f32 %v358, %v721
      %v738 = vmul.f32 %v359, %v721
      %v739 = vmul.f32 %v360, %v721
      %v740 = vmul.f32 %v361, %v721
      %v741 = vmul.f32 %v362, %v721
      %v742 = vmul.f32 %v363, %v721
      %v743 = vmul.f32 %v364, %v721
      %v744 = vmul.f32 %v365, %v721
      %v745 = vmul.f32 %v366, %v721
      %v746 = vadd.f32 %v697, %v722
      %v747 = vadd.f32 %v698, %v723
      %v748 = vadd.f32 %v699, %v724
      %v749 = vadd.f32 %v700, %v725
      %v750 = vadd.f32 %v701, %v726
      %v751 = vadd.f32 %v702, %v727
      %v752 = vadd.f32 %v703, %v728
      %v753 = vadd.f32 %v704, %v729
      %v754 = vadd.f32 %v705, %v730
      %v755 = vadd.f32 %v706, %v731
      %v756 = vadd.f32 %v707, %v732
      %v757 = vadd.f32 %v708, %v733
      %v758 = vadd.f32 %v709, %v734
      %v759 = vadd.f32 %v710, %v735
      %v760 = vadd.f32 %v711, %v736
      %v761 = vadd.f32 %v712, %v737
      %v762 = vadd.f32 %v713, %v738
      %v763 = vadd.f32 %v714, %v739
      %v764 = vadd.f32 %v715, %v740
      %v765 = vadd.f32 %v716, %v741
      %v766 = vadd.f32 %v717, %v742
      %v767 = vadd.f32 %v718, %v743
      %v768 = vadd.f32 %v719, %v744
      %v769 = vadd.f32 %v720, %v745
      %v770 = vperm.slane %v380, 1
      %v771 = vmul.f32 %v346, %v770
      %v772 = vmul.f32 %v347, %v770
      %v773 = vmul.f32 %v348, %v770
      %v774 = vmul.f32 %v349, %v770
      %v775 = vmul.f32 %v350, %v770
      %v776 = vmul.f32 %v351, %v770
      %v777 = vmul.f32 %v352, %v770
      %v778 = vmul.f32 %v353, %v770
      %v779 = vmul.f32 %v354, %v770
      %v780 = vmul.f32 %v355, %v770
      %v781 = vmul.f32 %v356, %v770
      %v782 = vmul.f32 %v357, %v770
      %v783 = vmul.f32 %v358, %v770
      %v784 = vmul.f32 %v359, %v770
      %v785 = vmul.f32 %v360, %v770
      %v786 = vmul.f32 %v361, %v770
      %v787 = vmul.f32 %v362, %v770
      %v788 = vmul.f32 %v363, %v770
      %v789 = vmul.f32 %v364, %v770
      %v790 = vmul.f32 %v365, %v770
      %v791 = vmul.f32 %v366, %v770
      %v792 = vmul.f32 %v367, %v770
      %v793 = vmul.f32 %v368, %v770
      %v794 = vmul.f32 %v369, %v770
      %v795 = vadd.f32 %v746, %v771
      %v796 = vadd.f32 %v747, %v772
      %v797 = vadd.f32 %v748, %v773
      %v798 = vadd.f32 %v749, %v774
      %v799 = vadd.f32 %v750, %v775
      %v800 = vadd.f32 %v751, %v776
      %v801 = vadd.f32 %v752, %v777
      %v802 = vadd.f32 %v753, %v778
      %v803 = vadd.f32 %v754, %v779
      %v804 = vadd.f32 %v755, %v780
      %v805 = vadd.f32 %v756, %v781
      %v806 = vadd.f32 %v757, %v782
      %v807 = vadd.f32 %v758, %v783
      %v808 = vadd.f32 %v759, %v784
      %v809 = vadd.f32 %v760, %v785
      %v810 = vadd.f32 %v761, %v786
      %v811 = vadd.f32 %v762, %v787
      %v812 = vadd.f32 %v763, %v788
      %v813 = vadd.f32 %v764, %v789
      %v814 = vadd.f32 %v765, %v790
      %v815 = vadd.f32 %v766, %v791
      %v816 = vadd.f32 %v767, %v792
      %v817 = vadd.f32 %v768, %v793
      %v818 = vadd.f32 %v769, %v794
      %v819 = vperm.slane %v381, 1
      %v820 = vmul.f32 %v349, %v819
      %v821 = vmul.f32 %v350, %v819
      %v822 = vmul.f32 %v351, %v819
      %v823 = vmul.f32 %v352, %v819
      %v824 = vmul.f32 %v353, %v819
      %v825 = vmul.f32 %v354, %v819
      %v826 = vmul.f32 %v355, %v819
      %v827 = vmul.f32 %v356, %v819
      %v828 = vmul.f32 %v357, %v819
      %v829 = vmul.f32 %v358, %v819
      %v830 = vmul.f32 %v359, %v819
      %v831 = vmul.f32 %v360, %v819
      %v832 = vmul.f32 %v361, %v819
      %v833 = vmul.f32 %v362, %v819
      %v834 = vmul.f32 %v363, %v819
      %v835 = vmul.f32 %v364, %v819
      %v836 = vmul.f32 %v365, %v819
      %v837 = vmul.f32 %v366, %v819
      %v838 = vmul.f32 %v367, %v819
      %v839 = vmul.f32 %v368, %v819
      %v840 = vmul.f32 %v369, %v819
      %v841 = vmul.f32 %v370, %v819
      %v842 = vmul.f32 %v371, %v819
      %v843 = vmul.f32 %v372, %v819
      %v844 = vadd.f32 %v795, %v820
      %v845 = vadd.f32 %v796, %v821
      %v846 = vadd.f32 %v797, %v822
      %v847 = vadd.f32 %v798, %v823
      %v848 = vadd.f32 %v799, %v824
      %v849 = vadd.f32 %v800, %v825
      %v850 = vadd.f32 %v801, %v826
      %v851 = vadd.f32 %v802, %v827
      %v852 = vadd.f32 %v803, %v828
      %v853 = vadd.f32 %v804, %v829
      %v854 = vadd.f32 %v805, %v830
      %v855 = vadd.f32 %v806, %v831
      %v856 = vadd.f32 %v807, %v832
      %v857 = vadd.f32 %v808, %v833
      %v858 = vadd.f32 %v809, %v834
      %v859 = vadd.f32 %v810, %v835
      %v860 = vadd.f32 %v811, %v836
      %v861 = vadd.f32 %v812, %v837
      %v862 = vadd.f32 %v813, %v838
      %v863 = vadd.f32 %v814, %v839
      %v864 = vadd.f32 %v815, %v840
      %v865 = vadd.f32 %v816, %v841
      %v866 = vadd.f32 %v817, %v842
      %v867 = vadd.f32 %v818, %v843
      %v868 = vperm.slane %v382, 1
      %v869 = vmul.f32 %v352, %v868
      %v870 = vmul.f32 %v353, %v868
      %v871 = vmul.f32 %v354, %v868
      %v872 = vmul.f32 %v355, %v868
      %v873 = vmul.f32 %v356, %v868
      %v874 = vmul.f32 %v357, %v868
      %v875 = vmul.f32 %v358, %v868
      %v876 = vmul.f32 %v359, %v868
      %v877 = vmul.f32 %v360, %v868
      %v878 = vmul.f32 %v361, %v868
      %v879 = vmul.f32 %v362, %v868
      %v880 = vmul.f32 %v363, %v868
      %v881 = vmul.f32 %v364, %v868
      %v882 = vmul.f32 %v365, %v868
      %v883 = vmul.f32 %v366, %v868
      %v884 = vmul.f32 %v367, %v868
      %v885 = vmul.f32 %v368, %v868
      %v886 = vmul.f32 %v369, %v868
      %v887 = vmul.f32 %v370, %v868
      %v888 = vmul.f32 %v371, %v868
      %v889 = vmul.f32 %v372, %v868
      %v890 = vmul.f32 %v373, %v868
      %v891 = vmul.f32 %v374, %v868
      %v892 = vmul.f32 %v375, %v868
      %v893 = vadd.f32 %v844, %v869
      %v894 = vadd.f32 %v845, %v870
      %v895 = vadd.f32 %v846, %v871
      %v896 = vadd.f32 %v847, %v872
      %v897 = vadd.f32 %v848, %v873
      %v898 = vadd.f32 %v849, %v874
      %v899 = vadd.f32 %v850, %v875
      %v900 = vadd.f32 %v851, %v876
      %v901 = vadd.f32 %v852, %v877
      %v902 = vadd.f32 %v853, %v878
      %v903 = vadd.f32 %v854, %v879
      %v904 = vadd.f32 %v855, %v880
      %v905 = vadd.f32 %v856, %v881
      %v906 = vadd.f32 %v857, %v882
      %v907 = vadd.f32 %v858, %v883
      %v908 = vadd.f32 %v859, %v884
      %v909 = vadd.f32 %v860, %v885
      %v910 = vadd.f32 %v861, %v886
      %v911 = vadd.f32 %v862, %v887
      %v912 = vadd.f32 %v863, %v888
      %v913 = vadd.f32 %v864, %v889
      %v914 = vadd.f32 %v865, %v890
      %v915 = vadd.f32 %v866, %v891
      %v916 = vadd.f32 %v867, %v892
      %vm941 = vcmask 1046528
      %v942 = vrot.slane %v893, 1
      %v943 = vrot.slane %v894, 1
      %v944 = vsel %vm941, %v942, %v943
      %v945 = vrot.slane %v895, 1
      %v946 = vsel %vm941, %v943, %v945
      %v947 = vrot.slane %v896, 1
      %v948 = vrot.slane %v897, 1
      %v949 = vsel %vm941, %v947, %v948
      %v950 = vrot.slane %v898, 1
      %v951 = vsel %vm941, %v948, %v950
      %v952 = vrot.slane %v899, 1
      %v953 = vrot.slane %v900, 1
      %v954 = vsel %vm941, %v952, %v953
      %v955 = vrot.slane %v901, 1
      %v956 = vsel %vm941, %v953, %v955
      %v957 = vrot.slane %v902, 1
      %v958 = vrot.slane %v903, 1
      %v959 = vsel %vm941, %v957, %v958
      %v960 = vrot.slane %v904, 1
      %v961 = vsel %vm941, %v958, %v960
      %v962 = vrot.slane %v905, 1
      %v963 = vrot.slane %v906, 1
      %v964 = vsel %vm941, %v962, %v963
      %v965 = vrot.slane %v907, 1
      %v966 = vsel %vm941, %v963, %v965
      %v967 = vrot.slane %v908, 1
      %v968 = vrot.slane %v909, 1
      %v969 = vsel %vm941, %v967, %v968
      %v970 = vrot.slane %v910, 1
      %v971 = vsel %vm941, %v968, %v970
      %v972 = vrot.slane %v911, 1
      %v973 = vrot.slane %v912, 1
      %v974 = vsel %vm941, %v972, %v973
      %v975 = vrot.slane %v913, 1
      %v976 = vsel %vm941, %v973, %v975
      %v977 = vrot.slane %v914, 1
      %v978 = vrot.slane %v915, 1
      %v979 = vsel %vm941, %v977, %v978
      %v980 = vrot.slane %v916, 1
      %v981 = vsel %vm941, %v978, %v980
      %v998 = vadd.f32 %v582, %v944
      %v999 = vadd.f32 %v583, %v946
      %v1000 = vadd.f32 %v584, %v949
      %v1001 = vadd.f32 %v585, %v951
      %v1002 = vadd.f32 %v586, %v954
      %v1003 = vadd.f32 %v587, %v956
      %v1004 = vadd.f32 %v588, %v959
      %v1005 = vadd.f32 %v589, %v961
      %v1006 = vadd.f32 %v590, %v964
      %v1007 = vadd.f32 %v591, %v966
      %v1008 = vadd.f32 %v592, %v969
      %v1009 = vadd.f32 %v593, %v971
      %v1010 = vadd.f32 %v594, %v974
      %v1011 = vadd.f32 %v595, %v976
      %v1012 = vadd.f32 %v596, %v979
      %v1013 = vadd.f32 %v597, %v981
      %v1014 = vperm.slane %v376, 2
      %v1015 = vmul.f32 %v334, %v1014
      %v1016 = vmul.f32 %v335, %v1014
      %v1017 = vmul.f32 %v336, %v1014
      %v1018 = vmul.f32 %v337, %v1014
      %v1019 = vmul.f32 %v338, %v1014
      %v1020 = vmul.f32 %v339, %v1014
      %v1021 = vmul.f32 %v340, %v1014
      %v1022 = vmul.f32 %v341, %v1014
      %v1023 = vmul.f32 %v342, %v1014
      %v1024 = vmul.f32 %v343, %v1014
      %v1025 = vmul.f32 %v344, %v1014
      %v1026 = vmul.f32 %v345, %v1014
      %v1027 = vmul.f32 %v346, %v1014
      %v1028 = vmul.f32 %v347, %v1014
      %v1029 = vmul.f32 %v348, %v1014
      %v1030 = vmul.f32 %v349, %v1014
      %v1031 = vmul.f32 %v350, %v1014
      %v1032 = vmul.f32 %v351, %v1014
      %v1033 = vmul.f32 %v352, %v1014
      %v1034 = vmul.f32 %v353, %v1014
      %v1035 = vmul.f32 %v354, %v1014
      %v1036 = vmul.f32 %v355, %v1014
      %v1037 = vmul.f32 %v356, %v1014
      %v1038 = vmul.f32 %v357, %v1014
      %v1039 = vperm.slane %v377, 2
      %v1040 = vmul.f32 %v337, %v1039
      %v1041 = vmul.f32 %v338, %v1039
      %v1042 = vmul.f32 %v339, %v1039
      %v1043 = vmul.f32 %v340, %v1039
      %v1044 = vmul.f32 %v341, %v1039
      %v1045 = vmul.f32 %v342, %v1039
      %v1046 = vmul.f32 %v343, %v1039
      %v1047 = vmul.f32 %v344, %v1039
      %v1048 = vmul.f32 %v345, %v1039
      %v1049 = vmul.f32 %v346, %v1039
      %v1050 = vmul.f32 %v347, %v1039
      %v1051 = vmul.f32 %v348, %v1039
      %v1052 = vmul.f32 %v349, %v1039
      %v1053 = vmul.f32 %v350, %v1039
      %v1054 = vmul.f32 %v351, %v1039
      %v1055 = vmul.f32 %v352, %v1039
      %v1056 = vmul.f32 %v353, %v1039
      %v1057 = vmul.f32 %v354, %v1039
      %v1058 = vmul.f32 %v355, %v1039
      %v1059 = vmul.f32 %v356, %v1039
      %v1060 = vmul.f32 %v357, %v1039
      %v1061 = vmul.f32 %v358, %v1039
      %v1062 = vmul.f32 %v359, %v1039
      %v1063 = vmul.f32 %v360, %v1039
      %v1064 = vadd.f32 %v1015, %v1040
      %v1065 = vadd.f32 %v1016, %v1041
      %v1066 = vadd.f32 %v1017, %v1042
      %v1067 = vadd.f32 %v1018, %v1043
      %v1068 = vadd.f32 %v1019, %v1044
      %v1069 = vadd.f32 %v1020, %v1045
      %v1070 = vadd.f32 %v1021, %v1046
      %v1071 = vadd.f32 %v1022, %v1047
      %v1072 = vadd.f32 %v1023, %v1048
      %v1073 = vadd.f32 %v1024, %v1049
      %v1074 = vadd.f32 %v1025, %v1050
      %v1075 = vadd.f32 %v1026, %v1051
      %v1076 = vadd.f32 %v1027, %v1052
      %v1077 = vadd.f32 %v1028, %v1053
      %v1078 = vadd.f32 %v1029, %v1054
      %v1079 = vadd.f32 %v1030, %v1055
      %v1080 = vadd.f32 %v1031, %v1056
      %v1081 = vadd.f32 %v1032, %v1057
      %v1082 = vadd.f32 %v1033, %v1058
      %v1083 = vadd.f32 %v1034, %v1059
      %v1084 = vadd.f32 %v1035, %v1060
      %v1085 = vadd.f32 %v1036, %v1061
      %v1086 = vadd.f32 %v1037, %v1062
      %v1087 = vadd.f32 %v1038, %v1063
      %v1088 = vperm.slane %v378, 2
      %v1089 = vmul.f32 %v340, %v1088
      %v1090 = vmul.f32 %v341, %v1088
      %v1091 = vmul.f32 %v342, %v1088
      %v1092 = vmul.f32 %v343, %v1088
      %v1093 = vmul.f32 %v344, %v1088
      %v1094 = vmul.f32 %v345, %v1088
      %v1095 = vmul.f32 %v346, %v1088
      %v1096 = vmul.f32 %v347, %v1088
      %v1097 = vmul.f32 %v348, %v1088
      %v1098 = vmul.f32 %v349, %v1088
      %v1099 = vmul.f32 %v350, %v1088
      %v1100 = vmul.f32 %v351, %v1088
      %v1101 = vmul.f32 %v352, %v1088
      %v1102 = vmul.f32 %v353, %v1088
      %v1103 = vmul.f32 %v354, %v1088
      %v1104 = vmul.f32 %v355, %v1088
      %v1105 = vmul.f32 %v356, %v1088
      %v1106 = vmul.f32 %v357, %v1088
      %v1107 = vmul.f32 %v358, %v1088
      %v1108 = vmul.f32 %v359, %v1088
      %v1109 = vmul.f32 %v360, %v1088
      %v1110 = vmul.f32 %v361, %v1088
      %v1111 = vmul.f32 %v362, %v1088
      %v1112 = vmul.f32 %v363, %v1088
      %v1113 = vadd.f32 %v1064, %v1089
      %v1114 = vadd.f32 %v1065, %v1090
      %v1115 = vadd.f32 %v1066, %v1091
      %v1116 = vadd.f32 %v1067, %v1092
      %v1117 = vadd.f32 %v1068, %v1093
      %v1118 = vadd.f32 %v1069, %v1094
      %v1119 = vadd.f32 %v1070, %v1095
      %v1120 = vadd.f32 %v1071, %v1096
      %v1121 = vadd.f32 %v1072, %v1097
      %v1122 = vadd.f32 %v1073, %v1098
      %v1123 = vadd.f32 %v1074, %v1099
      %v1124 = vadd.f32 %v1075, %v1100
      %v1125 = vadd.f32 %v1076, %v1101
      %v1126 = vadd.f32 %v1077, %v1102
      %v1127 = vadd.f32 %v1078, %v1103
      %v1128 = vadd.f32 %v1079, %v1104
      %v1129 = vadd.f32 %v1080, %v1105
      %v1130 = vadd.f32 %v1081, %v1106
      %v1131 = vadd.f32 %v1082, %v1107
      %v1132 = vadd.f32 %v1083, %v1108
      %v1133 = vadd.f32 %v1084, %v1109
      %v1134 = vadd.f32 %v1085, %v1110
      %v1135 = vadd.f32 %v1086, %v1111
      %v1136 = vadd.f32 %v1087, %v1112
      %v1137 = vperm.slane %v379, 2
      %v1138 = vmul.f32 %v343, %v1137
      %v1139 = vmul.f32 %v344, %v1137
      %v1140 = vmul.f32 %v345, %v1137
      %v1141 = vmul.f32 %v346, %v1137
      %v1142 = vmul.f32 %v347, %v1137
      %v1143 = vmul.f32 %v348, %v1137
      %v1144 = vmul.f32 %v349, %v1137
      %v1145 = vmul.f32 %v350, %v1137
      %v1146 = vmul.f32 %v351, %v1137
      %v1147 = vmul.f32 %v352, %v1137
      %v1148 = vmul.f32 %v353, %v1137
      %v1149 = vmul.f32 %v354, %v1137
      %v1150 = vmul.f32 %v355, %v1137
      %v1151 = vmul.f32 %v356, %v1137
      %v1152 = vmul.f32 %v357, %v1137
      %v1153 = vmul.f32 %v358, %v1137
      %v1154 = vmul.f32 %v359, %v1137
      %v1155 = vmul.f32 %v360, %v1137
      %v1156 = vmul.f32 %v361, %v1137
      %v1157 = vmul.f32 %v362, %v1137
      %v1158 = vmul.f32 %v363, %v1137
      %v1159 = vmul.f32 %v364, %v1137
      %v1160 = vmul.f32 %v365, %v1137
      %v1161 = vmul.f32 %v366, %v1137
      %v1162 = vadd.f32 %v1113, %v1138
      %v1163 = vadd.f32 %v1114, %v1139
      %v1164 = vadd.f32 %v1115, %v1140
      %v1165 = vadd.f32 %v1116, %v1141
      %v1166 = vadd.f32 %v1117, %v1142
      %v1167 = vadd.f32 %v1118, %v1143
      %v1168 = vadd.f32 %v1119, %v1144
      %v1169 = vadd.f32 %v1120, %v1145
      %v1170 = vadd.f32 %v1121, %v1146
      %v1171 = vadd.f32 %v1122, %v1147
      %v1172 = vadd.f32 %v1123, %v1148
      %v1173 = vadd.f32 %v1124, %v1149
      %v1174 = vadd.f32 %v1125, %v1150
      %v1175 = vadd.f32 %v1126, %v1151
      %v1176 = vadd.f32 %v1127, %v1152
      %v1177 = vadd.f32 %v1128, %v1153
      %v1178 = vadd.f32 %v1129, %v1154
      %v1179 = vadd.f32 %v1130, %v1155
      %v1180 = vadd.f32 %v1131, %v1156
      %v1181 = vadd.f32 %v1132, %v1157
      %v1182 = vadd.f32 %v1133, %v1158
      %v1183 = vadd.f32 %v1134, %v1159
      %v1184 = vadd.f32 %v1135, %v1160
      %v1185 = vadd.f32 %v1136, %v1161
      %v1186 = vperm.slane %v380, 2
      %v1187 = vmul.f32 %v346, %v1186
      %v1188 = vmul.f32 %v347, %v1186
      %v1189 = vmul.f32 %v348, %v1186
      %v1190 = vmul.f32 %v349, %v1186
      %v1191 = vmul.f32 %v350, %v1186
      %v1192 = vmul.f32 %v351, %v1186
      %v1193 = vmul.f32 %v352, %v1186
      %v1194 = vmul.f32 %v353, %v1186
      %v1195 = vmul.f32 %v354, %v1186
      %v1196 = vmul.f32 %v355, %v1186
      %v1197 = vmul.f32 %v356, %v1186
      %v1198 = vmul.f32 %v357, %v1186
      %v1199 = vmul.f32 %v358, %v1186
      %v1200 = vmul.f32 %v359, %v1186
      %v1201 = vmul.f32 %v360, %v1186
      %v1202 = vmul.f32 %v361, %v1186
      %v1203 = vmul.f32 %v362, %v1186
      %v1204 = vmul.f32 %v363, %v1186
      %v1205 = vmul.f32 %v364, %v1186
      %v1206 = vmul.f32 %v365, %v1186
      %v1207 = vmul.f32 %v366, %v1186
      %v1208 = vmul.f32 %v367, %v1186
      %v1209 = vmul.f32 %v368, %v1186
      %v1210 = vmul.f32 %v369, %v1186
      %v1211 = vadd.f32 %v1162, %v1187
      %v1212 = vadd.f32 %v1163, %v1188
      %v1213 = vadd.f32 %v1164, %v1189
      %v1214 = vadd.f32 %v1165, %v1190
      %v1215 = vadd.f32 %v1166, %v1191
      %v1216 = vadd.f32 %v1167, %v1192
      %v1217 = vadd.f32 %v1168, %v1193
      %v1218 = vadd.f32 %v1169, %v1194
      %v1219 = vadd.f32 %v1170, %v1195
      %v1220 = vadd.f32 %v1171, %v1196
      %v1221 = vadd.f32 %v1172, %v1197
      %v1222 = vadd.f32 %v1173, %v1198
      %v1223 = vadd.f32 %v1174, %v1199
      %v1224 = vadd.f32 %v1175, %v1200
      %v1225 = vadd.f32 %v1176, %v1201
      %v1226 = vadd.f32 %v1177, %v1202
      %v1227 = vadd.f32 %v1178, %v1203
      %v1228 = vadd.f32 %v1179, %v1204
      %v1229 = vadd.f32 %v1180, %v1205
      %v1230 = vadd.f32 %v1181, %v1206
      %v1231 = vadd.f32 %v1182, %v1207
      %v1232 = vadd.f32 %v1183, %v1208
      %v1233 = vadd.f32 %v1184, %v1209
      %v1234 = vadd.f32 %v1185, %v1210
      %v1235 = vperm.slane %v381, 2
      %v1236 = vmul.f32 %v349, %v1235
      %v1237 = vmul.f32 %v350, %v1235
      %v1238 = vmul.f32 %v351, %v1235
      %v1239 = vmul.f32 %v352, %v1235
      %v1240 = vmul.f32 %v353, %v1235
      %v1241 = vmul.f32 %v354, %v1235
      %v1242 = vmul.f32 %v355, %v1235
      %v1243 = vmul.f32 %v356, %v1235
      %v1244 = vmul.f32 %v357, %v1235
      %v1245 = vmul.f32 %v358, %v1235
      %v1246 = vmul.f32 %v359, %v1235
      %v1247 = vmul.f32 %v360, %v1235
      %v1248 = vmul.f32 %v361, %v1235
      %v1249 = vmul.f32 %v362, %v1235
      %v1250 = vmul.f32 %v363, %v1235
      %v1251 = vmul.f32 %v364, %v1235
      %v1252 = vmul.f32 %v365, %v1235
      %v1253 = vmul.f32 %v366, %v1235
      %v1254 = vmul.f32 %v367, %v1235
      %v1255 = vmul.f32 %v368, %v1235
      %v1256 = vmul.f32 %v369, %v1235
      %v1257 = vmul.f32 %v370, %v1235
      %v1258 = vmul.f32 %v371, %v1235
      %v1259 = vmul.f32 %v372, %v1235
      %v1260 = vadd.f32 %v1211, %v1236
      %v1261 = vadd.f32 %v1212, %v1237
      %v1262 = vadd.f32 %v1213, %v1238
      %v1263 = vadd.f32 %v1214, %v1239
      %v1264 = vadd.f32 %v1215, %v1240
      %v1265 = vadd.f32 %v1216, %v1241
      %v1266 = vadd.f32 %v1217, %v1242
      %v1267 = vadd.f32 %v1218, %v1243
      %v1268 = vadd.f32 %v1219, %v1244
      %v1269 = vadd.f32 %v1220, %v1245
      %v1270 = vadd.f32 %v1221, %v1246
      %v1271 = vadd.f32 %v1222, %v1247
      %v1272 = vadd.f32 %v1223, %v1248
      %v1273 = vadd.f32 %v1224, %v1249
      %v1274 = vadd.f32 %v1225, %v1250
      %v1275 = vadd.f32 %v1226, %v1251
      %v1276 = vadd.f32 %v1227, %v1252
      %v1277 = vadd.f32 %v1228, %v1253
      %v1278 = vadd.f32 %v1229, %v1254
      %v1279 = vadd.f32 %v1230, %v1255
      %v1280 = vadd.f32 %v1231, %v1256
      %v1281 = vadd.f32 %v1232, %v1257
      %v1282 = vadd.f32 %v1233, %v1258
      %v1283 = vadd.f32 %v1234, %v1259
      %v1284 = vperm.slane %v382, 2
      %v1285 = vmul.f32 %v352, %v1284
      %v1286 = vmul.f32 %v353, %v1284
      %v1287 = vmul.f32 %v354, %v1284
      %v1288 = vmul.f32 %v355, %v1284
      %v1289 = vmul.f32 %v356, %v1284
      %v1290 = vmul.f32 %v357, %v1284
      %v1291 = vmul.f32 %v358, %v1284
      %v1292 = vmul.f32 %v359, %v1284
      %v1293 = vmul.f32 %v360, %v1284
      %v1294 = vmul.f32 %v361, %v1284
      %v1295 = vmul.f32 %v362, %v1284
      %v1296 = vmul.f32 %v363, %v1284
      %v1297 = vmul.f32 %v364, %v1284
      %v1298 = vmul.f32 %v365, %v1284
      %v1299 = vmul.f32 %v366, %v1284
      %v1300 = vmul.f32 %v367, %v1284
      %v1301 = vmul.f32 %v368, %v1284
      %v1302 = vmul.f32 %v369, %v1284
      %v1303 = vmul.f32 %v370, %v1284
      %v1304 = vmul.f32 %v371, %v1284
      %v1305 = vmul.f32 %v372, %v1284
      %v1306 = vmul.f32 %v373, %v1284
      %v1307 = vmul.f32 %v374, %v1284
      %v1308 = vmul.f32 %v375, %v1284
      %v1309 = vadd.f32 %v1260, %v1285
      %v1310 = vadd.f32 %v1261, %v1286
      %v1311 = vadd.f32 %v1262, %v1287
      %v1312 = vadd.f32 %v1263, %v1288
      %v1313 = vadd.f32 %v1264, %v1289
      %v1314 = vadd.f32 %v1265, %v1290
      %v1315 = vadd.f32 %v1266, %v1291
      %v1316 = vadd.f32 %v1267, %v1292
      %v1317 = vadd.f32 %v1268, %v1293
      %v1318 = vadd.f32 %v1269, %v1294
      %v1319 = vadd.f32 %v1270, %v1295
      %v1320 = vadd.f32 %v1271, %v1296
      %v1321 = vadd.f32 %v1272, %v1297
      %v1322 = vadd.f32 %v1273, %v1298
      %v1323 = vadd.f32 %v1274, %v1299
      %v1324 = vadd.f32 %v1275, %v1300
      %v1325 = vadd.f32 %v1276, %v1301
      %v1326 = vadd.f32 %v1277, %v1302
      %v1327 = vadd.f32 %v1278, %v1303
      %v1328 = vadd.f32 %v1279, %v1304
      %v1329 = vadd.f32 %v1280, %v1305
      %v1330 = vadd.f32 %v1281, %v1306
      %v1331 = vadd.f32 %v1282, %v1307
      %v1332 = vadd.f32 %v1283, %v1308
      %vm1357 = vcmask 1045504
      %v1358 = vrot.slane %v1309, 2
      %v1359 = vrot.slane %v1310, 2
      %v1360 = vsel %vm1357, %v1358, %v1359
      %v1361 = vrot.slane %v1311, 2
      %v1362 = vsel %vm1357, %v1359, %v1361
      %v1363 = vrot.slane %v1312, 2
      %v1364 = vrot.slane %v1313, 2
      %v1365 = vsel %vm1357, %v1363, %v1364
      %v1366 = vrot.slane %v1314, 2
      %v1367 = vsel %vm1357, %v1364, %v1366
      %v1368 = vrot.slane %v1315, 2
      %v1369 = vrot.slane %v1316, 2
      %v1370 = vsel %vm1357, %v1368, %v1369
      %v1371 = vrot.slane %v1317, 2
      %v1372 = vsel %vm1357, %v1369, %v1371
      %v1373 = vrot.slane %v1318, 2
      %v1374 = vrot.slane %v1319, 2
      %v1375 = vsel %vm1357, %v1373, %v1374
      %v1376 = vrot.slane %v1320, 2
      %v1377 = vsel %vm1357, %v1374, %v1376
      %v1378 = vrot.slane %v1321, 2
      %v1379 = vrot.slane %v1322, 2
      %v1380 = vsel %vm1357, %v1378, %v1379
      %v1381 = vrot.slane %v1323, 2
      %v1382 = vsel %vm1357, %v1379, %v1381
      %v1383 = vrot.slane %v1324, 2
      %v1384 = vrot.slane %v1325, 2
      %v1385 = vsel %vm1357, %v1383, %v1384
      %v1386 = vrot.slane %v1326, 2
      %v1387 = vsel %vm1357, %v1384, %v1386
      %v1388 = vrot.slane %v1327, 2
      %v1389 = vrot.slane %v1328, 2
      %v1390 = vsel %vm1357, %v1388, %v1389
      %v1391 = vrot.slane %v1329, 2
      %v1392 = vsel %vm1357, %v1389, %v1391
      %v1393 = vrot.slane %v1330, 2
      %v1394 = vrot.slane %v1331, 2
      %v1395 = vsel %vm1357, %v1393, %v1394
      %v1396 = vrot.slane %v1332, 2
      %v1397 = vsel %vm1357, %v1394, %v1396
      %v1414 = vadd.f32 %v998, %v1360
      %v1415 = vadd.f32 %v999, %v1362
      %v1416 = vadd.f32 %v1000, %v1365
      %v1417 = vadd.f32 %v1001, %v1367
      %v1418 = vadd.f32 %v1002, %v1370
      %v1419 = vadd.f32 %v1003, %v1372
      %v1420 = vadd.f32 %v1004, %v1375
      %v1421 = vadd.f32 %v1005, %v1377
      %v1422 = vadd.f32 %v1006, %v1380
      %v1423 = vadd.f32 %v1007, %v1382
      %v1424 = vadd.f32 %v1008, %v1385
      %v1425 = vadd.f32 %v1009, %v1387
      %v1426 = vadd.f32 %v1010, %v1390
      %v1427 = vadd.f32 %v1011, %v1392
      %v1428 = vadd.f32 %v1012, %v1395
      %v1429 = vadd.f32 %v1013, %v1397
      %v1430 = vperm.slane %v376, 3
      %v1431 = vmul.f32 %v334, %v1430
      %v1432 = vmul.f32 %v335, %v1430
      %v1433 = vmul.f32 %v336, %v1430
      %v1434 = vmul.f32 %v337, %v1430
      %v1435 = vmul.f32 %v338, %v1430
      %v1436 = vmul.f32 %v339, %v1430
      %v1437 = vmul.f32 %v340, %v1430
      %v1438 = vmul.f32 %v341, %v1430
      %v1439 = vmul.f32 %v342, %v1430
      %v1440 = vmul.f32 %v343, %v1430
      %v1441 = vmul.f32 %v344, %v1430
      %v1442 = vmul.f32 %v345, %v1430
      %v1443 = vmul.f32 %v346, %v1430
      %v1444 = vmul.f32 %v347, %v1430
      %v1445 = vmul.f32 %v348, %v1430
      %v1446 = vmul.f32 %v349, %v1430
      %v1447 = vmul.f32 %v350, %v1430
      %v1448 = vmul.f32 %v351, %v1430
      %v1449 = vmul.f32 %v352, %v1430
      %v1450 = vmul.f32 %v353, %v1430
      %v1451 = vmul.f32 %v354, %v1430
      %v1452 = vmul.f32 %v355, %v1430
      %v1453 = vmul.f32 %v356, %v1430
      %v1454 = vmul.f32 %v357, %v1430
      %v1455 = vperm.slane %v377, 3
      %v1456 = vmul.f32 %v337, %v1455
      %v1457 = vmul.f32 %v338, %v1455
      %v1458 = vmul.f32 %v339, %v1455
      %v1459 = vmul.f32 %v340, %v1455
      %v1460 = vmul.f32 %v341, %v1455
      %v1461 = vmul.f32 %v342, %v1455
      %v1462 = vmul.f32 %v343, %v1455
      %v1463 = vmul.f32 %v344, %v1455
      %v1464 = vmul.f32 %v345, %v1455
      %v1465 = vmul.f32 %v346, %v1455
      %v1466 = vmul.f32 %v347, %v1455
      %v1467 = vmul.f32 %v348, %v1455
      %v1468 = vmul.f32 %v349, %v1455
      %v1469 = vmul.f32 %v350, %v1455
      %v1470 = vmul.f32 %v351, %v1455
      %v1471 = vmul.f32 %v352, %v1455
      %v1472 = vmul.f32 %v353, %v1455
      %v1473 = vmul.f32 %v354, %v1455
      %v1474 = vmul.f32 %v355, %v1455
      %v1475 = vmul.f32 %v356, %v1455
      %v1476 = vmul.f32 %v357, %v1455
      %v1477 = vmul.f32 %v358, %v1455
      %v1478 = vmul.f32 %v359, %v1455
      %v1479 = vmul.f32 %v360, %v1455
      %v1480 = vadd.f32 %v1431, %v1456
      %v1481 = vadd.f32 %v1432, %v1457
      %v1482 = vadd.f32 %v1433, %v1458
      %v1483 = vadd.f32 %v1434, %v1459
      %v1484 = vadd.f32 %v1435, %v1460
      %v1485 = vadd.f32 %v1436, %v1461
      %v1486 = vadd.f32 %v1437, %v1462
      %v1487 = vadd.f32 %v1438, %v1463
      %v1488 = vadd.f32 %v1439, %v1464
      %v1489 = vadd.f32 %v1440, %v1465
      %v1490 = vadd.f32 %v1441, %v1466
      %v1491 = vadd.f32 %v1442, %v1467
      %v1492 = vadd.f32 %v1443, %v1468
      %v1493 = vadd.f32 %v1444, %v1469
      %v1494 = vadd.f32 %v1445, %v1470
      %v1495 = vadd.f32 %v1446, %v1471
      %v1496 = vadd.f32 %v1447, %v1472
      %v1497 = vadd.f32 %v1448, %v1473
      %v1498 = vadd.f32 %v1449, %v1474
      %v1499 = vadd.f32 %v1450, %v1475
      %v1500 = vadd.f32 %v1451, %v1476
      %v1501 = vadd.f32 %v1452, %v1477
      %v1502 = vadd.f32 %v1453, %v1478
      %v1503 = vadd.f32 %v1454, %v1479
      %v1504 = vperm.slane %v378, 3
      %v1505 = vmul.f32 %v340, %v1504
      %v1506 = vmul.f32 %v341, %v1504
      %v1507 = vmul.f32 %v342, %v1504
      %v1508 = vmul.f32 %v343, %v1504
      %v1509 = vmul.f32 %v344, %v1504
      %v1510 = vmul.f32 %v345, %v1504
      %v1511 = vmul.f32 %v346, %v1504
      %v1512 = vmul.f32 %v347, %v1504
      %v1513 = vmul.f32 %v348, %v1504
      %v1514 = vmul.f32 %v349, %v1504
      %v1515 = vmul.f32 %v350, %v1504
      %v1516 = vmul.f32 %v351, %v1504
      %v1517 = vmul.f32 %v352, %v1504
      %v1518 = vmul.f32 %v353, %v1504
      %v1519 = vmul.f32 %v354, %v1504
      %v1520 = vmul.f32 %v355, %v1504
      %v1521 = vmul.f32 %v356, %v1504
      %v1522 = vmul.f32 %v357, %v1504
      %v1523 = vmul.f32 %v358, %v1504
      %v1524 = vmul.f32 %v359, %v1504
      %v1525 = vmul.f32 %v360, %v1504
      %v1526 = vmul.f32 %v361, %v1504
      %v1527 = vmul.f32 %v362, %v1504
      %v1528 = vmul.f32 %v363, %v1504
      %v1529 = vadd.f32 %v1480, %v1505
      %v1530 = vadd.f32 %v1481, %v1506
      %v1531 = vadd.f32 %v1482, %v1507
      %v1532 = vadd.f32 %v1483, %v1508
      %v1533 = vadd.f32 %v1484, %v1509
      %v1534 = vadd.f32 %v1485, %v1510
      %v1535 = vadd.f32 %v1486, %v1511
      %v1536 = vadd.f32 %v1487, %v1512
      %v1537 = vadd.f32 %v1488, %v1513
      %v1538 = vadd.f32 %v1489, %v1514
      %v1539 = vadd.f32 %v1490, %v1515
      %v1540 = vadd.f32 %v1491, %v1516
      %v1541 = vadd.f32 %v1492, %v1517
      %v1542 = vadd.f32 %v1493, %v1518
      %v1543 = vadd.f32 %v1494, %v1519
      %v1544 = vadd.f32 %v1495, %v1520
      %v1545 = vadd.f32 %v1496, %v1521
      %v1546 = vadd.f32 %v1497, %v1522
      %v1547 = vadd.f32 %v1498, %v1523
      %v1548 = vadd.f32 %v1499, %v1524
      %v1549 = vadd.f32 %v1500, %v1525
      %v1550 = vadd.f32 %v1501, %v1526
      %v1551 = vadd.f32 %v1502, %v1527
      %v1552 = vadd.f32 %v1503, %v1528
      %v1553 = vperm.slane %v379, 3
      %v1554 = vmul.f32 %v343, %v1553
      %v1555 = vmul.f32 %v344, %v1553
      %v1556 = vmul.f32 %v345, %v1553
      %v1557 = vmul.f32 %v346, %v1553
      %v1558 = vmul.f32 %v347, %v1553
      %v1559 = vmul.f32 %v348, %v1553
      %v1560 = vmul.f32 %v349, %v1553
      %v1561 = vmul.f32 %v350, %v1553
      %v1562 = vmul.f32 %v351, %v1553
      %v1563 = vmul.f32 %v352, %v1553
      %v1564 = vmul.f32 %v353, %v1553
      %v1565 = vmul.f32 %v354, %v1553
      %v1566 = vmul.f32 %v355, %v1553
      %v1567 = vmul.f32 %v356, %v1553
      %v1568 = vmul.f32 %v357, %v1553
      %v1569 = vmul.f32 %v358, %v1553
      %v1570 = vmul.f32 %v359, %v1553
      %v1571 = vmul.f32 %v360, %v1553
      %v1572 = vmul.f32 %v361, %v1553
      %v1573 = vmul.f32 %v362, %v1553
      %v1574 = vmul.f32 %v363, %v1553
      %v1575 = vmul.f32 %v364, %v1553
      %v1576 = vmul.f32 %v365, %v1553
      %v1577 = vmul.f32 %v366, %v1553
      %v1578 = vadd.f32 %v1529, %v1554
      %v1579 = vadd.f32 %v1530, %v1555
      %v1580 = vadd.f32 %v1531, %v1556
      %v1581 = vadd.f32 %v1532, %v1557
      %v1582 = vadd.f32 %v1533, %v1558
      %v1583 = vadd.f32 %v1534, %v1559
      %v1584 = vadd.f32 %v1535, %v1560
      %v1585 = vadd.f32 %v1536, %v1561
      %v1586 = vadd.f32 %v1537, %v1562
      %v1587 = vadd.f32 %v1538, %v1563
      %v1588 = vadd.f32 %v1539, %v1564
      %v1589 = vadd.f32 %v1540, %v1565
      %v1590 = vadd.f32 %v1541, %v1566
      %v1591 = vadd.f32 %v1542, %v1567
      %v1592 = vadd.f32 %v1543, %v1568
      %v1593 = vadd.f32 %v1544, %v1569
      %v1594 = vadd.f32 %v1545, %v1570
      %v1595 = vadd.f32 %v1546, %v1571
      %v1596 = vadd.f32 %v1547, %v1572
      %v1597 = vadd.f32 %v1548, %v1573
      %v1598 = vadd.f32 %v1549, %v1574
      %v1599 = vadd.f32 %v1550, %v1575
      %v1600 = vadd.f32 %v1551, %v1576
      %v1601 = vadd.f32 %v1552, %v1577
      %v1602 = vperm.slane %v380, 3
      %v1603 = vmul.f32 %v346, %v1602
      %v1604 = vmul.f32 %v347, %v1602
      %v1605 = vmul.f32 %v348, %v1602
      %v1606 = vmul.f32 %v349, %v1602
      %v1607 = vmul.f32 %v350, %v1602
      %v1608 = vmul.f32 %v351, %v1602
      %v1609 = vmul.f32 %v352, %v1602
      %v1610 = vmul.f32 %v353, %v1602
      %v1611 = vmul.f32 %v354, %v1602
      %v1612 = vmul.f32 %v355, %v1602
      %v1613 = vmul.f32 %v356, %v1602
      %v1614 = vmul.f32 %v357, %v1602
      %v1615 = vmul.f32 %v358, %v1602
      %v1616 = vmul.f32 %v359, %v1602
      %v1617 = vmul.f32 %v360, %v1602
      %v1618 = vmul.f32 %v361, %v1602
      %v1619 = vmul.f32 %v362, %v1602
      %v1620 = vmul.f32 %v363, %v1602
      %v1621 = vmul.f32 %v364, %v1602
      %v1622 = vmul.f32 %v365, %v1602
      %v1623 = vmul.f32 %v366, %v1602
      %v1624 = vmul.f32 %v367, %v1602
      %v1625 = vmul.f32 %v368, %v1602
      %v1626 = vmul.f32 %v369, %v1602
      %v1627 = vadd.f32 %v1578, %v1603
      %v1628 = vadd.f32 %v1579, %v1604
      %v1629 = vadd.f32 %v1580, %v1605
      %v1630 = vadd.f32 %v1581, %v1606
      %v1631 = vadd.f32 %v1582, %v1607
      %v1632 = vadd.f32 %v1583, %v1608
      %v1633 = vadd.f32 %v1584, %v1609
      %v1634 = vadd.f32 %v1585, %v1610
      %v1635 = vadd.f32 %v1586, %v1611
      %v1636 = vadd.f32 %v1587, %v1612
      %v1637 = vadd.f32 %v1588, %v1613
      %v1638 = vadd.f32 %v1589, %v1614
      %v1639 = vadd.f32 %v1590, %v1615
      %v1640 = vadd.f32 %v1591, %v1616
      %v1641 = vadd.f32 %v1592, %v1617
      %v1642 = vadd.f32 %v1593, %v1618
      %v1643 = vadd.f32 %v1594, %v1619
      %v1644 = vadd.f32 %v1595, %v1620
      %v1645 = vadd.f32 %v1596, %v1621
      %v1646 = vadd.f32 %v1597, %v1622
      %v1647 = vadd.f32 %v1598, %v1623
      %v1648 = vadd.f32 %v1599, %v1624
      %v1649 = vadd.f32 %v1600, %v1625
      %v1650 = vadd.f32 %v1601, %v1626
      %v1651 = vperm.slane %v381, 3
      %v1652 = vmul.f32 %v349, %v1651
      %v1653 = vmul.f32 %v350, %v1651
      %v1654 = vmul.f32 %v351, %v1651
      %v1655 = vmul.f32 %v352, %v1651
      %v1656 = vmul.f32 %v353, %v1651
      %v1657 = vmul.f32 %v354, %v1651
      %v1658 = vmul.f32 %v355, %v1651
      %v1659 = vmul.f32 %v356, %v1651
      %v1660 = vmul.f32 %v357, %v1651
      %v1661 = vmul.f32 %v358, %v1651
      %v1662 = vmul.f32 %v359, %v1651
      %v1663 = vmul.f32 %v360, %v1651
      %v1664 = vmul.f32 %v361, %v1651
      %v1665 = vmul.f32 %v362, %v1651
      %v1666 = vmul.f32 %v363, %v1651
      %v1667 = vmul.f32 %v364, %v1651
      %v1668 = vmul.f32 %v365, %v1651
      %v1669 = vmul.f32 %v366, %v1651
      %v1670 = vmul.f32 %v367, %v1651
      %v1671 = vmul.f32 %v368, %v1651
      %v1672 = vmul.f32 %v369, %v1651
      %v1673 = vmul.f32 %v370, %v1651
      %v1674 = vmul.f32 %v371, %v1651
      %v1675 = vmul.f32 %v372, %v1651
      %v1676 = vadd.f32 %v1627, %v1652
      %v1677 = vadd.f32 %v1628, %v1653
      %v1678 = vadd.f32 %v1629, %v1654
      %v1679 = vadd.f32 %v1630, %v1655
      %v1680 = vadd.f32 %v1631, %v1656
      %v1681 = vadd.f32 %v1632, %v1657
      %v1682 = vadd.f32 %v1633, %v1658
      %v1683 = vadd.f32 %v1634, %v1659
      %v1684 = vadd.f32 %v1635, %v1660
      %v1685 = vadd.f32 %v1636, %v1661
      %v1686 = vadd.f32 %v1637, %v1662
      %v1687 = vadd.f32 %v1638, %v1663
      %v1688 = vadd.f32 %v1639, %v1664
      %v1689 = vadd.f32 %v1640, %v1665
      %v1690 = vadd.f32 %v1641, %v1666
      %v1691 = vadd.f32 %v1642, %v1667
      %v1692 = vadd.f32 %v1643, %v1668
      %v1693 = vadd.f32 %v1644, %v1669
      %v1694 = vadd.f32 %v1645, %v1670
      %v1695 = vadd.f32 %v1646, %v1671
      %v1696 = vadd.f32 %v1647, %v1672
      %v1697 = vadd.f32 %v1648, %v1673
      %v1698 = vadd.f32 %v1649, %v1674
      %v1699 = vadd.f32 %v1650, %v1675
      %v1700 = vperm.slane %v382, 3
      %v1701 = vmul.f32 %v352, %v1700
      %v1702 = vmul.f32 %v353, %v1700
      %v1703 = vmul.f32 %v354, %v1700
      %v1704 = vmul.f32 %v355, %v1700
      %v1705 = vmul.f32 %v356, %v1700
      %v1706 = vmul.f32 %v357, %v1700
      %v1707 = vmul.f32 %v358, %v1700
      %v1708 = vmul.f32 %v359, %v1700
      %v1709 = vmul.f32 %v360, %v1700
      %v1710 = vmul.f32 %v361, %v1700
      %v1711 = vmul.f32 %v362, %v1700
      %v1712 = vmul.f32 %v363, %v1700
      %v1713 = vmul.f32 %v364, %v1700
      %v1714 = vmul.f32 %v365, %v1700
      %v1715 = vmul.f32 %v366, %v1700
      %v1716 = vmul.f32 %v367, %v1700
      %v1717 = vmul.f32 %v368, %v1700
      %v1718 = vmul.f32 %v369, %v1700
      %v1719 = vmul.f32 %v370, %v1700
      %v1720 = vmul.f32 %v371, %v1700
      %v1721 = vmul.f32 %v372, %v1700
      %v1722 = vmul.f32 %v373, %v1700
      %v1723 = vmul.f32 %v374, %v1700
      %v1724 = vmul.f32 %v375, %v1700
      %v1725 = vadd.f32 %v1676, %v1701
      %v1726 = vadd.f32 %v1677, %v1702
      %v1727 = vadd.f32 %v1678, %v1703
      %v1728 = vadd.f32 %v1679, %v1704
      %v1729 = vadd.f32 %v1680, %v1705
      %v1730 = vadd.f32 %v1681, %v1706
      %v1731 = vadd.f32 %v1682, %v1707
      %v1732 = vadd.f32 %v1683, %v1708
      %v1733 = vadd.f32 %v1684, %v1709
      %v1734 = vadd.f32 %v1685, %v1710
      %v1735 = vadd.f32 %v1686, %v1711
      %v1736 = vadd.f32 %v1687, %v1712
      %v1737 = vadd.f32 %v1688, %v1713
      %v1738 = vadd.f32 %v1689, %v1714
      %v1739 = vadd.f32 %v1690, %v1715
      %v1740 = vadd.f32 %v1691, %v1716
      %v1741 = vadd.f32 %v1692, %v1717
      %v1742 = vadd.f32 %v1693, %v1718
      %v1743 = vadd.f32 %v1694, %v1719
      %v1744 = vadd.f32 %v1695, %v1720
      %v1745 = vadd.f32 %v1696, %v1721
      %v1746 = vadd.f32 %v1697, %v1722
      %v1747 = vadd.f32 %v1698, %v1723
      %v1748 = vadd.f32 %v1699, %v1724
      %vm1773 = vcmask 1044480
      %v1774 = vrot.slane %v1725, 3
      %v1775 = vrot.slane %v1726, 3
      %v1776 = vsel %vm1773, %v1774, %v1775
      %v1777 = vrot.slane %v1727, 3
      %v1778 = vsel %vm1773, %v1775, %v1777
      %v1779 = vrot.slane %v1728, 3
      %v1780 = vrot.slane %v1729, 3
      %v1781 = vsel %vm1773, %v1779, %v1780
      %v1782 = vrot.slane %v1730, 3
      %v1783 = vsel %vm1773, %v1780, %v1782
      %v1784 = vrot.slane %v1731, 3
      %v1785 = vrot.slane %v1732, 3
      %v1786 = vsel %vm1773, %v1784, %v1785
      %v1787 = vrot.slane %v1733, 3
      %v1788 = vsel %vm1773, %v1785, %v1787
      %v1789 = vrot.slane %v1734, 3
      %v1790 = vrot.slane %v1735, 3
      %v1791 = vsel %vm1773, %v1789, %v1790
      %v1792 = vrot.slane %v1736, 3
      %v1793 = vsel %vm1773, %v1790, %v1792
      %v1794 = vrot.slane %v1737, 3
      %v1795 = vrot.slane %v1738, 3
      %v1796 = vsel %vm1773, %v1794, %v1795
      %v1797 = vrot.slane %v1739, 3
      %v1798 = vsel %vm1773, %v1795, %v1797
      %v1799 = vrot.slane %v1740, 3
      %v1800 = vrot.slane %v1741, 3
      %v1801 = vsel %vm1773, %v1799, %v1800
      %v1802 = vrot.slane %v1742, 3
      %v1803 = vsel %vm1773, %v1800, %v1802
      %v1804 = vrot.slane %v1743, 3
      %v1805 = vrot.slane %v1744, 3
      %v1806 = vsel %vm1773, %v1804, %v1805
      %v1807 = vrot.slane %v1745, 3
      %v1808 = vsel %vm1773, %v1805, %v1807
      %v1809 = vrot.slane %v1746, 3
      %v1810 = vrot.slane %v1747, 3
      %v1811 = vsel %vm1773, %v1809, %v1810
      %v1812 = vrot.slane %v1748, 3
      %v1813 = vsel %vm1773, %v1810, %v1812
      %v1830 = vadd.f32 %v1414, %v1776
      %v1831 = vadd.f32 %v1415, %v1778
      %v1832 = vadd.f32 %v1416, %v1781
      %v1833 = vadd.f32 %v1417, %v1783
      %v1834 = vadd.f32 %v1418, %v1786
      %v1835 = vadd.f32 %v1419, %v1788
      %v1836 = vadd.f32 %v1420, %v1791
      %v1837 = vadd.f32 %v1421, %v1793
      %v1838 = vadd.f32 %v1422, %v1796
      %v1839 = vadd.f32 %v1423, %v1798
      %v1840 = vadd.f32 %v1424, %v1801
      %v1841 = vadd.f32 %v1425, %v1803
      %v1842 = vadd.f32 %v1426, %v1806
      %v1843 = vadd.f32 %v1427, %v1808
      %v1844 = vadd.f32 %v1428, %v1811
      %v1845 = vadd.f32 %v1429, %v1813
      %v1846 = vperm.slane %v376, 4
      %v1847 = vmul.f32 %v334, %v1846
      %v1848 = vmul.f32 %v335, %v1846
      %v1849 = vmul.f32 %v336, %v1846
      %v1850 = vmul.f32 %v337, %v1846
      %v1851 = vmul.f32 %v338, %v1846
      %v1852 = vmul.f32 %v339, %v1846
      %v1853 = vmul.f32 %v340, %v1846
      %v1854 = vmul.f32 %v341, %v1846
      %v1855 = vmul.f32 %v342, %v1846
      %v1856 = vmul.f32 %v343, %v1846
      %v1857 = vmul.f32 %v344, %v1846
      %v1858 = vmul.f32 %v345, %v1846
      %v1859 = vmul.f32 %v346, %v1846
      %v1860 = vmul.f32 %v347, %v1846
      %v1861 = vmul.f32 %v348, %v1846
      %v1862 = vmul.f32 %v349, %v1846
      %v1863 = vmul.f32 %v350, %v1846
      %v1864 = vmul.f32 %v351, %v1846
      %v1865 = vmul.f32 %v352, %v1846
      %v1866 = vmul.f32 %v353, %v1846
      %v1867 = vmul.f32 %v354, %v1846
      %v1868 = vmul.f32 %v355, %v1846
      %v1869 = vmul.f32 %v356, %v1846
      %v1870 = vmul.f32 %v357, %v1846
      %v1871 = vperm.slane %v377, 4
      %v1872 = vmul.f32 %v337, %v1871
      %v1873 = vmul.f32 %v338, %v1871
      %v1874 = vmul.f32 %v339, %v1871
      %v1875 = vmul.f32 %v340, %v1871
      %v1876 = vmul.f32 %v341, %v1871
      %v1877 = vmul.f32 %v342, %v1871
      %v1878 = vmul.f32 %v343, %v1871
      %v1879 = vmul.f32 %v344, %v1871
      %v1880 = vmul.f32 %v345, %v1871
      %v1881 = vmul.f32 %v346, %v1871
      %v1882 = vmul.f32 %v347, %v1871
      %v1883 = vmul.f32 %v348, %v1871
      %v1884 = vmul.f32 %v349, %v1871
      %v1885 = vmul.f32 %v350, %v1871
      %v1886 = vmul.f32 %v351, %v1871
      %v1887 = vmul.f32 %v352, %v1871
      %v1888 = vmul.f32 %v353, %v1871
      %v1889 = vmul.f32 %v354, %v1871
      %v1890 = vmul.f32 %v355, %v1871
      %v1891 = vmul.f32 %v356, %v1871
      %v1892 = vmul.f32 %v357, %v1871
      %v1893 = vmul.f32 %v358, %v1871
      %v1894 = vmul.f32 %v359, %v1871
      %v1895 = vmul.f32 %v360, %v1871
      %v1896 = vadd.f32 %v1847, %v1872
      %v1897 = vadd.f32 %v1848, %v1873
      %v1898 = vadd.f32 %v1849, %v1874
      %v1899 = vadd.f32 %v1850, %v1875
      %v1900 = vadd.f32 %v1851, %v1876
      %v1901 = vadd.f32 %v1852, %v1877
      %v1902 = vadd.f32 %v1853, %v1878
      %v1903 = vadd.f32 %v1854, %v1879
      %v1904 = vadd.f32 %v1855, %v1880
      %v1905 = vadd.f32 %v1856, %v1881
      %v1906 = vadd.f32 %v1857, %v1882
      %v1907 = vadd.f32 %v1858, %v1883
      %v1908 = vadd.f32 %v1859, %v1884
      %v1909 = vadd.f32 %v1860, %v1885
      %v1910 = vadd.f32 %v1861, %v1886
      %v1911 = vadd.f32 %v1862, %v1887
      %v1912 = vadd.f32 %v1863, %v1888
      %v1913 = vadd.f32 %v1864, %v1889
      %v1914 = vadd.f32 %v1865, %v1890
      %v1915 = vadd.f32 %v1866, %v1891
      %v1916 = vadd.f32 %v1867, %v1892
      %v1917 = vadd.f32 %v1868, %v1893
      %v1918 = vadd.f32 %v1869, %v1894
      %v1919 = vadd.f32 %v1870, %v1895
      %v1920 = vperm.slane %v378, 4
      %v1921 = vmul.f32 %v340, %v1920
      %v1922 = vmul.f32 %v341, %v1920
      %v1923 = vmul.f32 %v342, %v1920
      %v1924 = vmul.f32 %v343, %v1920
      %v1925 = vmul.f32 %v344, %v1920
      %v1926 = vmul.f32 %v345, %v1920
      %v1927 = vmul.f32 %v346, %v1920
      %v1928 = vmul.f32 %v347, %v1920
      %v1929 = vmul.f32 %v348, %v1920
      %v1930 = vmul.f32 %v349, %v1920
      %v1931 = vmul.f32 %v350, %v1920
      %v1932 = vmul.f32 %v351, %v1920
      %v1933 = vmul.f32 %v352, %v1920
      %v1934 = vmul.f32 %v353, %v1920
      %v1935 = vmul.f32 %v354, %v1920
      %v1936 = vmul.f32 %v355, %v1920
      %v1937 = vmul.f32 %v356, %v1920
      %v1938 = vmul.f32 %v357, %v1920
      %v1939 = vmul.f32 %v358, %v1920
      %v1940 = vmul.f32 %v359, %v1920
      %v1941 = vmul.f32 %v360, %v1920
      %v1942 = vmul.f32 %v361, %v1920
      %v1943 = vmul.f32 %v362, %v1920
      %v1944 = vmul.f32 %v363, %v1920
      %v1945 = vadd.f32 %v1896, %v1921
      %v1946 = vadd.f32 %v1897, %v1922
      %v1947 = vadd.f32 %v1898, %v1923
      %v1948 = vadd.f32 %v1899, %v1924
      %v1949 = vadd.f32 %v1900, %v1925
      %v1950 = vadd.f32 %v1901, %v1926
      %v1951 = vadd.f32 %v1902, %v1927
      %v1952 = vadd.f32 %v1903, %v1928
      %v1953 = vadd.f32 %v1904, %v1929
      %v1954 = vadd.f32 %v1905, %v1930
      %v1955 = vadd.f32 %v1906, %v1931
      %v1956 = vadd.f32 %v1907, %v1932
      %v1957 = vadd.f32 %v1908, %v1933
      %v1958 = vadd.f32 %v1909, %v1934
      %v1959 = vadd.f32 %v1910, %v1935
      %v1960 = vadd.f32 %v1911, %v1936
      %v1961 = vadd.f32 %v1912, %v1937
      %v1962 = vadd.f32 %v1913, %v1938
      %v1963 = vadd.f32 %v1914, %v1939
      %v1964 = vadd.f32 %v1915, %v1940
      %v1965 = vadd.f32 %v1916, %v1941
      %v1966 = vadd.f32 %v1917, %v1942
      %v1967 = vadd.f32 %v1918, %v1943
      %v1968 = vadd.f32 %v1919, %v1944
      %v1969 = vperm.slane %v379, 4
      %v1970 = vmul.f32 %v343, %v1969
      %v1971 = vmul.f32 %v344, %v1969
      %v1972 = vmul.f32 %v345, %v1969
      %v1973 = vmul.f32 %v346, %v1969
      %v1974 = vmul.f32 %v347, %v1969
      %v1975 = vmul.f32 %v348, %v1969
      %v1976 = vmul.f32 %v349, %v1969
      %v1977 = vmul.f32 %v350, %v1969
      %v1978 = vmul.f32 %v351, %v1969
      %v1979 = vmul.f32 %v352, %v1969
      %v1980 = vmul.f32 %v353, %v1969
      %v1981 = vmul.f32 %v354, %v1969
      %v1982 = vmul.f32 %v355, %v1969
      %v1983 = vmul.f32 %v356, %v1969
      %v1984 = vmul.f32 %v357, %v1969
      %v1985 = vmul.f32 %v358, %v1969
      %v1986 = vmul.f32 %v359, %v1969
      %v1987 = vmul.f32 %v360, %v1969
      %v1988 = vmul.f32 %v361, %v1969
      %v1989 = vmul.f32 %v362, %v1969
      %v1990 = vmul.f32 %v363, %v1969
      %v1991 = vmul.f32 %v364, %v1969
      %v1992 = vmul.f32 %v365, %v1969
      %v1993 = vmul.f32 %v366, %v1969
      %v1994 = vadd.f32 %v1945, %v1970
      %v1995 = vadd.f32 %v1946, %v1971
      %v1996 = vadd.f32 %v1947, %v1972
      %v1997 = vadd.f32 %v1948, %v1973
      %v1998 = vadd.f32 %v1949, %v1974
      %v1999 = vadd.f32 %v1950, %v1975
      %v2000 = vadd.f32 %v1951, %v1976
      %v2001 = vadd.f32 %v1952, %v1977
      %v2002 = vadd.f32 %v1953, %v1978
      %v2003 = vadd.f32 %v1954, %v1979
      %v2004 = vadd.f32 %v1955, %v1980
      %v2005 = vadd.f32 %v1956, %v1981
      %v2006 = vadd.f32 %v1957, %v1982
      %v2007 = vadd.f32 %v1958, %v1983
      %v2008 = vadd.f32 %v1959, %v1984
      %v2009 = vadd.f32 %v1960, %v1985
      %v2010 = vadd.f32 %v1961, %v1986
      %v2011 = vadd.f32 %v1962, %v1987
      %v2012 = vadd.f32 %v1963, %v1988
      %v2013 = vadd.f32 %v1964, %v1989
      %v2014 = vadd.f32 %v1965, %v1990
      %v2015 = vadd.f32 %v1966, %v1991
      %v2016 = vadd.f32 %v1967, %v1992
      %v2017 = vadd.f32 %v1968, %v1993
      %v2018 = vperm.slane %v380, 4
      %v2019 = vmul.f32 %v346, %v2018
      %v2020 = vmul.f32 %v347, %v2018
      %v2021 = vmul.f32 %v348, %v2018
      %v2022 = vmul.f32 %v349, %v2018
      %v2023 = vmul.f32 %v350, %v2018
      %v2024 = vmul.f32 %v351, %v2018
      %v2025 = vmul.f32 %v352, %v2018
      %v2026 = vmul.f32 %v353, %v2018
      %v2027 = vmul.f32 %v354, %v2018
      %v2028 = vmul.f32 %v355, %v2018
      %v2029 = vmul.f32 %v356, %v2018
      %v2030 = vmul.f32 %v357, %v2018
      %v2031 = vmul.f32 %v358, %v2018
      %v2032 = vmul.f32 %v359, %v2018
      %v2033 = vmul.f32 %v360, %v2018
      %v2034 = vmul.f32 %v361, %v2018
      %v2035 = vmul.f32 %v362, %v2018
      %v2036 = vmul.f32 %v363, %v2018
      %v2037 = vmul.f32 %v364, %v2018
      %v2038 = vmul.f32 %v365, %v2018
      %v2039 = vmul.f32 %v366, %v2018
      %v2040 = vmul.f32 %v367, %v2018
      %v2041 = vmul.f32 %v368, %v2018
      %v2042 = vmul.f32 %v369, %v2018
      %v2043 = vadd.f32 %v1994, %v2019
      %v2044 = vadd.f32 %v1995, %v2020
      %v2045 = vadd.f32 %v1996, %v2021
      %v2046 = vadd.f32 %v1997, %v2022
      %v2047 = vadd.f32 %v1998, %v2023
      %v2048 = vadd.f32 %v1999, %v2024
      %v2049 = vadd.f32 %v2000, %v2025
      %v2050 = vadd.f32 %v2001, %v2026
      %v2051 = vadd.f32 %v2002, %v2027
      %v2052 = vadd.f32 %v2003, %v2028
      %v2053 = vadd.f32 %v2004, %v2029
      %v2054 = vadd.f32 %v2005, %v2030
      %v2055 = vadd.f32 %v2006, %v2031
      %v2056 = vadd.f32 %v2007, %v2032
      %v2057 = vadd.f32 %v2008, %v2033
      %v2058 = vadd.f32 %v2009, %v2034
      %v2059 = vadd.f32 %v2010, %v2035
      %v2060 = vadd.f32 %v2011, %v2036
      %v2061 = vadd.f32 %v2012, %v2037
      %v2062 = vadd.f32 %v2013, %v2038
      %v2063 = vadd.f32 %v2014, %v2039
      %v2064 = vadd.f32 %v2015, %v2040
      %v2065 = vadd.f32 %v2016, %v2041
      %v2066 = vadd.f32 %v2017, %v2042
      %v2067 = vperm.slane %v381, 4
      %v2068 = vmul.f32 %v349, %v2067
      %v2069 = vmul.f32 %v350, %v2067
      %v2070 = vmul.f32 %v351, %v2067
      %v2071 = vmul.f32 %v352, %v2067
      %v2072 = vmul.f32 %v353, %v2067
      %v2073 = vmul.f32 %v354, %v2067
      %v2074 = vmul.f32 %v355, %v2067
      %v2075 = vmul.f32 %v356, %v2067
      %v2076 = vmul.f32 %v357, %v2067
      %v2077 = vmul.f32 %v358, %v2067
      %v2078 = vmul.f32 %v359, %v2067
      %v2079 = vmul.f32 %v360, %v2067
      %v2080 = vmul.f32 %v361, %v2067
      %v2081 = vmul.f32 %v362, %v2067
      %v2082 = vmul.f32 %v363, %v2067
      %v2083 = vmul.f32 %v364, %v2067
      %v2084 = vmul.f32 %v365, %v2067
      %v2085 = vmul.f32 %v366, %v2067
      %v2086 = vmul.f32 %v367, %v2067
      %v2087 = vmul.f32 %v368, %v2067
      %v2088 = vmul.f32 %v369, %v2067
      %v2089 = vmul.f32 %v370, %v2067
      %v2090 = vmul.f32 %v371, %v2067
      %v2091 = vmul.f32 %v372, %v2067
      %v2092 = vadd.f32 %v2043, %v2068
      %v2093 = vadd.f32 %v2044, %v2069
      %v2094 = vadd.f32 %v2045, %v2070
      %v2095 = vadd.f32 %v2046, %v2071
      %v2096 = vadd.f32 %v2047, %v2072
      %v2097 = vadd.f32 %v2048, %v2073
      %v2098 = vadd.f32 %v2049, %v2074
      %v2099 = vadd.f32 %v2050, %v2075
      %v2100 = vadd.f32 %v2051, %v2076
      %v2101 = vadd.f32 %v2052, %v2077
      %v2102 = vadd.f32 %v2053, %v2078
      %v2103 = vadd.f32 %v2054, %v2079
      %v2104 = vadd.f32 %v2055, %v2080
      %v2105 = vadd.f32 %v2056, %v2081
      %v2106 = vadd.f32 %v2057, %v2082
      %v2107 = vadd.f32 %v2058, %v2083
      %v2108 = vadd.f32 %v2059, %v2084
      %v2109 = vadd.f32 %v2060, %v2085
      %v2110 = vadd.f32 %v2061, %v2086
      %v2111 = vadd.f32 %v2062, %v2087
      %v2112 = vadd.f32 %v2063, %v2088
      %v2113 = vadd.f32 %v2064, %v2089
      %v2114 = vadd.f32 %v2065, %v2090
      %v2115 = vadd.f32 %v2066, %v2091
      %v2116 = vperm.slane %v382, 4
      %v2117 = vmul.f32 %v352, %v2116
      %v2118 = vmul.f32 %v353, %v2116
      %v2119 = vmul.f32 %v354, %v2116
      %v2120 = vmul.f32 %v355, %v2116
      %v2121 = vmul.f32 %v356, %v2116
      %v2122 = vmul.f32 %v357, %v2116
      %v2123 = vmul.f32 %v358, %v2116
      %v2124 = vmul.f32 %v359, %v2116
      %v2125 = vmul.f32 %v360, %v2116
      %v2126 = vmul.f32 %v361, %v2116
      %v2127 = vmul.f32 %v362, %v2116
      %v2128 = vmul.f32 %v363, %v2116
      %v2129 = vmul.f32 %v364, %v2116
      %v2130 = vmul.f32 %v365, %v2116
      %v2131 = vmul.f32 %v366, %v2116
      %v2132 = vmul.f32 %v367, %v2116
      %v2133 = vmul.f32 %v368, %v2116
      %v2134 = vmul.f32 %v369, %v2116
      %v2135 = vmul.f32 %v370, %v2116
      %v2136 = vmul.f32 %v371, %v2116
      %v2137 = vmul.f32 %v372, %v2116
      %v2138 = vmul.f32 %v373, %v2116
      %v2139 = vmul.f32 %v374, %v2116
      %v2140 = vmul.f32 %v375, %v2116
      %v2141 = vadd.f32 %v2092, %v2117
      %v2142 = vadd.f32 %v2093, %v2118
      %v2143 = vadd.f32 %v2094, %v2119
      %v2144 = vadd.f32 %v2095, %v2120
      %v2145 = vadd.f32 %v2096, %v2121
      %v2146 = vadd.f32 %v2097, %v2122
      %v2147 = vadd.f32 %v2098, %v2123
      %v2148 = vadd.f32 %v2099, %v2124
      %v2149 = vadd.f32 %v2100, %v2125
      %v2150 = vadd.f32 %v2101, %v2126
      %v2151 = vadd.f32 %v2102, %v2127
      %v2152 = vadd.f32 %v2103, %v2128
      %v2153 = vadd.f32 %v2104, %v2129
      %v2154 = vadd.f32 %v2105, %v2130
      %v2155 = vadd.f32 %v2106, %v2131
      %v2156 = vadd.f32 %v2107, %v2132
      %v2157 = vadd.f32 %v2108, %v2133
      %v2158 = vadd.f32 %v2109, %v2134
      %v2159 = vadd.f32 %v2110, %v2135
      %v2160 = vadd.f32 %v2111, %v2136
      %v2161 = vadd.f32 %v2112, %v2137
      %v2162 = vadd.f32 %v2113, %v2138
      %v2163 = vadd.f32 %v2114, %v2139
      %v2164 = vadd.f32 %v2115, %v2140
      %vm2189 = vcmask 1043456
      %v2190 = vrot.slane %v2141, 4
      %v2191 = vrot.slane %v2142, 4
      %v2192 = vsel %vm2189, %v2190, %v2191
      %v2193 = vrot.slane %v2143, 4
      %v2194 = vsel %vm2189, %v2191, %v2193
      %v2195 = vrot.slane %v2144, 4
      %v2196 = vrot.slane %v2145, 4
      %v2197 = vsel %vm2189, %v2195, %v2196
      %v2198 = vrot.slane %v2146, 4
      %v2199 = vsel %vm2189, %v2196, %v2198
      %v2200 = vrot.slane %v2147, 4
      %v2201 = vrot.slane %v2148, 4
      %v2202 = vsel %vm2189, %v2200, %v2201
      %v2203 = vrot.slane %v2149, 4
      %v2204 = vsel %vm2189, %v2201, %v2203
      %v2205 = vrot.slane %v2150, 4
      %v2206 = vrot.slane %v2151, 4
      %v2207 = vsel %vm2189, %v2205, %v2206
      %v2208 = vrot.slane %v2152, 4
      %v2209 = vsel %vm2189, %v2206, %v2208
      %v2210 = vrot.slane %v2153, 4
      %v2211 = vrot.slane %v2154, 4
      %v2212 = vsel %vm2189, %v2210, %v2211
      %v2213 = vrot.slane %v2155, 4
      %v2214 = vsel %vm2189, %v2211, %v2213
      %v2215 = vrot.slane %v2156, 4
      %v2216 = vrot.slane %v2157, 4
      %v2217 = vsel %vm2189, %v2215, %v2216
      %v2218 = vrot.slane %v2158, 4
      %v2219 = vsel %vm2189, %v2216, %v2218
      %v2220 = vrot.slane %v2159, 4
      %v2221 = vrot.slane %v2160, 4
      %v2222 = vsel %vm2189, %v2220, %v2221
      %v2223 = vrot.slane %v2161, 4
      %v2224 = vsel %vm2189, %v2221, %v2223
      %v2225 = vrot.slane %v2162, 4
      %v2226 = vrot.slane %v2163, 4
      %v2227 = vsel %vm2189, %v2225, %v2226
      %v2228 = vrot.slane %v2164, 4
      %v2229 = vsel %vm2189, %v2226, %v2228
      %v2246 = vadd.f32 %v1830, %v2192
      %v2247 = vadd.f32 %v1831, %v2194
      %v2248 = vadd.f32 %v1832, %v2197
      %v2249 = vadd.f32 %v1833, %v2199
      %v2250 = vadd.f32 %v1834, %v2202
      %v2251 = vadd.f32 %v1835, %v2204
      %v2252 = vadd.f32 %v1836, %v2207
      %v2253 = vadd.f32 %v1837, %v2209
      %v2254 = vadd.f32 %v1838, %v2212
      %v2255 = vadd.f32 %v1839, %v2214
      %v2256 = vadd.f32 %v1840, %v2217
      %v2257 = vadd.f32 %v1841, %v2219
      %v2258 = vadd.f32 %v1842, %v2222
      %v2259 = vadd.f32 %v1843, %v2224
      %v2260 = vadd.f32 %v1844, %v2227
      %v2261 = vadd.f32 %v1845, %v2229
      %v2262 = vperm.slane %v376, 5
      %v2263 = vmul.f32 %v334, %v2262
      %v2264 = vmul.f32 %v335, %v2262
      %v2265 = vmul.f32 %v336, %v2262
      %v2266 = vmul.f32 %v337, %v2262
      %v2267 = vmul.f32 %v338, %v2262
      %v2268 = vmul.f32 %v339, %v2262
      %v2269 = vmul.f32 %v340, %v2262
      %v2270 = vmul.f32 %v341, %v2262
      %v2271 = vmul.f32 %v342, %v2262
      %v2272 = vmul.f32 %v343, %v2262
      %v2273 = vmul.f32 %v344, %v2262
      %v2274 = vmul.f32 %v345, %v2262
      %v2275 = vmul.f32 %v346, %v2262
      %v2276 = vmul.f32 %v347, %v2262
      %v2277 = vmul.f32 %v348, %v2262
      %v2278 = vmul.f32 %v349, %v2262
      %v2279 = vmul.f32 %v350, %v2262
      %v2280 = vmul.f32 %v351, %v2262
      %v2281 = vmul.f32 %v352, %v2262
      %v2282 = vmul.f32 %v353, %v2262
      %v2283 = vmul.f32 %v354, %v2262
      %v2284 = vmul.f32 %v355, %v2262
      %v2285 = vmul.f32 %v356, %v2262
      %v2286 = vmul.f32 %v357, %v2262
      %v2287 = vperm.slane %v377, 5
      %v2288 = vmul.f32 %v337, %v2287
      %v2289 = vmul.f32 %v338, %v2287
      %v2290 = vmul.f32 %v339, %v2287
      %v2291 = vmul.f32 %v340, %v2287
      %v2292 = vmul.f32 %v341, %v2287
      %v2293 = vmul.f32 %v342, %v2287
      %v2294 = vmul.f32 %v343, %v2287
      %v2295 = vmul.f32 %v344, %v2287
      %v2296 = vmul.f32 %v345, %v2287
      %v2297 = vmul.f32 %v346, %v2287
      %v2298 = vmul.f32 %v347, %v2287
      %v2299 = vmul.f32 %v348, %v2287
      %v2300 = vmul.f32 %v349, %v2287
      %v2301 = vmul.f32 %v350, %v2287
      %v2302 = vmul.f32 %v351, %v2287
      %v2303 = vmul.f32 %v352, %v2287
      %v2304 = vmul.f32 %v353, %v2287
      %v2305 = vmul.f32 %v354, %v2287
      %v2306 = vmul.f32 %v355, %v2287
      %v2307 = vmul.f32 %v356, %v2287
      %v2308 = vmul.f32 %v357, %v2287
      %v2309 = vmul.f32 %v358, %v2287
      %v2310 = vmul.f32 %v359, %v2287
      %v2311 = vmul.f32 %v360, %v2287
      %v2312 = vadd.f32 %v2263, %v2288
      %v2313 = vadd.f32 %v2264, %v2289
      %v2314 = vadd.f32 %v2265, %v2290
      %v2315 = vadd.f32 %v2266, %v2291
      %v2316 = vadd.f32 %v2267, %v2292
      %v2317 = vadd.f32 %v2268, %v2293
      %v2318 = vadd.f32 %v2269, %v2294
      %v2319 = vadd.f32 %v2270, %v2295
      %v2320 = vadd.f32 %v2271, %v2296
      %v2321 = vadd.f32 %v2272, %v2297
      %v2322 = vadd.f32 %v2273, %v2298
      %v2323 = vadd.f32 %v2274, %v2299
      %v2324 = vadd.f32 %v2275, %v2300
      %v2325 = vadd.f32 %v2276, %v2301
      %v2326 = vadd.f32 %v2277, %v2302
      %v2327 = vadd.f32 %v2278, %v2303
      %v2328 = vadd.f32 %v2279, %v2304
      %v2329 = vadd.f32 %v2280, %v2305
      %v2330 = vadd.f32 %v2281, %v2306
      %v2331 = vadd.f32 %v2282, %v2307
      %v2332 = vadd.f32 %v2283, %v2308
      %v2333 = vadd.f32 %v2284, %v2309
      %v2334 = vadd.f32 %v2285, %v2310
      %v2335 = vadd.f32 %v2286, %v2311
      %v2336 = vperm.slane %v378, 5
      %v2337 = vmul.f32 %v340, %v2336
      %v2338 = vmul.f32 %v341, %v2336
      %v2339 = vmul.f32 %v342, %v2336
      %v2340 = vmul.f32 %v343, %v2336
      %v2341 = vmul.f32 %v344, %v2336
      %v2342 = vmul.f32 %v345, %v2336
      %v2343 = vmul.f32 %v346, %v2336
      %v2344 = vmul.f32 %v347, %v2336
      %v2345 = vmul.f32 %v348, %v2336
      %v2346 = vmul.f32 %v349, %v2336
      %v2347 = vmul.f32 %v350, %v2336
      %v2348 = vmul.f32 %v351, %v2336
      %v2349 = vmul.f32 %v352, %v2336
      %v2350 = vmul.f32 %v353, %v2336
      %v2351 = vmul.f32 %v354, %v2336
      %v2352 = vmul.f32 %v355, %v2336
      %v2353 = vmul.f32 %v356, %v2336
      %v2354 = vmul.f32 %v357, %v2336
      %v2355 = vmul.f32 %v358, %v2336
      %v2356 = vmul.f32 %v359, %v2336
      %v2357 = vmul.f32 %v360, %v2336
      %v2358 = vmul.f32 %v361, %v2336
      %v2359 = vmul.f32 %v362, %v2336
      %v2360 = vmul.f32 %v363, %v2336
      %v2361 = vadd.f32 %v2312, %v2337
      %v2362 = vadd.f32 %v2313, %v2338
      %v2363 = vadd.f32 %v2314, %v2339
      %v2364 = vadd.f32 %v2315, %v2340
      %v2365 = vadd.f32 %v2316, %v2341
      %v2366 = vadd.f32 %v2317, %v2342
      %v2367 = vadd.f32 %v2318, %v2343
      %v2368 = vadd.f32 %v2319, %v2344
      %v2369 = vadd.f32 %v2320, %v2345
      %v2370 = vadd.f32 %v2321, %v2346
      %v2371 = vadd.f32 %v2322, %v2347
      %v2372 = vadd.f32 %v2323, %v2348
      %v2373 = vadd.f32 %v2324, %v2349
      %v2374 = vadd.f32 %v2325, %v2350
      %v2375 = vadd.f32 %v2326, %v2351
      %v2376 = vadd.f32 %v2327, %v2352
      %v2377 = vadd.f32 %v2328, %v2353
      %v2378 = vadd.f32 %v2329, %v2354
      %v2379 = vadd.f32 %v2330, %v2355
      %v2380 = vadd.f32 %v2331, %v2356
      %v2381 = vadd.f32 %v2332, %v2357
      %v2382 = vadd.f32 %v2333, %v2358
      %v2383 = vadd.f32 %v2334, %v2359
      %v2384 = vadd.f32 %v2335, %v2360
      %v2385 = vperm.slane %v379, 5
      %v2386 = vmul.f32 %v343, %v2385
      %v2387 = vmul.f32 %v344, %v2385
      %v2388 = vmul.f32 %v345, %v2385
      %v2389 = vmul.f32 %v346, %v2385
      %v2390 = vmul.f32 %v347, %v2385
      %v2391 = vmul.f32 %v348, %v2385
      %v2392 = vmul.f32 %v349, %v2385
      %v2393 = vmul.f32 %v350, %v2385
      %v2394 = vmul.f32 %v351, %v2385
      %v2395 = vmul.f32 %v352, %v2385
      %v2396 = vmul.f32 %v353, %v2385
      %v2397 = vmul.f32 %v354, %v2385
      %v2398 = vmul.f32 %v355, %v2385
      %v2399 = vmul.f32 %v356, %v2385
      %v2400 = vmul.f32 %v357, %v2385
      %v2401 = vmul.f32 %v358, %v2385
      %v2402 = vmul.f32 %v359, %v2385
      %v2403 = vmul.f32 %v360, %v2385
      %v2404 = vmul.f32 %v361, %v2385
      %v2405 = vmul.f32 %v362, %v2385
      %v2406 = vmul.f32 %v363, %v2385
      %v2407 = vmul.f32 %v364, %v2385
      %v2408 = vmul.f32 %v365, %v2385
      %v2409 = vmul.f32 %v366, %v2385
      %v2410 = vadd.f32 %v2361, %v2386
      %v2411 = vadd.f32 %v2362, %v2387
      %v2412 = vadd.f32 %v2363, %v2388
      %v2413 = vadd.f32 %v2364, %v2389
      %v2414 = vadd.f32 %v2365, %v2390
      %v2415 = vadd.f32 %v2366, %v2391
      %v2416 = vadd.f32 %v2367, %v2392
      %v2417 = vadd.f32 %v2368, %v2393
      %v2418 = vadd.f32 %v2369, %v2394
      %v2419 = vadd.f32 %v2370, %v2395
      %v2420 = vadd.f32 %v2371, %v2396
      %v2421 = vadd.f32 %v2372, %v2397
      %v2422 = vadd.f32 %v2373, %v2398
      %v2423 = vadd.f32 %v2374, %v2399
      %v2424 = vadd.f32 %v2375, %v2400
      %v2425 = vadd.f32 %v2376, %v2401
      %v2426 = vadd.f32 %v2377, %v2402
      %v2427 = vadd.f32 %v2378, %v2403
      %v2428 = vadd.f32 %v2379, %v2404
      %v2429 = vadd.f32 %v2380, %v2405
      %v2430 = vadd.f32 %v2381, %v2406
      %v2431 = vadd.f32 %v2382, %v2407
      %v2432 = vadd.f32 %v2383, %v2408
      %v2433 = vadd.f32 %v2384, %v2409
      %v2434 = vperm.slane %v380, 5
      %v2435 = vmul.f32 %v346, %v2434
      %v2436 = vmul.f32 %v347, %v2434
      %v2437 = vmul.f32 %v348, %v2434
      %v2438 = vmul.f32 %v349, %v2434
      %v2439 = vmul.f32 %v350, %v2434
      %v2440 = vmul.f32 %v351, %v2434
      %v2441 = vmul.f32 %v352, %v2434
      %v2442 = vmul.f32 %v353, %v2434
      %v2443 = vmul.f32 %v354, %v2434
      %v2444 = vmul.f32 %v355, %v2434
      %v2445 = vmul.f32 %v356, %v2434
      %v2446 = vmul.f32 %v357, %v2434
      %v2447 = vmul.f32 %v358, %v2434
      %v2448 = vmul.f32 %v359, %v2434
      %v2449 = vmul.f32 %v360, %v2434
      %v2450 = vmul.f32 %v361, %v2434
      %v2451 = vmul.f32 %v362, %v2434
      %v2452 = vmul.f32 %v363, %v2434
      %v2453 = vmul.f32 %v364, %v2434
      %v2454 = vmul.f32 %v365, %v2434
      %v2455 = vmul.f32 %v366, %v2434
      %v2456 = vmul.f32 %v367, %v2434
      %v2457 = vmul.f32 %v368, %v2434
      %v2458 = vmul.f32 %v369, %v2434
      %v2459 = vadd.f32 %v2410, %v2435
      %v2460 = vadd.f32 %v2411, %v2436
      %v2461 = vadd.f32 %v2412, %v2437
      %v2462 = vadd.f32 %v2413, %v2438
      %v2463 = vadd.f32 %v2414, %v2439
      %v2464 = vadd.f32 %v2415, %v2440
      %v2465 = vadd.f32 %v2416, %v2441
      %v2466 = vadd.f32 %v2417, %v2442
      %v2467 = vadd.f32 %v2418, %v2443
      %v2468 = vadd.f32 %v2419, %v2444
      %v2469 = vadd.f32 %v2420, %v2445
      %v2470 = vadd.f32 %v2421, %v2446
      %v2471 = vadd.f32 %v2422, %v2447
      %v2472 = vadd.f32 %v2423, %v2448
      %v2473 = vadd.f32 %v2424, %v2449
      %v2474 = vadd.f32 %v2425, %v2450
      %v2475 = vadd.f32 %v2426, %v2451
      %v2476 = vadd.f32 %v2427, %v2452
      %v2477 = vadd.f32 %v2428, %v2453
      %v2478 = vadd.f32 %v2429, %v2454
      %v2479 = vadd.f32 %v2430, %v2455
      %v2480 = vadd.f32 %v2431, %v2456
      %v2481 = vadd.f32 %v2432, %v2457
      %v2482 = vadd.f32 %v2433, %v2458
      %v2483 = vperm.slane %v381, 5
      %v2484 = vmul.f32 %v349, %v2483
      %v2485 = vmul.f32 %v350, %v2483
      %v2486 = vmul.f32 %v351, %v2483
      %v2487 = vmul.f32 %v352, %v2483
      %v2488 = vmul.f32 %v353, %v2483
      %v2489 = vmul.f32 %v354, %v2483
      %v2490 = vmul.f32 %v355, %v2483
      %v2491 = vmul.f32 %v356, %v2483
      %v2492 = vmul.f32 %v357, %v2483
      %v2493 = vmul.f32 %v358, %v2483
      %v2494 = vmul.f32 %v359, %v2483
      %v2495 = vmul.f32 %v360, %v2483
      %v2496 = vmul.f32 %v361, %v2483
      %v2497 = vmul.f32 %v362, %v2483
      %v2498 = vmul.f32 %v363, %v2483
      %v2499 = vmul.f32 %v364, %v2483
      %v2500 = vmul.f32 %v365, %v2483
      %v2501 = vmul.f32 %v366, %v2483
      %v2502 = vmul.f32 %v367, %v2483
      %v2503 = vmul.f32 %v368, %v2483
      %v2504 = vmul.f32 %v369, %v2483
      %v2505 = vmul.f32 %v370, %v2483
      %v2506 = vmul.f32 %v371, %v2483
      %v2507 = vmul.f32 %v372, %v2483
      %v2508 = vadd.f32 %v2459, %v2484
      %v2509 = vadd.f32 %v2460, %v2485
      %v2510 = vadd.f32 %v2461, %v2486
      %v2511 = vadd.f32 %v2462, %v2487
      %v2512 = vadd.f32 %v2463, %v2488
      %v2513 = vadd.f32 %v2464, %v2489
      %v2514 = vadd.f32 %v2465, %v2490
      %v2515 = vadd.f32 %v2466, %v2491
      %v2516 = vadd.f32 %v2467, %v2492
      %v2517 = vadd.f32 %v2468, %v2493
      %v2518 = vadd.f32 %v2469, %v2494
      %v2519 = vadd.f32 %v2470, %v2495
      %v2520 = vadd.f32 %v2471, %v2496
      %v2521 = vadd.f32 %v2472, %v2497
      %v2522 = vadd.f32 %v2473, %v2498
      %v2523 = vadd.f32 %v2474, %v2499
      %v2524 = vadd.f32 %v2475, %v2500
      %v2525 = vadd.f32 %v2476, %v2501
      %v2526 = vadd.f32 %v2477, %v2502
      %v2527 = vadd.f32 %v2478, %v2503
      %v2528 = vadd.f32 %v2479, %v2504
      %v2529 = vadd.f32 %v2480, %v2505
      %v2530 = vadd.f32 %v2481, %v2506
      %v2531 = vadd.f32 %v2482, %v2507
      %v2532 = vperm.slane %v382, 5
      %v2533 = vmul.f32 %v352, %v2532
      %v2534 = vmul.f32 %v353, %v2532
      %v2535 = vmul.f32 %v354, %v2532
      %v2536 = vmul.f32 %v355, %v2532
      %v2537 = vmul.f32 %v356, %v2532
      %v2538 = vmul.f32 %v357, %v2532
      %v2539 = vmul.f32 %v358, %v2532
      %v2540 = vmul.f32 %v359, %v2532
      %v2541 = vmul.f32 %v360, %v2532
      %v2542 = vmul.f32 %v361, %v2532
      %v2543 = vmul.f32 %v362, %v2532
      %v2544 = vmul.f32 %v363, %v2532
      %v2545 = vmul.f32 %v364, %v2532
      %v2546 = vmul.f32 %v365, %v2532
      %v2547 = vmul.f32 %v366, %v2532
      %v2548 = vmul.f32 %v367, %v2532
      %v2549 = vmul.f32 %v368, %v2532
      %v2550 = vmul.f32 %v369, %v2532
      %v2551 = vmul.f32 %v370, %v2532
      %v2552 = vmul.f32 %v371, %v2532
      %v2553 = vmul.f32 %v372, %v2532
      %v2554 = vmul.f32 %v373, %v2532
      %v2555 = vmul.f32 %v374, %v2532
      %v2556 = vmul.f32 %v375, %v2532
      %v2557 = vadd.f32 %v2508, %v2533
      %v2558 = vadd.f32 %v2509, %v2534
      %v2559 = vadd.f32 %v2510, %v2535
      %v2560 = vadd.f32 %v2511, %v2536
      %v2561 = vadd.f32 %v2512, %v2537
      %v2562 = vadd.f32 %v2513, %v2538
      %v2563 = vadd.f32 %v2514, %v2539
      %v2564 = vadd.f32 %v2515, %v2540
      %v2565 = vadd.f32 %v2516, %v2541
      %v2566 = vadd.f32 %v2517, %v2542
      %v2567 = vadd.f32 %v2518, %v2543
      %v2568 = vadd.f32 %v2519, %v2544
      %v2569 = vadd.f32 %v2520, %v2545
      %v2570 = vadd.f32 %v2521, %v2546
      %v2571 = vadd.f32 %v2522, %v2547
      %v2572 = vadd.f32 %v2523, %v2548
      %v2573 = vadd.f32 %v2524, %v2549
      %v2574 = vadd.f32 %v2525, %v2550
      %v2575 = vadd.f32 %v2526, %v2551
      %v2576 = vadd.f32 %v2527, %v2552
      %v2577 = vadd.f32 %v2528, %v2553
      %v2578 = vadd.f32 %v2529, %v2554
      %v2579 = vadd.f32 %v2530, %v2555
      %v2580 = vadd.f32 %v2531, %v2556
      %vm2605 = vcmask 1042432
      %v2606 = vrot.slane %v2557, 5
      %v2607 = vrot.slane %v2558, 5
      %v2608 = vsel %vm2605, %v2606, %v2607
      %v2609 = vrot.slane %v2559, 5
      %v2610 = vsel %vm2605, %v2607, %v2609
      %v2611 = vrot.slane %v2560, 5
      %v2612 = vrot.slane %v2561, 5
      %v2613 = vsel %vm2605, %v2611, %v2612
      %v2614 = vrot.slane %v2562, 5
      %v2615 = vsel %vm2605, %v2612, %v2614
      %v2616 = vrot.slane %v2563, 5
      %v2617 = vrot.slane %v2564, 5
      %v2618 = vsel %vm2605, %v2616, %v2617
      %v2619 = vrot.slane %v2565, 5
      %v2620 = vsel %vm2605, %v2617, %v2619
      %v2621 = vrot.slane %v2566, 5
      %v2622 = vrot.slane %v2567, 5
      %v2623 = vsel %vm2605, %v2621, %v2622
      %v2624 = vrot.slane %v2568, 5
      %v2625 = vsel %vm2605, %v2622, %v2624
      %v2626 = vrot.slane %v2569, 5
      %v2627 = vrot.slane %v2570, 5
      %v2628 = vsel %vm2605, %v2626, %v2627
      %v2629 = vrot.slane %v2571, 5
      %v2630 = vsel %vm2605, %v2627, %v2629
      %v2631 = vrot.slane %v2572, 5
      %v2632 = vrot.slane %v2573, 5
      %v2633 = vsel %vm2605, %v2631, %v2632
      %v2634 = vrot.slane %v2574, 5
      %v2635 = vsel %vm2605, %v2632, %v2634
      %v2636 = vrot.slane %v2575, 5
      %v2637 = vrot.slane %v2576, 5
      %v2638 = vsel %vm2605, %v2636, %v2637
      %v2639 = vrot.slane %v2577, 5
      %v2640 = vsel %vm2605, %v2637, %v2639
      %v2641 = vrot.slane %v2578, 5
      %v2642 = vrot.slane %v2579, 5
      %v2643 = vsel %vm2605, %v2641, %v2642
      %v2644 = vrot.slane %v2580, 5
      %v2645 = vsel %vm2605, %v2642, %v2644
      %v2662 = vadd.f32 %v2246, %v2608
      %v2663 = vadd.f32 %v2247, %v2610
      %v2664 = vadd.f32 %v2248, %v2613
      %v2665 = vadd.f32 %v2249, %v2615
      %v2666 = vadd.f32 %v2250, %v2618
      %v2667 = vadd.f32 %v2251, %v2620
      %v2668 = vadd.f32 %v2252, %v2623
      %v2669 = vadd.f32 %v2253, %v2625
      %v2670 = vadd.f32 %v2254, %v2628
      %v2671 = vadd.f32 %v2255, %v2630
      %v2672 = vadd.f32 %v2256, %v2633
      %v2673 = vadd.f32 %v2257, %v2635
      %v2674 = vadd.f32 %v2258, %v2638
      %v2675 = vadd.f32 %v2259, %v2640
      %v2676 = vadd.f32 %v2260, %v2643
      %v2677 = vadd.f32 %v2261, %v2645
      %v2678 = vperm.slane %v376, 6
      %v2679 = vmul.f32 %v334, %v2678
      %v2680 = vmul.f32 %v335, %v2678
      %v2681 = vmul.f32 %v336, %v2678
      %v2682 = vmul.f32 %v337, %v2678
      %v2683 = vmul.f32 %v338, %v2678
      %v2684 = vmul.f32 %v339, %v2678
      %v2685 = vmul.f32 %v340, %v2678
      %v2686 = vmul.f32 %v341, %v2678
      %v2687 = vmul.f32 %v342, %v2678
      %v2688 = vmul.f32 %v343, %v2678
      %v2689 = vmul.f32 %v344, %v2678
      %v2690 = vmul.f32 %v345, %v2678
      %v2691 = vmul.f32 %v346, %v2678
      %v2692 = vmul.f32 %v347, %v2678
      %v2693 = vmul.f32 %v348, %v2678
      %v2694 = vmul.f32 %v349, %v2678
      %v2695 = vmul.f32 %v350, %v2678
      %v2696 = vmul.f32 %v351, %v2678
      %v2697 = vmul.f32 %v352, %v2678
      %v2698 = vmul.f32 %v353, %v2678
      %v2699 = vmul.f32 %v354, %v2678
      %v2700 = vmul.f32 %v355, %v2678
      %v2701 = vmul.f32 %v356, %v2678
      %v2702 = vmul.f32 %v357, %v2678
      %v2703 = vperm.slane %v377, 6
      %v2704 = vmul.f32 %v337, %v2703
      %v2705 = vmul.f32 %v338, %v2703
      %v2706 = vmul.f32 %v339, %v2703
      %v2707 = vmul.f32 %v340, %v2703
      %v2708 = vmul.f32 %v341, %v2703
      %v2709 = vmul.f32 %v342, %v2703
      %v2710 = vmul.f32 %v343, %v2703
      %v2711 = vmul.f32 %v344, %v2703
      %v2712 = vmul.f32 %v345, %v2703
      %v2713 = vmul.f32 %v346, %v2703
      %v2714 = vmul.f32 %v347, %v2703
      %v2715 = vmul.f32 %v348, %v2703
      %v2716 = vmul.f32 %v349, %v2703
      %v2717 = vmul.f32 %v350, %v2703
      %v2718 = vmul.f32 %v351, %v2703
      %v2719 = vmul.f32 %v352, %v2703
      %v2720 = vmul.f32 %v353, %v2703
      %v2721 = vmul.f32 %v354, %v2703
      %v2722 = vmul.f32 %v355, %v2703
      %v2723 = vmul.f32 %v356, %v2703
      %v2724 = vmul.f32 %v357, %v2703
      %v2725 = vmul.f32 %v358, %v2703
      %v2726 = vmul.f32 %v359, %v2703
      %v2727 = vmul.f32 %v360, %v2703
      %v2728 = vadd.f32 %v2679, %v2704
      %v2729 = vadd.f32 %v2680, %v2705
      %v2730 = vadd.f32 %v2681, %v2706
      %v2731 = vadd.f32 %v2682, %v2707
      %v2732 = vadd.f32 %v2683, %v2708
      %v2733 = vadd.f32 %v2684, %v2709
      %v2734 = vadd.f32 %v2685, %v2710
      %v2735 = vadd.f32 %v2686, %v2711
      %v2736 = vadd.f32 %v2687, %v2712
      %v2737 = vadd.f32 %v2688, %v2713
      %v2738 = vadd.f32 %v2689, %v2714
      %v2739 = vadd.f32 %v2690, %v2715
      %v2740 = vadd.f32 %v2691, %v2716
      %v2741 = vadd.f32 %v2692, %v2717
      %v2742 = vadd.f32 %v2693, %v2718
      %v2743 = vadd.f32 %v2694, %v2719
      %v2744 = vadd.f32 %v2695, %v2720
      %v2745 = vadd.f32 %v2696, %v2721
      %v2746 = vadd.f32 %v2697, %v2722
      %v2747 = vadd.f32 %v2698, %v2723
      %v2748 = vadd.f32 %v2699, %v2724
      %v2749 = vadd.f32 %v2700, %v2725
      %v2750 = vadd.f32 %v2701, %v2726
      %v2751 = vadd.f32 %v2702, %v2727
      %v2752 = vperm.slane %v378, 6
      %v2753 = vmul.f32 %v340, %v2752
      %v2754 = vmul.f32 %v341, %v2752
      %v2755 = vmul.f32 %v342, %v2752
      %v2756 = vmul.f32 %v343, %v2752
      %v2757 = vmul.f32 %v344, %v2752
      %v2758 = vmul.f32 %v345, %v2752
      %v2759 = vmul.f32 %v346, %v2752
      %v2760 = vmul.f32 %v347, %v2752
      %v2761 = vmul.f32 %v348, %v2752
      %v2762 = vmul.f32 %v349, %v2752
      %v2763 = vmul.f32 %v350, %v2752
      %v2764 = vmul.f32 %v351, %v2752
      %v2765 = vmul.f32 %v352, %v2752
      %v2766 = vmul.f32 %v353, %v2752
      %v2767 = vmul.f32 %v354, %v2752
      %v2768 = vmul.f32 %v355, %v2752
      %v2769 = vmul.f32 %v356, %v2752
      %v2770 = vmul.f32 %v357, %v2752
      %v2771 = vmul.f32 %v358, %v2752
      %v2772 = vmul.f32 %v359, %v2752
      %v2773 = vmul.f32 %v360, %v2752
      %v2774 = vmul.f32 %v361, %v2752
      %v2775 = vmul.f32 %v362, %v2752
      %v2776 = vmul.f32 %v363, %v2752
      %v2777 = vadd.f32 %v2728, %v2753
      %v2778 = vadd.f32 %v2729, %v2754
      %v2779 = vadd.f32 %v2730, %v2755
      %v2780 = vadd.f32 %v2731, %v2756
      %v2781 = vadd.f32 %v2732, %v2757
      %v2782 = vadd.f32 %v2733, %v2758
      %v2783 = vadd.f32 %v2734, %v2759
      %v2784 = vadd.f32 %v2735, %v2760
      %v2785 = vadd.f32 %v2736, %v2761
      %v2786 = vadd.f32 %v2737, %v2762
      %v2787 = vadd.f32 %v2738, %v2763
      %v2788 = vadd.f32 %v2739, %v2764
      %v2789 = vadd.f32 %v2740, %v2765
      %v2790 = vadd.f32 %v2741, %v2766
      %v2791 = vadd.f32 %v2742, %v2767
      %v2792 = vadd.f32 %v2743, %v2768
      %v2793 = vadd.f32 %v2744, %v2769
      %v2794 = vadd.f32 %v2745, %v2770
      %v2795 = vadd.f32 %v2746, %v2771
      %v2796 = vadd.f32 %v2747, %v2772
      %v2797 = vadd.f32 %v2748, %v2773
      %v2798 = vadd.f32 %v2749, %v2774
      %v2799 = vadd.f32 %v2750, %v2775
      %v2800 = vadd.f32 %v2751, %v2776
      %v2801 = vperm.slane %v379, 6
      %v2802 = vmul.f32 %v343, %v2801
      %v2803 = vmul.f32 %v344, %v2801
      %v2804 = vmul.f32 %v345, %v2801
      %v2805 = vmul.f32 %v346, %v2801
      %v2806 = vmul.f32 %v347, %v2801
      %v2807 = vmul.f32 %v348, %v2801
      %v2808 = vmul.f32 %v349, %v2801
      %v2809 = vmul.f32 %v350, %v2801
      %v2810 = vmul.f32 %v351, %v2801
      %v2811 = vmul.f32 %v352, %v2801
      %v2812 = vmul.f32 %v353, %v2801
      %v2813 = vmul.f32 %v354, %v2801
      %v2814 = vmul.f32 %v355, %v2801
      %v2815 = vmul.f32 %v356, %v2801
      %v2816 = vmul.f32 %v357, %v2801
      %v2817 = vmul.f32 %v358, %v2801
      %v2818 = vmul.f32 %v359, %v2801
      %v2819 = vmul.f32 %v360, %v2801
      %v2820 = vmul.f32 %v361, %v2801
      %v2821 = vmul.f32 %v362, %v2801
      %v2822 = vmul.f32 %v363, %v2801
      %v2823 = vmul.f32 %v364, %v2801
      %v2824 = vmul.f32 %v365, %v2801
      %v2825 = vmul.f32 %v366, %v2801
      %v2826 = vadd.f32 %v2777, %v2802
      %v2827 = vadd.f32 %v2778, %v2803
      %v2828 = vadd.f32 %v2779, %v2804
      %v2829 = vadd.f32 %v2780, %v2805
      %v2830 = vadd.f32 %v2781, %v2806
      %v2831 = vadd.f32 %v2782, %v2807
      %v2832 = vadd.f32 %v2783, %v2808
      %v2833 = vadd.f32 %v2784, %v2809
      %v2834 = vadd.f32 %v2785, %v2810
      %v2835 = vadd.f32 %v2786, %v2811
      %v2836 = vadd.f32 %v2787, %v2812
      %v2837 = vadd.f32 %v2788, %v2813
      %v2838 = vadd.f32 %v2789, %v2814
      %v2839 = vadd.f32 %v2790, %v2815
      %v2840 = vadd.f32 %v2791, %v2816
      %v2841 = vadd.f32 %v2792, %v2817
      %v2842 = vadd.f32 %v2793, %v2818
      %v2843 = vadd.f32 %v2794, %v2819
      %v2844 = vadd.f32 %v2795, %v2820
      %v2845 = vadd.f32 %v2796, %v2821
      %v2846 = vadd.f32 %v2797, %v2822
      %v2847 = vadd.f32 %v2798, %v2823
      %v2848 = vadd.f32 %v2799, %v2824
      %v2849 = vadd.f32 %v2800, %v2825
      %v2850 = vperm.slane %v380, 6
      %v2851 = vmul.f32 %v346, %v2850
      %v2852 = vmul.f32 %v347, %v2850
      %v2853 = vmul.f32 %v348, %v2850
      %v2854 = vmul.f32 %v349, %v2850
      %v2855 = vmul.f32 %v350, %v2850
      %v2856 = vmul.f32 %v351, %v2850
      %v2857 = vmul.f32 %v352, %v2850
      %v2858 = vmul.f32 %v353, %v2850
      %v2859 = vmul.f32 %v354, %v2850
      %v2860 = vmul.f32 %v355, %v2850
      %v2861 = vmul.f32 %v356, %v2850
      %v2862 = vmul.f32 %v357, %v2850
      %v2863 = vmul.f32 %v358, %v2850
      %v2864 = vmul.f32 %v359, %v2850
      %v2865 = vmul.f32 %v360, %v2850
      %v2866 = vmul.f32 %v361, %v2850
      %v2867 = vmul.f32 %v362, %v2850
      %v2868 = vmul.f32 %v363, %v2850
      %v2869 = vmul.f32 %v364, %v2850
      %v2870 = vmul.f32 %v365, %v2850
      %v2871 = vmul.f32 %v366, %v2850
      %v2872 = vmul.f32 %v367, %v2850
      %v2873 = vmul.f32 %v368, %v2850
      %v2874 = vmul.f32 %v369, %v2850
      %v2875 = vadd.f32 %v2826, %v2851
      %v2876 = vadd.f32 %v2827, %v2852
      %v2877 = vadd.f32 %v2828, %v2853
      %v2878 = vadd.f32 %v2829, %v2854
      %v2879 = vadd.f32 %v2830, %v2855
      %v2880 = vadd.f32 %v2831, %v2856
      %v2881 = vadd.f32 %v2832, %v2857
      %v2882 = vadd.f32 %v2833, %v2858
      %v2883 = vadd.f32 %v2834, %v2859
      %v2884 = vadd.f32 %v2835, %v2860
      %v2885 = vadd.f32 %v2836, %v2861
      %v2886 = vadd.f32 %v2837, %v2862
      %v2887 = vadd.f32 %v2838, %v2863
      %v2888 = vadd.f32 %v2839, %v2864
      %v2889 = vadd.f32 %v2840, %v2865
      %v2890 = vadd.f32 %v2841, %v2866
      %v2891 = vadd.f32 %v2842, %v2867
      %v2892 = vadd.f32 %v2843, %v2868
      %v2893 = vadd.f32 %v2844, %v2869
      %v2894 = vadd.f32 %v2845, %v2870
      %v2895 = vadd.f32 %v2846, %v2871
      %v2896 = vadd.f32 %v2847, %v2872
      %v2897 = vadd.f32 %v2848, %v2873
      %v2898 = vadd.f32 %v2849, %v2874
      %v2899 = vperm.slane %v381, 6
      %v2900 = vmul.f32 %v349, %v2899
      %v2901 = vmul.f32 %v350, %v2899
      %v2902 = vmul.f32 %v351, %v2899
      %v2903 = vmul.f32 %v352, %v2899
      %v2904 = vmul.f32 %v353, %v2899
      %v2905 = vmul.f32 %v354, %v2899
      %v2906 = vmul.f32 %v355, %v2899
      %v2907 = vmul.f32 %v356, %v2899
      %v2908 = vmul.f32 %v357, %v2899
      %v2909 = vmul.f32 %v358, %v2899
      %v2910 = vmul.f32 %v359, %v2899
      %v2911 = vmul.f32 %v360, %v2899
      %v2912 = vmul.f32 %v361, %v2899
      %v2913 = vmul.f32 %v362, %v2899
      %v2914 = vmul.f32 %v363, %v2899
      %v2915 = vmul.f32 %v364, %v2899
      %v2916 = vmul.f32 %v365, %v2899
      %v2917 = vmul.f32 %v366, %v2899
      %v2918 = vmul.f32 %v367, %v2899
      %v2919 = vmul.f32 %v368, %v2899
      %v2920 = vmul.f32 %v369, %v2899
      %v2921 = vmul.f32 %v370, %v2899
      %v2922 = vmul.f32 %v371, %v2899
      %v2923 = vmul.f32 %v372, %v2899
      %v2924 = vadd.f32 %v2875, %v2900
      %v2925 = vadd.f32 %v2876, %v2901
      %v2926 = vadd.f32 %v2877, %v2902
      %v2927 = vadd.f32 %v2878, %v2903
      %v2928 = vadd.f32 %v2879, %v2904
      %v2929 = vadd.f32 %v2880, %v2905
      %v2930 = vadd.f32 %v2881, %v2906
      %v2931 = vadd.f32 %v2882, %v2907
      %v2932 = vadd.f32 %v2883, %v2908
      %v2933 = vadd.f32 %v2884, %v2909
      %v2934 = vadd.f32 %v2885, %v2910
      %v2935 = vadd.f32 %v2886, %v2911
      %v2936 = vadd.f32 %v2887, %v2912
      %v2937 = vadd.f32 %v2888, %v2913
      %v2938 = vadd.f32 %v2889, %v2914
      %v2939 = vadd.f32 %v2890, %v2915
      %v2940 = vadd.f32 %v2891, %v2916
      %v2941 = vadd.f32 %v2892, %v2917
      %v2942 = vadd.f32 %v2893, %v2918
      %v2943 = vadd.f32 %v2894, %v2919
      %v2944 = vadd.f32 %v2895, %v2920
      %v2945 = vadd.f32 %v2896, %v2921
      %v2946 = vadd.f32 %v2897, %v2922
      %v2947 = vadd.f32 %v2898, %v2923
      %v2948 = vperm.slane %v382, 6
      %v2949 = vmul.f32 %v352, %v2948
      %v2950 = vmul.f32 %v353, %v2948
      %v2951 = vmul.f32 %v354, %v2948
      %v2952 = vmul.f32 %v355, %v2948
      %v2953 = vmul.f32 %v356, %v2948
      %v2954 = vmul.f32 %v357, %v2948
      %v2955 = vmul.f32 %v358, %v2948
      %v2956 = vmul.f32 %v359, %v2948
      %v2957 = vmul.f32 %v360, %v2948
      %v2958 = vmul.f32 %v361, %v2948
      %v2959 = vmul.f32 %v362, %v2948
      %v2960 = vmul.f32 %v363, %v2948
      %v2961 = vmul.f32 %v364, %v2948
      %v2962 = vmul.f32 %v365, %v2948
      %v2963 = vmul.f32 %v366, %v2948
      %v2964 = vmul.f32 %v367, %v2948
      %v2965 = vmul.f32 %v368, %v2948
      %v2966 = vmul.f32 %v369, %v2948
      %v2967 = vmul.f32 %v370, %v2948
      %v2968 = vmul.f32 %v371, %v2948
      %v2969 = vmul.f32 %v372, %v2948
      %v2970 = vmul.f32 %v373, %v2948
      %v2971 = vmul.f32 %v374, %v2948
      %v2972 = vmul.f32 %v375, %v2948
      %v2973 = vadd.f32 %v2924, %v2949
      %v2974 = vadd.f32 %v2925, %v2950
      %v2975 = vadd.f32 %v2926, %v2951
      %v2976 = vadd.f32 %v2927, %v2952
      %v2977 = vadd.f32 %v2928, %v2953
      %v2978 = vadd.f32 %v2929, %v2954
      %v2979 = vadd.f32 %v2930, %v2955
      %v2980 = vadd.f32 %v2931, %v2956
      %v2981 = vadd.f32 %v2932, %v2957
      %v2982 = vadd.f32 %v2933, %v2958
      %v2983 = vadd.f32 %v2934, %v2959
      %v2984 = vadd.f32 %v2935, %v2960
      %v2985 = vadd.f32 %v2936, %v2961
      %v2986 = vadd.f32 %v2937, %v2962
      %v2987 = vadd.f32 %v2938, %v2963
      %v2988 = vadd.f32 %v2939, %v2964
      %v2989 = vadd.f32 %v2940, %v2965
      %v2990 = vadd.f32 %v2941, %v2966
      %v2991 = vadd.f32 %v2942, %v2967
      %v2992 = vadd.f32 %v2943, %v2968
      %v2993 = vadd.f32 %v2944, %v2969
      %v2994 = vadd.f32 %v2945, %v2970
      %v2995 = vadd.f32 %v2946, %v2971
      %v2996 = vadd.f32 %v2947, %v2972
      %vm3021 = vcmask 1041408
      %v3022 = vrot.slane %v2973, 6
      %v3023 = vrot.slane %v2974, 6
      %v3024 = vsel %vm3021, %v3022, %v3023
      %v3025 = vrot.slane %v2975, 6
      %v3026 = vsel %vm3021, %v3023, %v3025
      %v3027 = vrot.slane %v2976, 6
      %v3028 = vrot.slane %v2977, 6
      %v3029 = vsel %vm3021, %v3027, %v3028
      %v3030 = vrot.slane %v2978, 6
      %v3031 = vsel %vm3021, %v3028, %v3030
      %v3032 = vrot.slane %v2979, 6
      %v3033 = vrot.slane %v2980, 6
      %v3034 = vsel %vm3021, %v3032, %v3033
      %v3035 = vrot.slane %v2981, 6
      %v3036 = vsel %vm3021, %v3033, %v3035
      %v3037 = vrot.slane %v2982, 6
      %v3038 = vrot.slane %v2983, 6
      %v3039 = vsel %vm3021, %v3037, %v3038
      %v3040 = vrot.slane %v2984, 6
      %v3041 = vsel %vm3021, %v3038, %v3040
      %v3042 = vrot.slane %v2985, 6
      %v3043 = vrot.slane %v2986, 6
      %v3044 = vsel %vm3021, %v3042, %v3043
      %v3045 = vrot.slane %v2987, 6
      %v3046 = vsel %vm3021, %v3043, %v3045
      %v3047 = vrot.slane %v2988, 6
      %v3048 = vrot.slane %v2989, 6
      %v3049 = vsel %vm3021, %v3047, %v3048
      %v3050 = vrot.slane %v2990, 6
      %v3051 = vsel %vm3021, %v3048, %v3050
      %v3052 = vrot.slane %v2991, 6
      %v3053 = vrot.slane %v2992, 6
      %v3054 = vsel %vm3021, %v3052, %v3053
      %v3055 = vrot.slane %v2993, 6
      %v3056 = vsel %vm3021, %v3053, %v3055
      %v3057 = vrot.slane %v2994, 6
      %v3058 = vrot.slane %v2995, 6
      %v3059 = vsel %vm3021, %v3057, %v3058
      %v3060 = vrot.slane %v2996, 6
      %v3061 = vsel %vm3021, %v3058, %v3060
      %v3078 = vadd.f32 %v2662, %v3024
      %v3079 = vadd.f32 %v2663, %v3026
      %v3080 = vadd.f32 %v2664, %v3029
      %v3081 = vadd.f32 %v2665, %v3031
      %v3082 = vadd.f32 %v2666, %v3034
      %v3083 = vadd.f32 %v2667, %v3036
      %v3084 = vadd.f32 %v2668, %v3039
      %v3085 = vadd.f32 %v2669, %v3041
      %v3086 = vadd.f32 %v2670, %v3044
      %v3087 = vadd.f32 %v2671, %v3046
      %v3088 = vadd.f32 %v2672, %v3049
      %v3089 = vadd.f32 %v2673, %v3051
      %v3090 = vadd.f32 %v2674, %v3054
      %v3091 = vadd.f32 %v2675, %v3056
      %v3092 = vadd.f32 %v2676, %v3059
      %v3093 = vadd.f32 %v2677, %v3061
      %v3094 = vlaneseq
      %v3095 = vand.u32 %v3094, 127
      %vm3096 = vcmp.lt.s32.totalorder %v3095, 4
      %3097 = vadd.xlane.f32.xlu0 %v3078
      %v3098 = vpop.xlane.xlu0 %3097
      %3099 = vadd.xlane.f32.xlu0 %v3079
      %v3100 = vpop.xlane.xlu0 %3099
      %3101 = vadd.xlane.f32.xlu0 %v3080
      %v3102 = vpop.xlane.xlu0 %3101
      %3103 = vadd.xlane.f32.xlu0 %v3081
      %v3104 = vpop.xlane.xlu0 %3103
      %3105 = vadd.xlane.f32.xlu0 %v3082
      %v3106 = vpop.xlane.xlu0 %3105
      %3107 = vadd.xlane.f32.xlu0 %v3083
      %v3108 = vpop.xlane.xlu0 %3107
      %3109 = vadd.xlane.f32.xlu0 %v3084
      %v3110 = vpop.xlane.xlu0 %3109
      %3111 = vadd.xlane.f32.xlu0 %v3085
      %v3112 = vpop.xlane.xlu0 %3111
      %3113 = vadd.xlane.f32.xlu0 %v3086
      %v3114 = vpop.xlane.xlu0 %3113
      %3115 = vadd.xlane.f32.xlu0 %v3087
      %v3116 = vpop.xlane.xlu0 %3115
      %3117 = vadd.xlane.f32.xlu0 %v3088
      %v3118 = vpop.xlane.xlu0 %3117
      %3119 = vadd.xlane.f32.xlu0 %v3089
      %v3120 = vpop.xlane.xlu0 %3119
      %3121 = vadd.xlane.f32.xlu0 %v3090
      %v3122 = vpop.xlane.xlu0 %3121
      %3123 = vadd.xlane.f32.xlu0 %v3091
      %v3124 = vpop.xlane.xlu0 %3123
      %3125 = vadd.xlane.f32.xlu0 %v3092
      %v3126 = vpop.xlane.xlu0 %3125
      %3127 = vadd.xlane.f32.xlu0 %v3093
      %v3128 = vpop.xlane.xlu0 %3127
      %v3129 = vmul.f32 %v3098, 0.25
      %v3130 = vmul.f32 %v3100, 0.25
      %v3131 = vmul.f32 %v3102, 0.25
      %v3132 = vmul.f32 %v3104, 0.25
      %v3133 = vmul.f32 %v3106, 0.25
      %v3134 = vmul.f32 %v3108, 0.25
      %v3135 = vmul.f32 %v3110, 0.25
      %v3136 = vmul.f32 %v3112, 0.25
      %v3137 = vmul.f32 %v3114, 0.25
      %v3138 = vmul.f32 %v3116, 0.25
      %v3139 = vmul.f32 %v3118, 0.25
      %v3140 = vmul.f32 %v3120, 0.25
      %v3141 = vmul.f32 %v3122, 0.25
      %v3142 = vmul.f32 %v3124, 0.25
      %v3143 = vmul.f32 %v3126, 0.25
      %v3144 = vmul.f32 %v3128, 0.25
      %v3145 = vsub.f32 %v3078, %v3129
      %v3146 = vsub.f32 %v3079, %v3130
      %v3147 = vsub.f32 %v3080, %v3131
      %v3148 = vsub.f32 %v3081, %v3132
      %v3149 = vsub.f32 %v3082, %v3133
      %v3150 = vsub.f32 %v3083, %v3134
      %v3151 = vsub.f32 %v3084, %v3135
      %v3152 = vsub.f32 %v3085, %v3136
      %v3153 = vsub.f32 %v3086, %v3137
      %v3154 = vsub.f32 %v3087, %v3138
      %v3155 = vsub.f32 %v3088, %v3139
      %v3156 = vsub.f32 %v3089, %v3140
      %v3157 = vsub.f32 %v3090, %v3141
      %v3158 = vsub.f32 %v3091, %v3142
      %v3159 = vsub.f32 %v3092, %v3143
      %v3160 = vsub.f32 %v3093, %v3144
      %v3161 = vmul.f32 %v3145, %v3145
      %v3162 = vmul.f32 %v3146, %v3146
      %v3163 = vmul.f32 %v3147, %v3147
      %v3164 = vmul.f32 %v3148, %v3148
      %v3165 = vmul.f32 %v3149, %v3149
      %v3166 = vmul.f32 %v3150, %v3150
      %v3167 = vmul.f32 %v3151, %v3151
      %v3168 = vmul.f32 %v3152, %v3152
      %v3169 = vmul.f32 %v3153, %v3153
      %v3170 = vmul.f32 %v3154, %v3154
      %v3171 = vmul.f32 %v3155, %v3155
      %v3172 = vmul.f32 %v3156, %v3156
      %v3173 = vmul.f32 %v3157, %v3157
      %v3174 = vmul.f32 %v3158, %v3158
      %v3175 = vmul.f32 %v3159, %v3159
      %v3176 = vmul.f32 %v3160, %v3160
      %v3177 = vsel %vm3096, 1, 0
      %vm3178 = vcmp.eq.s32.totalorder %v3177, 1
      %v3179 = vsel %vm3178, %v3161, 0.0
      %v3180 = vsel %vm3178, %v3162, 0.0
      %v3181 = vsel %vm3178, %v3163, 0.0
      %v3182 = vsel %vm3178, %v3164, 0.0
      %v3183 = vsel %vm3178, %v3165, 0.0
      %v3184 = vsel %vm3178, %v3166, 0.0
      %v3185 = vsel %vm3178, %v3167, 0.0
      %v3186 = vsel %vm3178, %v3168, 0.0
      %v3187 = vsel %vm3178, %v3169, 0.0
      %v3188 = vsel %vm3178, %v3170, 0.0
      %v3189 = vsel %vm3178, %v3171, 0.0
      %v3190 = vsel %vm3178, %v3172, 0.0
      %v3191 = vsel %vm3178, %v3173, 0.0
      %v3192 = vsel %vm3178, %v3174, 0.0
      %v3193 = vsel %vm3178, %v3175, 0.0
      %v3194 = vsel %vm3178, %v3176, 0.0
      %3195 = vadd.xlane.f32.xlu0 %v3179
      %v3196 = vpop.xlane.xlu0 %3195
      %3197 = vadd.xlane.f32.xlu0 %v3180
      %v3198 = vpop.xlane.xlu0 %3197
      %3199 = vadd.xlane.f32.xlu0 %v3181
      %v3200 = vpop.xlane.xlu0 %3199
      %3201 = vadd.xlane.f32.xlu0 %v3182
      %v3202 = vpop.xlane.xlu0 %3201
      %3203 = vadd.xlane.f32.xlu0 %v3183
      %v3204 = vpop.xlane.xlu0 %3203
      %3205 = vadd.xlane.f32.xlu0 %v3184
      %v3206 = vpop.xlane.xlu0 %3205
      %3207 = vadd.xlane.f32.xlu0 %v3185
      %v3208 = vpop.xlane.xlu0 %3207
      %3209 = vadd.xlane.f32.xlu0 %v3186
      %v3210 = vpop.xlane.xlu0 %3209
      %3211 = vadd.xlane.f32.xlu0 %v3187
      %v3212 = vpop.xlane.xlu0 %3211
      %3213 = vadd.xlane.f32.xlu0 %v3188
      %v3214 = vpop.xlane.xlu0 %3213
      %3215 = vadd.xlane.f32.xlu0 %v3189
      %v3216 = vpop.xlane.xlu0 %3215
      %3217 = vadd.xlane.f32.xlu0 %v3190
      %v3218 = vpop.xlane.xlu0 %3217
      %3219 = vadd.xlane.f32.xlu0 %v3191
      %v3220 = vpop.xlane.xlu0 %3219
      %3221 = vadd.xlane.f32.xlu0 %v3192
      %v3222 = vpop.xlane.xlu0 %3221
      %3223 = vadd.xlane.f32.xlu0 %v3193
      %v3224 = vpop.xlane.xlu0 %3223
      %3225 = vadd.xlane.f32.xlu0 %v3194
      %v3226 = vpop.xlane.xlu0 %3225
      %v3227 = vmul.f32 %v3196, 0.25
      %v3228 = vmul.f32 %v3198, 0.25
      %v3229 = vmul.f32 %v3200, 0.25
      %v3230 = vmul.f32 %v3202, 0.25
      %v3231 = vmul.f32 %v3204, 0.25
      %v3232 = vmul.f32 %v3206, 0.25
      %v3233 = vmul.f32 %v3208, 0.25
      %v3234 = vmul.f32 %v3210, 0.25
      %v3235 = vmul.f32 %v3212, 0.25
      %v3236 = vmul.f32 %v3214, 0.25
      %v3237 = vmul.f32 %v3216, 0.25
      %v3238 = vmul.f32 %v3218, 0.25
      %v3239 = vmul.f32 %v3220, 0.25
      %v3240 = vmul.f32 %v3222, 0.25
      %v3241 = vmul.f32 %v3224, 0.25
      %v3242 = vmul.f32 %v3226, 0.25
      %v3243 = vadd.f32 %v3227, 1e-06
      %v3244 = vadd.f32 %v3228, 1e-06
      %v3245 = vadd.f32 %v3229, 1e-06
      %v3246 = vadd.f32 %v3230, 1e-06
      %v3247 = vadd.f32 %v3231, 1e-06
      %v3248 = vadd.f32 %v3232, 1e-06
      %v3249 = vadd.f32 %v3233, 1e-06
      %v3250 = vadd.f32 %v3234, 1e-06
      %v3251 = vadd.f32 %v3235, 1e-06
      %v3252 = vadd.f32 %v3236, 1e-06
      %v3253 = vadd.f32 %v3237, 1e-06
      %v3254 = vadd.f32 %v3238, 1e-06
      %v3255 = vadd.f32 %v3239, 1e-06
      %v3256 = vadd.f32 %v3240, 1e-06
      %v3257 = vadd.f32 %v3241, 1e-06
      %v3258 = vadd.f32 %v3242, 1e-06
      %v3259 = vrsqrt.pop %v3243
      %v3260 = vmul.f32 %v3259, %v3243
      %v3261 = vmul.f32 %v3260, %v3259
      %v3262 = vmul.f32 0.5, %v3261
      %v3263 = vsub.f32 1.5, %v3262
      %v3264 = vmul.f32 %v3259, %v3263
      %vm3265 = vweird.f32 %v3243
      %vm3266 = vweird.f32 %v3259
      %vm3267 = vmor %vm3265, %vm3266
      %v3268 = vsel %vm3267, %v3259, %v3264
      %v3269 = vrsqrt.pop %v3244
      %v3270 = vmul.f32 %v3269, %v3244
      %v3271 = vmul.f32 %v3270, %v3269
      %v3272 = vmul.f32 0.5, %v3271
      %v3273 = vsub.f32 1.5, %v3272
      %v3274 = vmul.f32 %v3269, %v3273
      %vm3275 = vweird.f32 %v3244
      %vm3276 = vweird.f32 %v3269
      %vm3277 = vmor %vm3275, %vm3276
      %v3278 = vsel %vm3277, %v3269, %v3274
      %v3279 = vrsqrt.pop %v3245
      %v3280 = vmul.f32 %v3279, %v3245
      %v3281 = vmul.f32 %v3280, %v3279
      %v3282 = vmul.f32 0.5, %v3281
      %v3283 = vsub.f32 1.5, %v3282
      %v3284 = vmul.f32 %v3279, %v3283
      %vm3285 = vweird.f32 %v3245
      %vm3286 = vweird.f32 %v3279
      %vm3287 = vmor %vm3285, %vm3286
      %v3288 = vsel %vm3287, %v3279, %v3284
      %v3289 = vrsqrt.pop %v3246
      %v3290 = vmul.f32 %v3289, %v3246
      %v3291 = vmul.f32 %v3290, %v3289
      %v3292 = vmul.f32 0.5, %v3291
      %v3293 = vsub.f32 1.5, %v3292
      %v3294 = vmul.f32 %v3289, %v3293
      %vm3295 = vweird.f32 %v3246
      %vm3296 = vweird.f32 %v3289
      %vm3297 = vmor %vm3295, %vm3296
      %v3298 = vsel %vm3297, %v3289, %v3294
      %v3299 = vrsqrt.pop %v3247
      %v3300 = vmul.f32 %v3299, %v3247
      %v3301 = vmul.f32 %v3300, %v3299
      %v3302 = vmul.f32 0.5, %v3301
      %v3303 = vsub.f32 1.5, %v3302
      %v3304 = vmul.f32 %v3299, %v3303
      %vm3305 = vweird.f32 %v3247
      %vm3306 = vweird.f32 %v3299
      %vm3307 = vmor %vm3305, %vm3306
      %v3308 = vsel %vm3307, %v3299, %v3304
      %v3309 = vrsqrt.pop %v3248
      %v3310 = vmul.f32 %v3309, %v3248
      %v3311 = vmul.f32 %v3310, %v3309
      %v3312 = vmul.f32 0.5, %v3311
      %v3313 = vsub.f32 1.5, %v3312
      %v3314 = vmul.f32 %v3309, %v3313
      %vm3315 = vweird.f32 %v3248
      %vm3316 = vweird.f32 %v3309
      %vm3317 = vmor %vm3315, %vm3316
      %v3318 = vsel %vm3317, %v3309, %v3314
      %v3319 = vrsqrt.pop %v3249
      %v3320 = vmul.f32 %v3319, %v3249
      %v3321 = vmul.f32 %v3320, %v3319
      %v3322 = vmul.f32 0.5, %v3321
      %v3323 = vsub.f32 1.5, %v3322
      %v3324 = vmul.f32 %v3319, %v3323
      %vm3325 = vweird.f32 %v3249
      %vm3326 = vweird.f32 %v3319
      %vm3327 = vmor %vm3325, %vm3326
      %v3328 = vsel %vm3327, %v3319, %v3324
      %v3329 = vrsqrt.pop %v3250
      %v3330 = vmul.f32 %v3329, %v3250
      %v3331 = vmul.f32 %v3330, %v3329
      %v3332 = vmul.f32 0.5, %v3331
      %v3333 = vsub.f32 1.5, %v3332
      %v3334 = vmul.f32 %v3329, %v3333
      %vm3335 = vweird.f32 %v3250
      %vm3336 = vweird.f32 %v3329
      %vm3337 = vmor %vm3335, %vm3336
      %v3338 = vsel %vm3337, %v3329, %v3334
      %v3339 = vrsqrt.pop %v3251
      %v3340 = vmul.f32 %v3339, %v3251
      %v3341 = vmul.f32 %v3340, %v3339
      %v3342 = vmul.f32 0.5, %v3341
      %v3343 = vsub.f32 1.5, %v3342
      %v3344 = vmul.f32 %v3339, %v3343
      %vm3345 = vweird.f32 %v3251
      %vm3346 = vweird.f32 %v3339
      %vm3347 = vmor %vm3345, %vm3346
      %v3348 = vsel %vm3347, %v3339, %v3344
      %v3349 = vrsqrt.pop %v3252
      %v3350 = vmul.f32 %v3349, %v3252
      %v3351 = vmul.f32 %v3350, %v3349
      %v3352 = vmul.f32 0.5, %v3351
      %v3353 = vsub.f32 1.5, %v3352
      %v3354 = vmul.f32 %v3349, %v3353
      %vm3355 = vweird.f32 %v3252
      %vm3356 = vweird.f32 %v3349
      %vm3357 = vmor %vm3355, %vm3356
      %v3358 = vsel %vm3357, %v3349, %v3354
      %v3359 = vrsqrt.pop %v3253
      %v3360 = vmul.f32 %v3359, %v3253
      %v3361 = vmul.f32 %v3360, %v3359
      %v3362 = vmul.f32 0.5, %v3361
      %v3363 = vsub.f32 1.5, %v3362
      %v3364 = vmul.f32 %v3359, %v3363
      %vm3365 = vweird.f32 %v3253
      %vm3366 = vweird.f32 %v3359
      %vm3367 = vmor %vm3365, %vm3366
      %v3368 = vsel %vm3367, %v3359, %v3364
      %v3369 = vrsqrt.pop %v3254
      %v3370 = vmul.f32 %v3369, %v3254
      %v3371 = vmul.f32 %v3370, %v3369
      %v3372 = vmul.f32 0.5, %v3371
      %v3373 = vsub.f32 1.5, %v3372
      %v3374 = vmul.f32 %v3369, %v3373
      %vm3375 = vweird.f32 %v3254
      %vm3376 = vweird.f32 %v3369
      %vm3377 = vmor %vm3375, %vm3376
      %v3378 = vsel %vm3377, %v3369, %v3374
      %v3379 = vrsqrt.pop %v3255
      %v3380 = vmul.f32 %v3379, %v3255
      %v3381 = vmul.f32 %v3380, %v3379
      %v3382 = vmul.f32 0.5, %v3381
      %v3383 = vsub.f32 1.5, %v3382
      %v3384 = vmul.f32 %v3379, %v3383
      %vm3385 = vweird.f32 %v3255
      %vm3386 = vweird.f32 %v3379
      %vm3387 = vmor %vm3385, %vm3386
      %v3388 = vsel %vm3387, %v3379, %v3384
      %v3389 = vrsqrt.pop %v3256
      %v3390 = vmul.f32 %v3389, %v3256
      %v3391 = vmul.f32 %v3390, %v3389
      %v3392 = vmul.f32 0.5, %v3391
      %v3393 = vsub.f32 1.5, %v3392
      %v3394 = vmul.f32 %v3389, %v3393
      %vm3395 = vweird.f32 %v3256
      %vm3396 = vweird.f32 %v3389
      %vm3397 = vmor %vm3395, %vm3396
      %v3398 = vsel %vm3397, %v3389, %v3394
      %v3399 = vrsqrt.pop %v3257
      %v3400 = vmul.f32 %v3399, %v3257
      %v3401 = vmul.f32 %v3400, %v3399
      %v3402 = vmul.f32 0.5, %v3401
      %v3403 = vsub.f32 1.5, %v3402
      %v3404 = vmul.f32 %v3399, %v3403
      %vm3405 = vweird.f32 %v3257
      %vm3406 = vweird.f32 %v3399
      %vm3407 = vmor %vm3405, %vm3406
      %v3408 = vsel %vm3407, %v3399, %v3404
      %v3409 = vrsqrt.pop %v3258
      %v3410 = vmul.f32 %v3409, %v3258
      %v3411 = vmul.f32 %v3410, %v3409
      %v3412 = vmul.f32 0.5, %v3411
      %v3413 = vsub.f32 1.5, %v3412
      %v3414 = vmul.f32 %v3409, %v3413
      %vm3415 = vweird.f32 %v3258
      %vm3416 = vweird.f32 %v3409
      %vm3417 = vmor %vm3415, %vm3416
      %v3418 = vsel %vm3417, %v3409, %v3414
      %v3419 = vmul.f32 %v3145, %v3268
      %v3420 = vmul.f32 %v3146, %v3278
      %v3421 = vmul.f32 %v3147, %v3288
      %v3422 = vmul.f32 %v3148, %v3298
      %v3423 = vmul.f32 %v3149, %v3308
      %v3424 = vmul.f32 %v3150, %v3318
      %v3425 = vmul.f32 %v3151, %v3328
      %v3426 = vmul.f32 %v3152, %v3338
      %v3427 = vmul.f32 %v3153, %v3348
      %v3428 = vmul.f32 %v3154, %v3358
      %v3429 = vmul.f32 %v3155, %v3368
      %v3430 = vmul.f32 %v3156, %v3378
      %v3431 = vmul.f32 %v3157, %v3388
      %v3432 = vmul.f32 %v3158, %v3398
      %v3433 = vmul.f32 %v3159, %v3408
      %v3434 = vmul.f32 %v3160, %v3418
      %v3435 = vld [vmem:[%s2] sm:$0x1]
      %v3437 = vperm.slane %v3435, 0
      %v3439 = vmul.f32 %v3419, %v3437
      %v3440 = vmul.f32 %v3420, %v3437
      %v3441 = vmul.f32 %v3421, %v3437
      %v3442 = vmul.f32 %v3422, %v3437
      %v3443 = vmul.f32 %v3423, %v3437
      %v3444 = vmul.f32 %v3424, %v3437
      %v3445 = vmul.f32 %v3425, %v3437
      %v3446 = vmul.f32 %v3426, %v3437
      %v3447 = vmul.f32 %v3427, %v3437
      %v3448 = vmul.f32 %v3428, %v3437
      %v3449 = vmul.f32 %v3429, %v3437
      %v3450 = vmul.f32 %v3430, %v3437
      %v3451 = vmul.f32 %v3431, %v3437
      %v3452 = vmul.f32 %v3432, %v3437
      %v3453 = vmul.f32 %v3433, %v3437
      %v3454 = vmul.f32 %v3434, %v3437
      %v3455 = vld [vmem:[%s3] sm:$0x1]
      %v3457 = vperm.slane %v3455, 0
      %v3459 = vadd.f32 %v3439, %v3457
      %v3460 = vadd.f32 %v3440, %v3457
      %v3461 = vadd.f32 %v3441, %v3457
      %v3462 = vadd.f32 %v3442, %v3457
      %v3463 = vadd.f32 %v3443, %v3457
      %v3464 = vadd.f32 %v3444, %v3457
      %v3465 = vadd.f32 %v3445, %v3457
      %v3466 = vadd.f32 %v3446, %v3457
      %v3467 = vadd.f32 %v3447, %v3457
      %v3468 = vadd.f32 %v3448, %v3457
      %v3469 = vadd.f32 %v3449, %v3457
      %v3470 = vadd.f32 %v3450, %v3457
      %v3471 = vadd.f32 %v3451, %v3457
      %v3472 = vadd.f32 %v3452, %v3457
      %v3473 = vadd.f32 %v3453, %v3457
      %v3474 = vadd.f32 %v3454, %v3457
      %v3475 = vpack.c.bf16 %v3460, %v3459
      %v3476 = vpack.c.bf16 %v3462, %v3461
      %v3477 = vpack.c.bf16 %v3464, %v3463
      %v3478 = vpack.c.bf16 %v3466, %v3465
      %v3479 = vpack.c.bf16 %v3468, %v3467
      %v3480 = vpack.c.bf16 %v3470, %v3469
      %v3481 = vpack.c.bf16 %v3472, %v3471
      %v3482 = vpack.c.bf16 %v3474, %v3473
      %v3483 = vld [vmem:[%s4] sm:$0xf]
      %v3484 = vld [vmem:[%s4 + $0x4] sm:$0xf]
      %v3485 = vld [vmem:[%s4 + $0x8] sm:$0xf]
      %v3486 = vld [vmem:[%s4 + $0xc] sm:$0xf]
      %v3487 = vld [vmem:[%s4 + $0x10] sm:$0xf]
      %v3488 = vld [vmem:[%s4 + $0x14] sm:$0xf]
      %v3489 = vld [vmem:[%s4 + $0x18] sm:$0xf]
      %v3490 = vld [vmem:[%s4 + $0x1c] sm:$0xf]
      %v3491 = vld [vmem:[%s4 + $0x20] sm:$0xf]
      %v3492 = vld [vmem:[%s4 + $0x24] sm:$0xf]
      %v3493 = vld [vmem:[%s4 + $0x28] sm:$0xf]
      %v3494 = vld [vmem:[%s4 + $0x2c] sm:$0xf]
      %v3495 = vld [vmem:[%s4 + $0x30] sm:$0xf]
      %v3496 = vld [vmem:[%s4 + $0x34] sm:$0xf]
      %v3497 = vld [vmem:[%s4 + $0x38] sm:$0xf]
      %v3498 = vld [vmem:[%s4 + $0x3c] sm:$0xf]
      %v3499 = vld [vmem:[%s5] sm:$0x1]
      %v3501 = vperm.slane %v3499, 0
      %v3519 = vunpack.c.l.b16 %v3483
      %v3520 = vunpack.c.l.b16 %v3484
      %v3521 = vunpack.c.l.b16 %v3485
      %v3522 = vunpack.c.l.b16 %v3486
      %v3523 = vunpack.c.l.b16 %v3487
      %v3524 = vunpack.c.l.b16 %v3488
      %v3525 = vunpack.c.l.b16 %v3489
      %v3526 = vunpack.c.l.b16 %v3490
      %v3527 = vunpack.c.l.b16 %v3491
      %v3528 = vunpack.c.l.b16 %v3492
      %v3529 = vunpack.c.l.b16 %v3493
      %v3530 = vunpack.c.l.b16 %v3494
      %v3531 = vunpack.c.l.b16 %v3495
      %v3532 = vunpack.c.l.b16 %v3496
      %v3533 = vunpack.c.l.b16 %v3497
      %v3534 = vunpack.c.l.b16 %v3498
      %v3535 = vpack.c.b16 %v3520, %v3519
      %v3536 = vpack.c.b16 %v3522, %v3521
      %v3537 = vpack.c.b16 %v3524, %v3523
      %v3538 = vpack.c.b16 %v3526, %v3525
      %v3539 = vpack.c.b16 %v3528, %v3527
      %v3540 = vpack.c.b16 %v3530, %v3529
      %v3541 = vpack.c.b16 %v3532, %v3531
      %v3542 = vpack.c.b16 %v3534, %v3533
      %3551 = vmatpush.bf16.msra.mxu0 %v3542
      %3552 = vmatpush.bf16.msra.mxu0 %v3541
      %3553 = vmatpush.bf16.msra.mxu0 %v3540
      %3554 = vmatpush.bf16.msra.mxu0 %v3539
      %3555 = vmatpush.bf16.msra.mxu0 %v3538
      %3556 = vmatpush.bf16.msra.mxu0 %v3537
      %3557 = vmatpush.bf16.msra.mxu0 %v3536
      %3558 = vmatpush.bf16.msra.mxu0 %v3535
      %3559 = vmatmul.bf16.gmra.mxu0 %v3475
      %v3560 = vpop.f32.mrf.mxu0
      %v3561 = vadd.f32 %v3501, %v3560
      %v3562 = vpop.f32.mrf.mxu0
      %v3563 = vadd.f32 %v3501, %v3562
      %3564 = vmatmul.bf16.gmra.mxu0 %v3476
      %v3565 = vpop.f32.mrf.mxu0
      %v3566 = vadd.f32 %v3501, %v3565
      %v3567 = vpop.f32.mrf.mxu0
      %v3568 = vadd.f32 %v3501, %v3567
      %3569 = vmatmul.bf16.gmra.mxu0 %v3477
      %v3570 = vpop.f32.mrf.mxu0
      %v3571 = vadd.f32 %v3501, %v3570
      %v3572 = vpop.f32.mrf.mxu0
      %v3573 = vadd.f32 %v3501, %v3572
      %3574 = vmatmul.bf16.gmra.mxu0 %v3478
      %v3575 = vpop.f32.mrf.mxu0
      %v3576 = vadd.f32 %v3501, %v3575
      %v3577 = vpop.f32.mrf.mxu0
      %v3578 = vadd.f32 %v3501, %v3577
      %3579 = vmatmul.bf16.gmra.mxu0 %v3479
      %v3580 = vpop.f32.mrf.mxu0
      %v3581 = vadd.f32 %v3501, %v3580
      %v3582 = vpop.f32.mrf.mxu0
      %v3583 = vadd.f32 %v3501, %v3582
      %3584 = vmatmul.bf16.gmra.mxu0 %v3480
      %v3585 = vpop.f32.mrf.mxu0
      %v3586 = vadd.f32 %v3501, %v3585
      %v3587 = vpop.f32.mrf.mxu0
      %v3588 = vadd.f32 %v3501, %v3587
      %3589 = vmatmul.bf16.gmra.mxu0 %v3481
      %v3590 = vpop.f32.mrf.mxu0
      %v3591 = vadd.f32 %v3501, %v3590
      %v3592 = vpop.f32.mrf.mxu0
      %v3593 = vadd.f32 %v3501, %v3592
      %3594 = vmatmul.bf16.gmra.mxu0 %v3482
      %v3595 = vpop.f32.mrf.mxu0
      %v3596 = vadd.f32 %v3501, %v3595
      %v3597 = vpop.f32.mrf.mxu0
      %v3598 = vadd.f32 %v3501, %v3597
      %3599 = vdwg.mxu0
      %v3600 = vmul.f32 %v3561, 0.5
      %v3601 = vmul.f32 %v3563, 0.5
      %v3602 = vmul.f32 %v3566, 0.5
      %v3603 = vmul.f32 %v3568, 0.5
      %v3604 = vmul.f32 %v3571, 0.5
      %v3605 = vmul.f32 %v3573, 0.5
      %v3606 = vmul.f32 %v3576, 0.5
      %v3607 = vmul.f32 %v3578, 0.5
      %v3608 = vmul.f32 %v3581, 0.5
      %v3609 = vmul.f32 %v3583, 0.5
      %v3610 = vmul.f32 %v3586, 0.5
      %v3611 = vmul.f32 %v3588, 0.5
      %v3612 = vmul.f32 %v3591, 0.5
      %v3613 = vmul.f32 %v3593, 0.5
      %v3614 = vmul.f32 %v3596, 0.5
      %v3615 = vmul.f32 %v3598, 0.5
      %v3616 = vmul.f32 %v3561, 0.70710677
      %v3617 = vmul.f32 %v3563, 0.70710677
      %v3618 = vmul.f32 %v3566, 0.70710677
      %v3619 = vmul.f32 %v3568, 0.70710677
      %v3620 = vmul.f32 %v3571, 0.70710677
      %v3621 = vmul.f32 %v3573, 0.70710677
      %v3622 = vmul.f32 %v3576, 0.70710677
      %v3623 = vmul.f32 %v3578, 0.70710677
      %v3624 = vmul.f32 %v3581, 0.70710677
      %v3625 = vmul.f32 %v3583, 0.70710677
      %v3626 = vmul.f32 %v3586, 0.70710677
      %v3627 = vmul.f32 %v3588, 0.70710677
      %v3628 = vmul.f32 %v3591, 0.70710677
      %v3629 = vmul.f32 %v3593, 0.70710677
      %v3630 = vmul.f32 %v3596, 0.70710677
      %v3631 = vmul.f32 %v3598, 0.70710677
      %v3632 = vmul.f32 %v3616, %v3616
      %v3633 = vmin.f32 16.0, %v3632
      %v3634 = vmul.f32 %v3633, 2.1237322e-06
      %v3635 = vadd.f32 %v3634, 0.00028619796
      %v3636 = vmul.f32 %v3633, %v3635
      %v3637 = vadd.f32 %v3636, 0.0036580483
      %v3638 = vmul.f32 %v3633, %v3637
      %v3639 = vadd.f32 %v3638, 0.05243302
      %v3640 = vmul.f32 %v3633, %v3639
      %v3641 = vadd.f32 %v3640, 0.18741608
      %v3642 = vmul.f32 %v3633, %v3641
      %v3643 = vadd.f32 %v3642, 1.1283791
      %v3644 = vmul.f32 %v3616, %v3643
      %v3645 = vmul.f32 %v3633, 3.8918573e-05
      %v3646 = vadd.f32 %v3645, 0.001143296
      %v3647 = vmul.f32 %v3633, %v3646
      %v3648 = vadd.f32 %v3647, 0.014752088
      %v3649 = vmul.f32 %v3633, %v3648
      %v3650 = vadd.f32 %v3649, 0.112945676
      %v3651 = vmul.f32 %v3633, %v3650
      %v3652 = vadd.f32 %v3651, 0.4994258
      %v3653 = vmul.f32 %v3633, %v3652
      %v3654 = vadd.f32 %v3653, 1.0
      %v3655 = vrcp.pop %v3654
      %v3656 = vmul.f32 %v3654, %v3655
      %v3657 = vsub.f32 1.0, %v3656
      %v3658 = vmul.f32 %v3655, %v3657
      %v3659 = vadd.f32 %v3655, %v3658
      %vm3660 = vweird.f32 %v3654
      %vm3661 = vweird.f32 %v3655
      %vm3662 = vmor %vm3660, %vm3661
      %v3663 = vsel %vm3662, %v3655, %v3659
      %v3664 = vand.u32 2147483647, %v3654
      %vm3665 = vcmp.eq.f32.partialorder %v3664, 8.507059e+37
      %v3666 = vand.u32 %v3654, 2147483648
      %v3667 = vor.u32 1.1754944e-38, %v3666
      %v3668 = vsel %vm3665, %v3667, %v3663
      %v3669 = vmul.f32 %v3644, %v3668
      %v3670 = vmin.f32 %v3669, 1.0
      %v3671 = vmax.f32 %v3670, -1.0
      %v3672 = vmul.f32 %v3617, %v3617
      %v3673 = vmin.f32 16.0, %v3672
      %v3674 = vmul.f32 %v3673, 2.1237322e-06
      %v3675 = vadd.f32 %v3674, 0.00028619796
      %v3676 = vmul.f32 %v3673, %v3675
      %v3677 = vadd.f32 %v3676, 0.0036580483
      %v3678 = vmul.f32 %v3673, %v3677
      %v3679 = vadd.f32 %v3678, 0.05243302
      %v3680 = vmul.f32 %v3673, %v3679
      %v3681 = vadd.f32 %v3680, 0.18741608
      %v3682 = vmul.f32 %v3673, %v3681
      %v3683 = vadd.f32 %v3682, 1.1283791
      %v3684 = vmul.f32 %v3617, %v3683
      %v3685 = vmul.f32 %v3673, 3.8918573e-05
      %v3686 = vadd.f32 %v3685, 0.001143296
      %v3687 = vmul.f32 %v3673, %v3686
      %v3688 = vadd.f32 %v3687, 0.014752088
      %v3689 = vmul.f32 %v3673, %v3688
      %v3690 = vadd.f32 %v3689, 0.112945676
      %v3691 = vmul.f32 %v3673, %v3690
      %v3692 = vadd.f32 %v3691, 0.4994258
      %v3693 = vmul.f32 %v3673, %v3692
      %v3694 = vadd.f32 %v3693, 1.0
      %v3695 = vrcp.pop %v3694
      %v3696 = vmul.f32 %v3694, %v3695
      %v3697 = vsub.f32 1.0, %v3696
      %v3698 = vmul.f32 %v3695, %v3697
      %v3699 = vadd.f32 %v3695, %v3698
      %vm3700 = vweird.f32 %v3694
      %vm3701 = vweird.f32 %v3695
      %vm3702 = vmor %vm3700, %vm3701
      %v3703 = vsel %vm3702, %v3695, %v3699
      %v3704 = vand.u32 2147483647, %v3694
      %vm3705 = vcmp.eq.f32.partialorder %v3704, 8.507059e+37
      %v3706 = vand.u32 %v3694, 2147483648
      %v3707 = vor.u32 1.1754944e-38, %v3706
      %v3708 = vsel %vm3705, %v3707, %v3703
      %v3709 = vmul.f32 %v3684, %v3708
      %v3710 = vmin.f32 %v3709, 1.0
      %v3711 = vmax.f32 %v3710, -1.0
      %v3712 = vmul.f32 %v3618, %v3618
      %v3713 = vmin.f32 16.0, %v3712
      %v3714 = vmul.f32 %v3713, 2.1237322e-06
      %v3715 = vadd.f32 %v3714, 0.00028619796
      %v3716 = vmul.f32 %v3713, %v3715
      %v3717 = vadd.f32 %v3716, 0.0036580483
      %v3718 = vmul.f32 %v3713, %v3717
      %v3719 = vadd.f32 %v3718, 0.05243302
      %v3720 = vmul.f32 %v3713, %v3719
      %v3721 = vadd.f32 %v3720, 0.18741608
      %v3722 = vmul.f32 %v3713, %v3721
      %v3723 = vadd.f32 %v3722, 1.1283791
      %v3724 = vmul.f32 %v3618, %v3723
      %v3725 = vmul.f32 %v3713, 3.8918573e-05
      %v3726 = vadd.f32 %v3725, 0.001143296
      %v3727 = vmul.f32 %v3713, %v3726
      %v3728 = vadd.f32 %v3727, 0.014752088
      %v3729 = vmul.f32 %v3713, %v3728
      %v3730 = vadd.f32 %v3729, 0.112945676
      %v3731 = vmul.f32 %v3713, %v3730
      %v3732 = vadd.f32 %v3731, 0.4994258
      %v3733 = vmul.f32 %v3713, %v3732
      %v3734 = vadd.f32 %v3733, 1.0
      %v3735 = vrcp.pop %v3734
      %v3736 = vmul.f32 %v3734, %v3735
      %v3737 = vsub.f32 1.0, %v3736
      %v3738 = vmul.f32 %v3735, %v3737
      %v3739 = vadd.f32 %v3735, %v3738
      %vm3740 = vweird.f32 %v3734
      %vm3741 = vweird.f32 %v3735
      %vm3742 = vmor %vm3740, %vm3741
      %v3743 = vsel %vm3742, %v3735, %v3739
      %v3744 = vand.u32 2147483647, %v3734
      %vm3745 = vcmp.eq.f32.partialorder %v3744, 8.507059e+37
      %v3746 = vand.u32 %v3734, 2147483648
      %v3747 = vor.u32 1.1754944e-38, %v3746
      %v3748 = vsel %vm3745, %v3747, %v3743
      %v3749 = vmul.f32 %v3724, %v3748
      %v3750 = vmin.f32 %v3749, 1.0
      %v3751 = vmax.f32 %v3750, -1.0
      %v3752 = vmul.f32 %v3619, %v3619
      %v3753 = vmin.f32 16.0, %v3752
      %v3754 = vmul.f32 %v3753, 2.1237322e-06
      %v3755 = vadd.f32 %v3754, 0.00028619796
      %v3756 = vmul.f32 %v3753, %v3755
      %v3757 = vadd.f32 %v3756, 0.0036580483
      %v3758 = vmul.f32 %v3753, %v3757
      %v3759 = vadd.f32 %v3758, 0.05243302
      %v3760 = vmul.f32 %v3753, %v3759
      %v3761 = vadd.f32 %v3760, 0.18741608
      %v3762 = vmul.f32 %v3753, %v3761
      %v3763 = vadd.f32 %v3762, 1.1283791
      %v3764 = vmul.f32 %v3619, %v3763
      %v3765 = vmul.f32 %v3753, 3.8918573e-05
      %v3766 = vadd.f32 %v3765, 0.001143296
      %v3767 = vmul.f32 %v3753, %v3766
      %v3768 = vadd.f32 %v3767, 0.014752088
      %v3769 = vmul.f32 %v3753, %v3768
      %v3770 = vadd.f32 %v3769, 0.112945676
      %v3771 = vmul.f32 %v3753, %v3770
      %v3772 = vadd.f32 %v3771, 0.4994258
      %v3773 = vmul.f32 %v3753, %v3772
      %v3774 = vadd.f32 %v3773, 1.0
      %v3775 = vrcp.pop %v3774
      %v3776 = vmul.f32 %v3774, %v3775
      %v3777 = vsub.f32 1.0, %v3776
      %v3778 = vmul.f32 %v3775, %v3777
      %v3779 = vadd.f32 %v3775, %v3778
      %vm3780 = vweird.f32 %v3774
      %vm3781 = vweird.f32 %v3775
      %vm3782 = vmor %vm3780, %vm3781
      %v3783 = vsel %vm3782, %v3775, %v3779
      %v3784 = vand.u32 2147483647, %v3774
      %vm3785 = vcmp.eq.f32.partialorder %v3784, 8.507059e+37
      %v3786 = vand.u32 %v3774, 2147483648
      %v3787 = vor.u32 1.1754944e-38, %v3786
      %v3788 = vsel %vm3785, %v3787, %v3783
      %v3789 = vmul.f32 %v3764, %v3788
      %v3790 = vmin.f32 %v3789, 1.0
      %v3791 = vmax.f32 %v3790, -1.0
      %v3792 = vmul.f32 %v3620, %v3620
      %v3793 = vmin.f32 16.0, %v3792
      %v3794 = vmul.f32 %v3793, 2.1237322e-06
      %v3795 = vadd.f32 %v3794, 0.00028619796
      %v3796 = vmul.f32 %v3793, %v3795
      %v3797 = vadd.f32 %v3796, 0.0036580483
      %v3798 = vmul.f32 %v3793, %v3797
      %v3799 = vadd.f32 %v3798, 0.05243302
      %v3800 = vmul.f32 %v3793, %v3799
      %v3801 = vadd.f32 %v3800, 0.18741608
      %v3802 = vmul.f32 %v3793, %v3801
      %v3803 = vadd.f32 %v3802, 1.1283791
      %v3804 = vmul.f32 %v3620, %v3803
      %v3805 = vmul.f32 %v3793, 3.8918573e-05
      %v3806 = vadd.f32 %v3805, 0.001143296
      %v3807 = vmul.f32 %v3793, %v3806
      %v3808 = vadd.f32 %v3807, 0.014752088
      %v3809 = vmul.f32 %v3793, %v3808
      %v3810 = vadd.f32 %v3809, 0.112945676
      %v3811 = vmul.f32 %v3793, %v3810
      %v3812 = vadd.f32 %v3811, 0.4994258
      %v3813 = vmul.f32 %v3793, %v3812
      %v3814 = vadd.f32 %v3813, 1.0
      %v3815 = vrcp.pop %v3814
      %v3816 = vmul.f32 %v3814, %v3815
      %v3817 = vsub.f32 1.0, %v3816
      %v3818 = vmul.f32 %v3815, %v3817
      %v3819 = vadd.f32 %v3815, %v3818
      %vm3820 = vweird.f32 %v3814
      %vm3821 = vweird.f32 %v3815
      %vm3822 = vmor %vm3820, %vm3821
      %v3823 = vsel %vm3822, %v3815, %v3819
      %v3824 = vand.u32 2147483647, %v3814
      %vm3825 = vcmp.eq.f32.partialorder %v3824, 8.507059e+37
      %v3826 = vand.u32 %v3814, 2147483648
      %v3827 = vor.u32 1.1754944e-38, %v3826
      %v3828 = vsel %vm3825, %v3827, %v3823
      %v3829 = vmul.f32 %v3804, %v3828
      %v3830 = vmin.f32 %v3829, 1.0
      %v3831 = vmax.f32 %v3830, -1.0
      %v3832 = vmul.f32 %v3621, %v3621
      %v3833 = vmin.f32 16.0, %v3832
      %v3834 = vmul.f32 %v3833, 2.1237322e-06
      %v3835 = vadd.f32 %v3834, 0.00028619796
      %v3836 = vmul.f32 %v3833, %v3835
      %v3837 = vadd.f32 %v3836, 0.0036580483
      %v3838 = vmul.f32 %v3833, %v3837
      %v3839 = vadd.f32 %v3838, 0.05243302
      %v3840 = vmul.f32 %v3833, %v3839
      %v3841 = vadd.f32 %v3840, 0.18741608
      %v3842 = vmul.f32 %v3833, %v3841
      %v3843 = vadd.f32 %v3842, 1.1283791
      %v3844 = vmul.f32 %v3621, %v3843
      %v3845 = vmul.f32 %v3833, 3.8918573e-05
      %v3846 = vadd.f32 %v3845, 0.001143296
      %v3847 = vmul.f32 %v3833, %v3846
      %v3848 = vadd.f32 %v3847, 0.014752088
      %v3849 = vmul.f32 %v3833, %v3848
      %v3850 = vadd.f32 %v3849, 0.112945676
      %v3851 = vmul.f32 %v3833, %v3850
      %v3852 = vadd.f32 %v3851, 0.4994258
      %v3853 = vmul.f32 %v3833, %v3852
      %v3854 = vadd.f32 %v3853, 1.0
      %v3855 = vrcp.pop %v3854
      %v3856 = vmul.f32 %v3854, %v3855
      %v3857 = vsub.f32 1.0, %v3856
      %v3858 = vmul.f32 %v3855, %v3857
      %v3859 = vadd.f32 %v3855, %v3858
      %vm3860 = vweird.f32 %v3854
      %vm3861 = vweird.f32 %v3855
      %vm3862 = vmor %vm3860, %vm3861
      %v3863 = vsel %vm3862, %v3855, %v3859
      %v3864 = vand.u32 2147483647, %v3854
      %vm3865 = vcmp.eq.f32.partialorder %v3864, 8.507059e+37
      %v3866 = vand.u32 %v3854, 2147483648
      %v3867 = vor.u32 1.1754944e-38, %v3866
      %v3868 = vsel %vm3865, %v3867, %v3863
      %v3869 = vmul.f32 %v3844, %v3868
      %v3870 = vmin.f32 %v3869, 1.0
      %v3871 = vmax.f32 %v3870, -1.0
      %v3872 = vmul.f32 %v3622, %v3622
      %v3873 = vmin.f32 16.0, %v3872
      %v3874 = vmul.f32 %v3873, 2.1237322e-06
      %v3875 = vadd.f32 %v3874, 0.00028619796
      %v3876 = vmul.f32 %v3873, %v3875
      %v3877 = vadd.f32 %v3876, 0.0036580483
      %v3878 = vmul.f32 %v3873, %v3877
      %v3879 = vadd.f32 %v3878, 0.05243302
      %v3880 = vmul.f32 %v3873, %v3879
      %v3881 = vadd.f32 %v3880, 0.18741608
      %v3882 = vmul.f32 %v3873, %v3881
      %v3883 = vadd.f32 %v3882, 1.1283791
      %v3884 = vmul.f32 %v3622, %v3883
      %v3885 = vmul.f32 %v3873, 3.8918573e-05
      %v3886 = vadd.f32 %v3885, 0.001143296
      %v3887 = vmul.f32 %v3873, %v3886
      %v3888 = vadd.f32 %v3887, 0.014752088
      %v3889 = vmul.f32 %v3873, %v3888
      %v3890 = vadd.f32 %v3889, 0.112945676
      %v3891 = vmul.f32 %v3873, %v3890
      %v3892 = vadd.f32 %v3891, 0.4994258
      %v3893 = vmul.f32 %v3873, %v3892
      %v3894 = vadd.f32 %v3893, 1.0
      %v3895 = vrcp.pop %v3894
      %v3896 = vmul.f32 %v3894, %v3895
      %v3897 = vsub.f32 1.0, %v3896
      %v3898 = vmul.f32 %v3895, %v3897
      %v3899 = vadd.f32 %v3895, %v3898
      %vm3900 = vweird.f32 %v3894
      %vm3901 = vweird.f32 %v3895
      %vm3902 = vmor %vm3900, %vm3901
      %v3903 = vsel %vm3902, %v3895, %v3899
      %v3904 = vand.u32 2147483647, %v3894
      %vm3905 = vcmp.eq.f32.partialorder %v3904, 8.507059e+37
      %v3906 = vand.u32 %v3894, 2147483648
      %v3907 = vor.u32 1.1754944e-38, %v3906
      %v3908 = vsel %vm3905, %v3907, %v3903
      %v3909 = vmul.f32 %v3884, %v3908
      %v3910 = vmin.f32 %v3909, 1.0
      %v3911 = vmax.f32 %v3910, -1.0
      %v3912 = vmul.f32 %v3623, %v3623
      %v3913 = vmin.f32 16.0, %v3912
      %v3914 = vmul.f32 %v3913, 2.1237322e-06
      %v3915 = vadd.f32 %v3914, 0.00028619796
      %v3916 = vmul.f32 %v3913, %v3915
      %v3917 = vadd.f32 %v3916, 0.0036580483
      %v3918 = vmul.f32 %v3913, %v3917
      %v3919 = vadd.f32 %v3918, 0.05243302
      %v3920 = vmul.f32 %v3913, %v3919
      %v3921 = vadd.f32 %v3920, 0.18741608
      %v3922 = vmul.f32 %v3913, %v3921
      %v3923 = vadd.f32 %v3922, 1.1283791
      %v3924 = vmul.f32 %v3623, %v3923
      %v3925 = vmul.f32 %v3913, 3.8918573e-05
      %v3926 = vadd.f32 %v3925, 0.001143296
      %v3927 = vmul.f32 %v3913, %v3926
      %v3928 = vadd.f32 %v3927, 0.014752088
      %v3929 = vmul.f32 %v3913, %v3928
      %v3930 = vadd.f32 %v3929, 0.112945676
      %v3931 = vmul.f32 %v3913, %v3930
      %v3932 = vadd.f32 %v3931, 0.4994258
      %v3933 = vmul.f32 %v3913, %v3932
      %v3934 = vadd.f32 %v3933, 1.0
      %v3935 = vrcp.pop %v3934
      %v3936 = vmul.f32 %v3934, %v3935
      %v3937 = vsub.f32 1.0, %v3936
      %v3938 = vmul.f32 %v3935, %v3937
      %v3939 = vadd.f32 %v3935, %v3938
      %vm3940 = vweird.f32 %v3934
      %vm3941 = vweird.f32 %v3935
      %vm3942 = vmor %vm3940, %vm3941
      %v3943 = vsel %vm3942, %v3935, %v3939
      %v3944 = vand.u32 2147483647, %v3934
      %vm3945 = vcmp.eq.f32.partialorder %v3944, 8.507059e+37
      %v3946 = vand.u32 %v3934, 2147483648
      %v3947 = vor.u32 1.1754944e-38, %v3946
      %v3948 = vsel %vm3945, %v3947, %v3943
      %v3949 = vmul.f32 %v3924, %v3948
      %v3950 = vmin.f32 %v3949, 1.0
      %v3951 = vmax.f32 %v3950, -1.0
      %v3952 = vmul.f32 %v3624, %v3624
      %v3953 = vmin.f32 16.0, %v3952
      %v3954 = vmul.f32 %v3953, 2.1237322e-06
      %v3955 = vadd.f32 %v3954, 0.00028619796
      %v3956 = vmul.f32 %v3953, %v3955
      %v3957 = vadd.f32 %v3956, 0.0036580483
      %v3958 = vmul.f32 %v3953, %v3957
      %v3959 = vadd.f32 %v3958, 0.05243302
      %v3960 = vmul.f32 %v3953, %v3959
      %v3961 = vadd.f32 %v3960, 0.18741608
      %v3962 = vmul.f32 %v3953, %v3961
      %v3963 = vadd.f32 %v3962, 1.1283791
      %v3964 = vmul.f32 %v3624, %v3963
      %v3965 = vmul.f32 %v3953, 3.8918573e-05
      %v3966 = vadd.f32 %v3965, 0.001143296
      %v3967 = vmul.f32 %v3953, %v3966
      %v3968 = vadd.f32 %v3967, 0.014752088
      %v3969 = vmul.f32 %v3953, %v3968
      %v3970 = vadd.f32 %v3969, 0.112945676
      %v3971 = vmul.f32 %v3953, %v3970
      %v3972 = vadd.f32 %v3971, 0.4994258
      %v3973 = vmul.f32 %v3953, %v3972
      %v3974 = vadd.f32 %v3973, 1.0
      %v3975 = vrcp.pop %v3974
      %v3976 = vmul.f32 %v3974, %v3975
      %v3977 = vsub.f32 1.0, %v3976
      %v3978 = vmul.f32 %v3975, %v3977
      %v3979 = vadd.f32 %v3975, %v3978
      %vm3980 = vweird.f32 %v3974
      %vm3981 = vweird.f32 %v3975
      %vm3982 = vmor %vm3980, %vm3981
      %v3983 = vsel %vm3982, %v3975, %v3979
      %v3984 = vand.u32 2147483647, %v3974
      %vm3985 = vcmp.eq.f32.partialorder %v3984, 8.507059e+37
      %v3986 = vand.u32 %v3974, 2147483648
      %v3987 = vor.u32 1.1754944e-38, %v3986
      %v3988 = vsel %vm3985, %v3987, %v3983
      %v3989 = vmul.f32 %v3964, %v3988
      %v3990 = vmin.f32 %v3989, 1.0
      %v3991 = vmax.f32 %v3990, -1.0
      %v3992 = vmul.f32 %v3625, %v3625
      %v3993 = vmin.f32 16.0, %v3992
      %v3994 = vmul.f32 %v3993, 2.1237322e-06
      %v3995 = vadd.f32 %v3994, 0.00028619796
      %v3996 = vmul.f32 %v3993, %v3995
      %v3997 = vadd.f32 %v3996, 0.0036580483
      %v3998 = vmul.f32 %v3993, %v3997
      %v3999 = vadd.f32 %v3998, 0.05243302
      %v4000 = vmul.f32 %v3993, %v3999
      %v4001 = vadd.f32 %v4000, 0.18741608
      %v4002 = vmul.f32 %v3993, %v4001
      %v4003 = vadd.f32 %v4002, 1.1283791
      %v4004 = vmul.f32 %v3625, %v4003
      %v4005 = vmul.f32 %v3993, 3.8918573e-05
      %v4006 = vadd.f32 %v4005, 0.001143296
      %v4007 = vmul.f32 %v3993, %v4006
      %v4008 = vadd.f32 %v4007, 0.014752088
      %v4009 = vmul.f32 %v3993, %v4008
      %v4010 = vadd.f32 %v4009, 0.112945676
      %v4011 = vmul.f32 %v3993, %v4010
      %v4012 = vadd.f32 %v4011, 0.4994258
      %v4013 = vmul.f32 %v3993, %v4012
      %v4014 = vadd.f32 %v4013, 1.0
      %v4015 = vrcp.pop %v4014
      %v4016 = vmul.f32 %v4014, %v4015
      %v4017 = vsub.f32 1.0, %v4016
      %v4018 = vmul.f32 %v4015, %v4017
      %v4019 = vadd.f32 %v4015, %v4018
      %vm4020 = vweird.f32 %v4014
      %vm4021 = vweird.f32 %v4015
      %vm4022 = vmor %vm4020, %vm4021
      %v4023 = vsel %vm4022, %v4015, %v4019
      %v4024 = vand.u32 2147483647, %v4014
      %vm4025 = vcmp.eq.f32.partialorder %v4024, 8.507059e+37
      %v4026 = vand.u32 %v4014, 2147483648
      %v4027 = vor.u32 1.1754944e-38, %v4026
      %v4028 = vsel %vm4025, %v4027, %v4023
      %v4029 = vmul.f32 %v4004, %v4028
      %v4030 = vmin.f32 %v4029, 1.0
      %v4031 = vmax.f32 %v4030, -1.0
      %v4032 = vmul.f32 %v3626, %v3626
      %v4033 = vmin.f32 16.0, %v4032
      %v4034 = vmul.f32 %v4033, 2.1237322e-06
      %v4035 = vadd.f32 %v4034, 0.00028619796
      %v4036 = vmul.f32 %v4033, %v4035
      %v4037 = vadd.f32 %v4036, 0.0036580483
      %v4038 = vmul.f32 %v4033, %v4037
      %v4039 = vadd.f32 %v4038, 0.05243302
      %v4040 = vmul.f32 %v4033, %v4039
      %v4041 = vadd.f32 %v4040, 0.18741608
      %v4042 = vmul.f32 %v4033, %v4041
      %v4043 = vadd.f32 %v4042, 1.1283791
      %v4044 = vmul.f32 %v3626, %v4043
      %v4045 = vmul.f32 %v4033, 3.8918573e-05
      %v4046 = vadd.f32 %v4045, 0.001143296
      %v4047 = vmul.f32 %v4033, %v4046
      %v4048 = vadd.f32 %v4047, 0.014752088
      %v4049 = vmul.f32 %v4033, %v4048
      %v4050 = vadd.f32 %v4049, 0.112945676
      %v4051 = vmul.f32 %v4033, %v4050
      %v4052 = vadd.f32 %v4051, 0.4994258
      %v4053 = vmul.f32 %v4033, %v4052
      %v4054 = vadd.f32 %v4053, 1.0
      %v4055 = vrcp.pop %v4054
      %v4056 = vmul.f32 %v4054, %v4055
      %v4057 = vsub.f32 1.0, %v4056
      %v4058 = vmul.f32 %v4055, %v4057
      %v4059 = vadd.f32 %v4055, %v4058
      %vm4060 = vweird.f32 %v4054
      %vm4061 = vweird.f32 %v4055
      %vm4062 = vmor %vm4060, %vm4061
      %v4063 = vsel %vm4062, %v4055, %v4059
      %v4064 = vand.u32 2147483647, %v4054
      %vm4065 = vcmp.eq.f32.partialorder %v4064, 8.507059e+37
      %v4066 = vand.u32 %v4054, 2147483648
      %v4067 = vor.u32 1.1754944e-38, %v4066
      %v4068 = vsel %vm4065, %v4067, %v4063
      %v4069 = vmul.f32 %v4044, %v4068
      %v4070 = vmin.f32 %v4069, 1.0
      %v4071 = vmax.f32 %v4070, -1.0
      %v4072 = vmul.f32 %v3627, %v3627
      %v4073 = vmin.f32 16.0, %v4072
      %v4074 = vmul.f32 %v4073, 2.1237322e-06
      %v4075 = vadd.f32 %v4074, 0.00028619796
      %v4076 = vmul.f32 %v4073, %v4075
      %v4077 = vadd.f32 %v4076, 0.0036580483
      %v4078 = vmul.f32 %v4073, %v4077
      %v4079 = vadd.f32 %v4078, 0.05243302
      %v4080 = vmul.f32 %v4073, %v4079
      %v4081 = vadd.f32 %v4080, 0.18741608
      %v4082 = vmul.f32 %v4073, %v4081
      %v4083 = vadd.f32 %v4082, 1.1283791
      %v4084 = vmul.f32 %v3627, %v4083
      %v4085 = vmul.f32 %v4073, 3.8918573e-05
      %v4086 = vadd.f32 %v4085, 0.001143296
      %v4087 = vmul.f32 %v4073, %v4086
      %v4088 = vadd.f32 %v4087, 0.014752088
      %v4089 = vmul.f32 %v4073, %v4088
      %v4090 = vadd.f32 %v4089, 0.112945676
      %v4091 = vmul.f32 %v4073, %v4090
      %v4092 = vadd.f32 %v4091, 0.4994258
      %v4093 = vmul.f32 %v4073, %v4092
      %v4094 = vadd.f32 %v4093, 1.0
      %v4095 = vrcp.pop %v4094
      %v4096 = vmul.f32 %v4094, %v4095
      %v4097 = vsub.f32 1.0, %v4096
      %v4098 = vmul.f32 %v4095, %v4097
      %v4099 = vadd.f32 %v4095, %v4098
      %vm4100 = vweird.f32 %v4094
      %vm4101 = vweird.f32 %v4095
      %vm4102 = vmor %vm4100, %vm4101
      %v4103 = vsel %vm4102, %v4095, %v4099
      %v4104 = vand.u32 2147483647, %v4094
      %vm4105 = vcmp.eq.f32.partialorder %v4104, 8.507059e+37
      %v4106 = vand.u32 %v4094, 2147483648
      %v4107 = vor.u32 1.1754944e-38, %v4106
      %v4108 = vsel %vm4105, %v4107, %v4103
      %v4109 = vmul.f32 %v4084, %v4108
      %v4110 = vmin.f32 %v4109, 1.0
      %v4111 = vmax.f32 %v4110, -1.0
      %v4112 = vmul.f32 %v3628, %v3628
      %v4113 = vmin.f32 16.0, %v4112
      %v4114 = vmul.f32 %v4113, 2.1237322e-06
      %v4115 = vadd.f32 %v4114, 0.00028619796
      %v4116 = vmul.f32 %v4113, %v4115
      %v4117 = vadd.f32 %v4116, 0.0036580483
      %v4118 = vmul.f32 %v4113, %v4117
      %v4119 = vadd.f32 %v4118, 0.05243302
      %v4120 = vmul.f32 %v4113, %v4119
      %v4121 = vadd.f32 %v4120, 0.18741608
      %v4122 = vmul.f32 %v4113, %v4121
      %v4123 = vadd.f32 %v4122, 1.1283791
      %v4124 = vmul.f32 %v3628, %v4123
      %v4125 = vmul.f32 %v4113, 3.8918573e-05
      %v4126 = vadd.f32 %v4125, 0.001143296
      %v4127 = vmul.f32 %v4113, %v4126
      %v4128 = vadd.f32 %v4127, 0.014752088
      %v4129 = vmul.f32 %v4113, %v4128
      %v4130 = vadd.f32 %v4129, 0.112945676
      %v4131 = vmul.f32 %v4113, %v4130
      %v4132 = vadd.f32 %v4131, 0.4994258
      %v4133 = vmul.f32 %v4113, %v4132
      %v4134 = vadd.f32 %v4133, 1.0
      %v4135 = vrcp.pop %v4134
      %v4136 = vmul.f32 %v4134, %v4135
      %v4137 = vsub.f32 1.0, %v4136
      %v4138 = vmul.f32 %v4135, %v4137
      %v4139 = vadd.f32 %v4135, %v4138
      %vm4140 = vweird.f32 %v4134
      %vm4141 = vweird.f32 %v4135
      %vm4142 = vmor %vm4140, %vm4141
      %v4143 = vsel %vm4142, %v4135, %v4139
      %v4144 = vand.u32 2147483647, %v4134
      %vm4145 = vcmp.eq.f32.partialorder %v4144, 8.507059e+37
      %v4146 = vand.u32 %v4134, 2147483648
      %v4147 = vor.u32 1.1754944e-38, %v4146
      %v4148 = vsel %vm4145, %v4147, %v4143
      %v4149 = vmul.f32 %v4124, %v4148
      %v4150 = vmin.f32 %v4149, 1.0
      %v4151 = vmax.f32 %v4150, -1.0
      %v4152 = vmul.f32 %v3629, %v3629
      %v4153 = vmin.f32 16.0, %v4152
      %v4154 = vmul.f32 %v4153, 2.1237322e-06
      %v4155 = vadd.f32 %v4154, 0.00028619796
      %v4156 = vmul.f32 %v4153, %v4155
      %v4157 = vadd.f32 %v4156, 0.0036580483
      %v4158 = vmul.f32 %v4153, %v4157
      %v4159 = vadd.f32 %v4158, 0.05243302
      %v4160 = vmul.f32 %v4153, %v4159
      %v4161 = vadd.f32 %v4160, 0.18741608
      %v4162 = vmul.f32 %v4153, %v4161
      %v4163 = vadd.f32 %v4162, 1.1283791
      %v4164 = vmul.f32 %v3629, %v4163
      %v4165 = vmul.f32 %v4153, 3.8918573e-05
      %v4166 = vadd.f32 %v4165, 0.001143296
      %v4167 = vmul.f32 %v4153, %v4166
      %v4168 = vadd.f32 %v4167, 0.014752088
      %v4169 = vmul.f32 %v4153, %v4168
      %v4170 = vadd.f32 %v4169, 0.112945676
      %v4171 = vmul.f32 %v4153, %v4170
      %v4172 = vadd.f32 %v4171, 0.4994258
      %v4173 = vmul.f32 %v4153, %v4172
      %v4174 = vadd.f32 %v4173, 1.0
      %v4175 = vrcp.pop %v4174
      %v4176 = vmul.f32 %v4174, %v4175
      %v4177 = vsub.f32 1.0, %v4176
      %v4178 = vmul.f32 %v4175, %v4177
      %v4179 = vadd.f32 %v4175, %v4178
      %vm4180 = vweird.f32 %v4174
      %vm4181 = vweird.f32 %v4175
      %vm4182 = vmor %vm4180, %vm4181
      %v4183 = vsel %vm4182, %v4175, %v4179
      %v4184 = vand.u32 2147483647, %v4174
      %vm4185 = vcmp.eq.f32.partialorder %v4184, 8.507059e+37
      %v4186 = vand.u32 %v4174, 2147483648
      %v4187 = vor.u32 1.1754944e-38, %v4186
      %v4188 = vsel %vm4185, %v4187, %v4183
      %v4189 = vmul.f32 %v4164, %v4188
      %v4190 = vmin.f32 %v4189, 1.0
      %v4191 = vmax.f32 %v4190, -1.0
      %v4192 = vmul.f32 %v3630, %v3630
      %v4193 = vmin.f32 16.0, %v4192
      %v4194 = vmul.f32 %v4193, 2.1237322e-06
      %v4195 = vadd.f32 %v4194, 0.00028619796
      %v4196 = vmul.f32 %v4193, %v4195
      %v4197 = vadd.f32 %v4196, 0.0036580483
      %v4198 = vmul.f32 %v4193, %v4197
      %v4199 = vadd.f32 %v4198, 0.05243302
      %v4200 = vmul.f32 %v4193, %v4199
      %v4201 = vadd.f32 %v4200, 0.18741608
      %v4202 = vmul.f32 %v4193, %v4201
      %v4203 = vadd.f32 %v4202, 1.1283791
      %v4204 = vmul.f32 %v3630, %v4203
      %v4205 = vmul.f32 %v4193, 3.8918573e-05
      %v4206 = vadd.f32 %v4205, 0.001143296
      %v4207 = vmul.f32 %v4193, %v4206
      %v4208 = vadd.f32 %v4207, 0.014752088
      %v4209 = vmul.f32 %v4193, %v4208
      %v4210 = vadd.f32 %v4209, 0.112945676
      %v4211 = vmul.f32 %v4193, %v4210
      %v4212 = vadd.f32 %v4211, 0.4994258
      %v4213 = vmul.f32 %v4193, %v4212
      %v4214 = vadd.f32 %v4213, 1.0
      %v4215 = vrcp.pop %v4214
      %v4216 = vmul.f32 %v4214, %v4215
      %v4217 = vsub.f32 1.0, %v4216
      %v4218 = vmul.f32 %v4215, %v4217
      %v4219 = vadd.f32 %v4215, %v4218
      %vm4220 = vweird.f32 %v4214
      %vm4221 = vweird.f32 %v4215
      %vm4222 = vmor %vm4220, %vm4221
      %v4223 = vsel %vm4222, %v4215, %v4219
      %v4224 = vand.u32 2147483647, %v4214
      %vm4225 = vcmp.eq.f32.partialorder %v4224, 8.507059e+37
      %v4226 = vand.u32 %v4214, 2147483648
      %v4227 = vor.u32 1.1754944e-38, %v4226
      %v4228 = vsel %vm4225, %v4227, %v4223
      %v4229 = vmul.f32 %v4204, %v4228
      %v4230 = vmin.f32 %v4229, 1.0
      %v4231 = vmax.f32 %v4230, -1.0
      %v4232 = vmul.f32 %v3631, %v3631
      %v4233 = vmin.f32 16.0, %v4232
      %v4234 = vmul.f32 %v4233, 2.1237322e-06
      %v4235 = vadd.f32 %v4234, 0.00028619796
      %v4236 = vmul.f32 %v4233, %v4235
      %v4237 = vadd.f32 %v4236, 0.0036580483
      %v4238 = vmul.f32 %v4233, %v4237
      %v4239 = vadd.f32 %v4238, 0.05243302
      %v4240 = vmul.f32 %v4233, %v4239
      %v4241 = vadd.f32 %v4240, 0.18741608
      %v4242 = vmul.f32 %v4233, %v4241
      %v4243 = vadd.f32 %v4242, 1.1283791
      %v4244 = vmul.f32 %v3631, %v4243
      %v4245 = vmul.f32 %v4233, 3.8918573e-05
      %v4246 = vadd.f32 %v4245, 0.001143296
      %v4247 = vmul.f32 %v4233, %v4246
      %v4248 = vadd.f32 %v4247, 0.014752088
      %v4249 = vmul.f32 %v4233, %v4248
      %v4250 = vadd.f32 %v4249, 0.112945676
      %v4251 = vmul.f32 %v4233, %v4250
      %v4252 = vadd.f32 %v4251, 0.4994258
      %v4253 = vmul.f32 %v4233, %v4252
      %v4254 = vadd.f32 %v4253, 1.0
      %v4255 = vrcp.pop %v4254
      %v4256 = vmul.f32 %v4254, %v4255
      %v4257 = vsub.f32 1.0, %v4256
      %v4258 = vmul.f32 %v4255, %v4257
      %v4259 = vadd.f32 %v4255, %v4258
      %vm4260 = vweird.f32 %v4254
      %vm4261 = vweird.f32 %v4255
      %vm4262 = vmor %vm4260, %vm4261
      %v4263 = vsel %vm4262, %v4255, %v4259
      %v4264 = vand.u32 2147483647, %v4254
      %vm4265 = vcmp.eq.f32.partialorder %v4264, 8.507059e+37
      %v4266 = vand.u32 %v4254, 2147483648
      %v4267 = vor.u32 1.1754944e-38, %v4266
      %v4268 = vsel %vm4265, %v4267, %v4263
      %v4269 = vmul.f32 %v4244, %v4268
      %v4270 = vmin.f32 %v4269, 1.0
      %v4271 = vmax.f32 %v4270, -1.0
      %v4272 = vadd.f32 %v3671, 1.0
      %v4273 = vadd.f32 %v3711, 1.0
      %v4274 = vadd.f32 %v3751, 1.0
      %v4275 = vadd.f32 %v3791, 1.0
      %v4276 = vadd.f32 %v3831, 1.0
      %v4277 = vadd.f32 %v3871, 1.0
      %v4278 = vadd.f32 %v3911, 1.0
      %v4279 = vadd.f32 %v3951, 1.0
      %v4280 = vadd.f32 %v3991, 1.0
      %v4281 = vadd.f32 %v4031, 1.0
      %v4282 = vadd.f32 %v4071, 1.0
      %v4283 = vadd.f32 %v4111, 1.0
      %v4284 = vadd.f32 %v4151, 1.0
      %v4285 = vadd.f32 %v4191, 1.0
      %v4286 = vadd.f32 %v4231, 1.0
      %v4287 = vadd.f32 %v4271, 1.0
      %v4288 = vmul.f32 %v3600, %v4272
      %v4289 = vmul.f32 %v3601, %v4273
      %v4290 = vmul.f32 %v3602, %v4274
      %v4291 = vmul.f32 %v3603, %v4275
      %v4292 = vmul.f32 %v3604, %v4276
      %v4293 = vmul.f32 %v3605, %v4277
      %v4294 = vmul.f32 %v3606, %v4278
      %v4295 = vmul.f32 %v3607, %v4279
      %v4296 = vmul.f32 %v3608, %v4280
      %v4297 = vmul.f32 %v3609, %v4281
      %v4298 = vmul.f32 %v3610, %v4282
      %v4299 = vmul.f32 %v3611, %v4283
      %v4300 = vmul.f32 %v3612, %v4284
      %v4301 = vmul.f32 %v3613, %v4285
      %v4302 = vmul.f32 %v3614, %v4286
      %v4303 = vmul.f32 %v3615, %v4287
      %v4304 = vpack.c.bf16 %v4289, %v4288
      %v4305 = vpack.c.bf16 %v4291, %v4290
      %v4306 = vpack.c.bf16 %v4293, %v4292
      %v4307 = vpack.c.bf16 %v4295, %v4294
      %v4308 = vpack.c.bf16 %v4297, %v4296
      %v4309 = vpack.c.bf16 %v4299, %v4298
      %v4310 = vpack.c.bf16 %v4301, %v4300
      %v4311 = vpack.c.bf16 %v4303, %v4302
      %v4312 = vld [vmem:[%s6] sm:$0xf]
      %v4313 = vld [vmem:[%s6 + $0x4] sm:$0xf]
      %v4314 = vld [vmem:[%s6 + $0x8] sm:$0xf]
      %v4315 = vld [vmem:[%s6 + $0xc] sm:$0xf]
      %v4316 = vld [vmem:[%s6 + $0x10] sm:$0xf]
      %v4317 = vld [vmem:[%s6 + $0x14] sm:$0xf]
      %v4318 = vld [vmem:[%s6 + $0x18] sm:$0xf]
      %v4319 = vld [vmem:[%s6 + $0x1c] sm:$0xf]
      %v4320 = vld [vmem:[%s6 + $0x20] sm:$0xf]
      %v4321 = vld [vmem:[%s6 + $0x24] sm:$0xf]
      %v4322 = vld [vmem:[%s6 + $0x28] sm:$0xf]
      %v4323 = vld [vmem:[%s6 + $0x2c] sm:$0xf]
      %v4324 = vld [vmem:[%s6 + $0x30] sm:$0xf]
      %v4325 = vld [vmem:[%s6 + $0x34] sm:$0xf]
      %v4326 = vld [vmem:[%s6 + $0x38] sm:$0xf]
      %v4327 = vld [vmem:[%s6 + $0x3c] sm:$0xf]
      %v4328 = vld [vmem:[%s7] sm:$0x1]
      %v4330 = vperm.slane %v4328, 0
      %v4348 = vunpack.c.l.b16 %v4312
      %v4349 = vunpack.c.l.b16 %v4313
      %v4350 = vunpack.c.l.b16 %v4314
      %v4351 = vunpack.c.l.b16 %v4315
      %v4352 = vunpack.c.l.b16 %v4316
      %v4353 = vunpack.c.l.b16 %v4317
      %v4354 = vunpack.c.l.b16 %v4318
      %v4355 = vunpack.c.l.b16 %v4319
      %v4356 = vunpack.c.l.b16 %v4320
      %v4357 = vunpack.c.l.b16 %v4321
      %v4358 = vunpack.c.l.b16 %v4322
      %v4359 = vunpack.c.l.b16 %v4323
      %v4360 = vunpack.c.l.b16 %v4324
      %v4361 = vunpack.c.l.b16 %v4325
      %v4362 = vunpack.c.l.b16 %v4326
      %v4363 = vunpack.c.l.b16 %v4327
      %v4364 = vpack.c.b16 %v4349, %v4348
      %v4365 = vpack.c.b16 %v4351, %v4350
      %v4366 = vpack.c.b16 %v4353, %v4352
      %v4367 = vpack.c.b16 %v4355, %v4354
      %v4368 = vpack.c.b16 %v4357, %v4356
      %v4369 = vpack.c.b16 %v4359, %v4358
      %v4370 = vpack.c.b16 %v4361, %v4360
      %v4371 = vpack.c.b16 %v4363, %v4362
      %4380 = vmatpush.bf16.msra.mxu0 %v4371
      %4381 = vmatpush.bf16.msra.mxu0 %v4370
      %4382 = vmatpush.bf16.msra.mxu0 %v4369
      %4383 = vmatpush.bf16.msra.mxu0 %v4368
      %4384 = vmatpush.bf16.msra.mxu0 %v4367
      %4385 = vmatpush.bf16.msra.mxu0 %v4366
      %4386 = vmatpush.bf16.msra.mxu0 %v4365
      %4387 = vmatpush.bf16.msra.mxu0 %v4364
      %4388 = vmatmul.bf16.gmra.mxu0 %v4304
      %v4389 = vpop.f32.mrf.mxu0
      %v4390 = vadd.f32 %v4330, %v4389
      %v4391 = vpop.f32.mrf.mxu0
      %v4392 = vadd.f32 %v4330, %v4391
      %4393 = vmatmul.bf16.gmra.mxu0 %v4305
      %v4394 = vpop.f32.mrf.mxu0
      %v4395 = vadd.f32 %v4330, %v4394
      %v4396 = vpop.f32.mrf.mxu0
      %v4397 = vadd.f32 %v4330, %v4396
      %4398 = vmatmul.bf16.gmra.mxu0 %v4306
      %v4399 = vpop.f32.mrf.mxu0
      %v4400 = vadd.f32 %v4330, %v4399
      %v4401 = vpop.f32.mrf.mxu0
      %v4402 = vadd.f32 %v4330, %v4401
      %4403 = vmatmul.bf16.gmra.mxu0 %v4307
      %v4404 = vpop.f32.mrf.mxu0
      %v4405 = vadd.f32 %v4330, %v4404
      %v4406 = vpop.f32.mrf.mxu0
      %v4407 = vadd.f32 %v4330, %v4406
      %4408 = vmatmul.bf16.gmra.mxu0 %v4308
      %v4409 = vpop.f32.mrf.mxu0
      %v4410 = vadd.f32 %v4330, %v4409
      %v4411 = vpop.f32.mrf.mxu0
      %v4412 = vadd.f32 %v4330, %v4411
      %4413 = vmatmul.bf16.gmra.mxu0 %v4309
      %v4414 = vpop.f32.mrf.mxu0
      %v4415 = vadd.f32 %v4330, %v4414
      %v4416 = vpop.f32.mrf.mxu0
      %v4417 = vadd.f32 %v4330, %v4416
      %4418 = vmatmul.bf16.gmra.mxu0 %v4310
      %v4419 = vpop.f32.mrf.mxu0
      %v4420 = vadd.f32 %v4330, %v4419
      %v4421 = vpop.f32.mrf.mxu0
      %v4422 = vadd.f32 %v4330, %v4421
      %4423 = vmatmul.bf16.gmra.mxu0 %v4311
      %v4424 = vpop.f32.mrf.mxu0
      %v4425 = vadd.f32 %v4330, %v4424
      %v4426 = vpop.f32.mrf.mxu0
      %v4427 = vadd.f32 %v4330, %v4426
      %4428 = vdwg.mxu0
      %v4453 = vrot.slane %v343, 3
      %v4454 = vrot.slane %v344, 3
      %v4455 = vsel %vm1773, %v4453, %v4454
      %v4456 = vrot.slane %v345, 3
      %v4457 = vsel %vm1773, %v4454, %v4456
      %v4458 = vrot.slane %v346, 3
      %v4459 = vrot.slane %v347, 3
      %v4460 = vsel %vm1773, %v4458, %v4459
      %v4461 = vrot.slane %v348, 3
      %v4462 = vsel %vm1773, %v4459, %v4461
      %v4463 = vrot.slane %v349, 3
      %v4464 = vrot.slane %v350, 3
      %v4465 = vsel %vm1773, %v4463, %v4464
      %v4466 = vrot.slane %v351, 3
      %v4467 = vsel %vm1773, %v4464, %v4466
      %v4468 = vrot.slane %v352, 3
      %v4469 = vrot.slane %v353, 3
      %v4470 = vsel %vm1773, %v4468, %v4469
      %v4471 = vrot.slane %v354, 3
      %v4472 = vsel %vm1773, %v4469, %v4471
      %v4473 = vrot.slane %v355, 3
      %v4474 = vrot.slane %v356, 3
      %v4475 = vsel %vm1773, %v4473, %v4474
      %v4476 = vrot.slane %v357, 3
      %v4477 = vsel %vm1773, %v4474, %v4476
      %v4478 = vrot.slane %v358, 3
      %v4479 = vrot.slane %v359, 3
      %v4480 = vsel %vm1773, %v4478, %v4479
      %v4481 = vrot.slane %v360, 3
      %v4482 = vsel %vm1773, %v4479, %v4481
      %v4483 = vrot.slane %v361, 3
      %v4484 = vrot.slane %v362, 3
      %v4485 = vsel %vm1773, %v4483, %v4484
      %v4486 = vrot.slane %v363, 3
      %v4487 = vsel %vm1773, %v4484, %v4486
      %v4488 = vrot.slane %v364, 3
      %v4489 = vrot.slane %v365, 3
      %v4490 = vsel %vm1773, %v4488, %v4489
      %v4491 = vrot.slane %v366, 3
      %v4492 = vsel %vm1773, %v4489, %v4491
      %v4509 = vadd.f32 %v4390, %v4455
      %v4510 = vadd.f32 %v4392, %v4457
      %v4511 = vadd.f32 %v4395, %v4460
      %v4512 = vadd.f32 %v4397, %v4462
      %v4513 = vadd.f32 %v4400, %v4465
      %v4514 = vadd.f32 %v4402, %v4467
      %v4515 = vadd.f32 %v4405, %v4470
      %v4516 = vadd.f32 %v4407, %v4472
      %v4517 = vadd.f32 %v4410, %v4475
      %v4518 = vadd.f32 %v4412, %v4477
      %v4519 = vadd.f32 %v4415, %v4480
      %v4520 = vadd.f32 %v4417, %v4482
      %v4521 = vadd.f32 %v4420, %v4485
      %v4522 = vadd.f32 %v4422, %v4487
      %v4523 = vadd.f32 %v4425, %v4490
      %v4524 = vadd.f32 %v4427, %v4492
      %4525 = vst [vmem:[%s329] sm:$0xff] %v4509
      %4526 = vst [vmem:[%s329 + $0x8] sm:$0xff] %v4510
      %4527 = vst [vmem:[%s329 + $0x10] sm:$0xff] %v4511
      %4528 = vst [vmem:[%s329 + $0x18] sm:$0xff] %v4512
      %4529 = vst [vmem:[%s329 + $0x20] sm:$0xff] %v4513
      %4530 = vst [vmem:[%s329 + $0x28] sm:$0xff] %v4514
      %4531 = vst [vmem:[%s329 + $0x30] sm:$0xff] %v4515
      %4532 = vst [vmem:[%s329 + $0x38] sm:$0xff] %v4516
      %4533 = vst [vmem:[%s329 + $0x40] sm:$0xff] %v4517
      %4534 = vst [vmem:[%s329 + $0x48] sm:$0xff] %v4518
      %4535 = vst [vmem:[%s329 + $0x50] sm:$0xff] %v4519
      %4536 = vst [vmem:[%s329 + $0x58] sm:$0xff] %v4520
      %4537 = vst [vmem:[%s329 + $0x60] sm:$0xff] %v4521
      %4538 = vst [vmem:[%s329 + $0x68] sm:$0xff] %v4522
      %4539 = vst [vmem:[%s329 + $0x70] sm:$0xff] %v4523
      %4540 = vst [vmem:[%s329 + $0x78] sm:$0xff] %v4524
      %s4541 = smul.u32 8, %s24
      %p4542 = scmp.lt.s32.totalorder %s23, 1
      %s4543 = scalar_select %p4542, %s23, 1
      %p4544 = scmp.lt.s32.totalorder %s4541, 15
      %s4545 = scalar_select %p4544, %s4541, 15
      %s4546 = smul.addr %s4545, 2
      %s4547 = smul.addr %s4543, 32
      %s4548 = sadd.s32 %s4546, %s4547
      %s4549 = smul.addr %s4548, 8
      %s4550 = scalar_lea.vmem %s8, %s4549
      // Predicated region
      $region53: #{bottleneck_forward.1} parent=51 // pred_check
        %p4551 = pneg %p224
      $region54: #{bottleneck_forward.1} parent=51 // pred_check_branch
        %4553 = sbr.rel (%p4551) target = $region56
      $region55: #{bottleneck_forward.1} parent=51 // pred_region
        %s4554 = smul.u32 8, %s24
      $region56: #{bottleneck_forward.1} parent=51 // pred_fallthru
        _
    $region52: #{bottleneck_forward.1} parent=5 // pred_fallthru
      _
    %p4555 = scmp.le.s32.totalorder 2, %s14
    // Predicated region
    $region57: #{bottleneck_forward.1} parent=5 // pred_check
      %p4556 = pneg %p4555
    $region58: #{bottleneck_forward.1} parent=5 // pred_check_branch
      %4558 = sbr.rel (%p4556) target = $region60
    $region59: #{bottleneck_forward.1} parent=5 // pred_region
      %s4559 = ssub.s32 %s14, 2
      // Predicated region
      $region61: #{bottleneck_forward.1} parent=59 // pred_check
        %p4560 = pneg %p230
      $region62: #{bottleneck_forward.1} parent=59 // pred_check_branch
        %4562 = sbr.rel (%p4560) target = $region64
      $region63: #{bottleneck_forward.1} parent=59 // pred_region
        %s4563 = smul.u32 8, %s26
        %p4564 = scmp.lt.s32.totalorder %s25, 1
        %s4565 = scalar_select %p4564, %s25, 1
        %p4566 = scmp.lt.s32.totalorder %s4563, 15
        %s4567 = scalar_select %p4566, %s4563, 15
        %s4568 = smul.addr %s4567, 2
        %s4569 = smul.addr %s4565, 32
        %s4570 = sadd.s32 %s4568, %s4569
        %s4571 = smul.addr %s4570, 8
        %s4572 = scalar_lea.vmem %s8, %s4571
      $region64: #{bottleneck_forward.1} parent=59 // pred_fallthru
        _
    $region60: #{bottleneck_forward.1} parent=5 // pred_fallthru
      _
  $region6: #{bottleneck_forward.1} parent=0 // loop_footer
    %s18 = sadd.s32 1, %s14
  $region7: #{bottleneck_forward.1} parent=0 // loop_footer_branch
    %13 = sbr.rel target = $region3
  $region8: #{bottleneck_forward.1} parent=0 // loop_exit
    _

</llo_original>
